<compile_context>
chip_gen: v7x
topology: tpu7x:2x2x1
jax: 0.10.0
libtpu: 0.0.40
codegen_flags: <defaults>
</compile_context>

<pallas_src>
import functools
import math

import numpy as np
import jax
import jax.numpy as jnp
from jax.experimental import pallas as pl
from jax.experimental.pallas import tpu as pltpu


# --------------------------------------------------------------------------- #
# Helpers
# --------------------------------------------------------------------------- #
def _round_up(x: int, m: int) -> int:
    return ((x + m - 1) // m) * m


def _pad_axis(x, axis, new_size, value=0):
    pad = new_size - x.shape[axis]
    if pad <= 0:
        return x
    widths = [(0, 0)] * x.ndim
    widths[axis] = (0, pad)
    return jnp.pad(x, widths, constant_values=value)


def _tile_bytes(shape, dtype) -> int:
    """Conservative VMEM footprint of one block (accounts for (8,128) padding)."""
    s = [int(d) for d in shape]
    s[-1] = _round_up(s[-1], 128)
    if len(s) >= 2:
        s[-2] = _round_up(max(s[-2], 1), 8)
    n = 1
    for d in s:
        n *= d
    return n * np.dtype(dtype).itemsize


def _num_parallel_tensorcores() -> int:
    """2 on dual-TensorCore chips (v7x; v4/v5p megacore), else 1 (v5e/v6e)."""
    try:
        kind = jax.devices()[0].device_kind.lower()
    except Exception:
        return 1
    if any(t in kind for t in ("v7", "7x", "v4", "v5p")):
        return 2
    return 1


def _vmem_working_budget() -> int:
    """Per-step working-set budget: ~24 MiB on v7x (64 MiB VMEM), ~48 MiB on v5e/v6e."""
    try:
        cap = int(pltpu.get_tpu_info().vmem_capacity_bytes)
    except Exception:
        cap = 64 << 20                       # conservative: assume v7x per-core VMEM
    return int(min(max(cap // 2 - (8 << 20), 8 << 20), 48 << 20))


def _key_pad_row(attn_mask, B, H, Lk):
    """Reduce any mask Mymodel_tcr builds to its (B*H, Lk) key-pad row.

    get_attn_pad_mask / Cross_Attention only ever produce key-padding masks (or
    all-False masks) broadcast over heads and query positions, so the true
    information is (B, Lk)."""
    if attn_mask.ndim == 4:                  # (B, H, Lq, Lk)
        kp = attn_mask[:, 0, 0, :]
    elif attn_mask.ndim == 3:                # (B, Lq, Lk)
        kp = attn_mask[:, 0, :]
    else:                                    # (B, Lk)
        kp = attn_mask
    kp = kp.astype(jnp.int32)
    return jnp.broadcast_to(kp[:, None, :], (B, H, Lk)).reshape(B * H, Lk)


# --------------------------------------------------------------------------- #
# 1. ScaledDotProductAttention kernel
# --------------------------------------------------------------------------- #
def _sdpa_kernel(q_ref, k_ref, v_ref, kp_ref, ctx_ref, *maybe_attn,
                 inv_sqrt_dk, compute_dtype):
    # Blocks: q (Gb,Tq,dk)  k (Gb,Lk,dk)  v (Gb,Lk,dv)  kp (Gb,1,Lk) int32.
    # Scale folded into Q in f32 BEFORE any cast (exact for power-of-two d_k,
    # keeps the VPU on its native f32 path on v5e).
    q = q_ref[...] * inv_sqrt_dk
    k = k_ref[...]
    v = v_ref[...]
    if compute_dtype is not None:            # optional bf16 MXU feeds (v6e/v7x)
        q = q.astype(compute_dtype)
        k = k.astype(compute_dtype)
        v = v.astype(compute_dtype)

    # scores = Q @ K^T: contraction on the LAST dim of both operands -> no K
    # transpose / XLU relayout inside the kernel.
    scores = jnp.einsum("gqd,gkd->gqk", q, k, preferred_element_type=jnp.float32)

    # masked_fill(attn_mask, -1e9): mask built in-kernel from the (Gb,1,Lk)
    # key-pad row (the (G,Lq,Lk) mask is never materialised or DMA'd).
    scores = jnp.where(kp_ref[...] != 0, jnp.float32(-1.0e9), scores)

    # Numerically stable softmax; the divide goes to the EUP (approx reciprocal).
    m = jnp.max(scores, axis=-1, keepdims=True)
    e = jnp.exp(scores - m)
    attn = e * pl.reciprocal(jnp.sum(e, axis=-1, keepdims=True), approx=True)

    p = attn if compute_dtype is None else attn.astype(compute_dtype)
    ctx = jnp.einsum("gqk,gkd->gqd", p, v, preferred_element_type=jnp.float32)

    ctx_ref[...] = ctx.astype(ctx_ref.dtype)
    if maybe_attn:
        maybe_attn[0][...] = attn.astype(maybe_attn[0].dtype)


def scaled_dot_product_attention(Q, K, V, attn_mask, *,
                                 compute_dtype=None,
                                 attn_dtype=jnp.float32,
                                 return_attn=True):
    """Pallas SDPA. Q:[B,H,Lq,dk] K:[B,H,Lk,dk] V:[B,H,Lk,dv].
    attn_mask: (B,Lk) key-pad row, or the (B,Lq,Lk)/(B,H,Lq,Lk) broadcast the
    torch model builds from it (True/nonzero == masked key position)."""
    B, H, Lq, dk = Q.shape
    Lk = K.shape[2]
    dv = V.shape[3]
    G = B * H
    ctx_dtype = Q.dtype

    # Collapse (B,H) to one grid axis; pad sequence dims to sublane multiples.
    Lq_p = _round_up(Lq, 8)
    Lk_p = _round_up(Lk, 8)
    q2 = _pad_axis(Q.reshape(G, Lq, dk), 1, Lq_p)
    k2 = _pad_axis(K.reshape(G, Lk, dk), 1, Lk_p)
    v2 = _pad_axis(V.reshape(G, Lk, dv), 1, Lk_p)
    # (G,1,Lk_p) key-pad row; padded key columns stay masked (value=1).
    kp = _pad_axis(_key_pad_row(attn_mask, B, H, Lk), 1, Lk_p, value=1)
    kp = kp.reshape(G, 1, Lk_p)

    # Generation-aware grid: one g-step per TensorCore (1 on v5e/v6e, 2 on v7x).
    g_steps = min(_num_parallel_tensorcores(), G)
    Gb = pl.cdiv(G, max(g_steps, 1))
    Tq = Lq_p

    budget = _vmem_working_budget()

    def step_bytes(gb, tq):
        io = (_tile_bytes((gb, tq, dk), Q.dtype)
              + _tile_bytes((gb, Lk_p, dk), K.dtype)
              + _tile_bytes((gb, Lk_p, dv), V.dtype)
              + _tile_bytes((gb, 1, Lk_p), jnp.int32)
              + _tile_bytes((gb, tq, dv), ctx_dtype)
              + (_tile_bytes((gb, tq, Lk_p), attn_dtype) if return_attn else 0))
        live = 3 * _tile_bytes((gb, tq, Lk_p), jnp.float32)  # scores / exp / attn
        return 2 * io + live                                 # double-buffered pipeline

    while step_bytes(Gb, Tq) > budget and Gb > 1:
        Gb = max(1, Gb // 2)
    while step_bytes(Gb, Tq) > budget and Tq > 8:
        Tq = max(8, _round_up(Tq // 2, 8))
    # TODO(synk): for very long Lk switch to an online-softmax (flash-style)
    # accumulation over Lk tiles instead of shrinking Gb/Tq further.

    grid = (pl.cdiv(G, Gb), pl.cdiv(Lq_p, Tq))

    kernel = functools.partial(_sdpa_kernel,
                               inv_sqrt_dk=float(1.0 / math.sqrt(dk)),
                               compute_dtype=compute_dtype)

    out_shape = [jax.ShapeDtypeStruct((G, Lq_p, dv), ctx_dtype)]
    out_specs = [pl.BlockSpec((Gb, Tq, dv), lambda g, qb: (g, qb, 0))]
    if return_attn:
        out_shape.append(jax.ShapeDtypeStruct((G, Lq_p, Lk_p), attn_dtype))
        out_specs.append(pl.BlockSpec((Gb, Tq, Lk_p), lambda g, qb: (g, qb, 0)))

    # Cap well below v7x's 64 MiB physical VMEM; no artificial 32 MiB floor.
    vmem_limit = int(min(max(step_bytes(Gb, Tq) + (8 << 20), 16 << 20), 48 << 20))

    flops = 2 * G * Lq_p * Lk_p * (dk + dv)
    transcendentals = G * Lq_p * Lk_p + G * Lq_p
    bytes_accessed = int(q2.nbytes + k2.nbytes + v2.nbytes + kp.nbytes
                         + G * Lq_p * dv * np.dtype(ctx_dtype).itemsize
                         + (G * Lq_p * Lk_p * np.dtype(attn_dtype).itemsize
                            if return_attn else 0))

    outs = pl.pallas_call(
        kernel,
        out_shape=tuple(out_shape),
        grid_spec=pltpu.PrefetchScalarGridSpec(
            num_scalar_prefetch=0,
            grid=grid,
            in_specs=[
                pl.BlockSpec((Gb, Tq, dk), lambda g, qb: (g, qb, 0)),
                pl.BlockSpec((Gb, Lk_p, dk), lambda g, qb: (g, 0, 0)),
                pl.BlockSpec((Gb, Lk_p, dv), lambda g, qb: (g, 0, 0)),
                pl.BlockSpec((Gb, 1, Lk_p), lambda g, qb: (g, 0, 0)),
            ],
            out_specs=tuple(out_specs),
        ),
        compiler_params=pltpu.CompilerParams(
            dimension_semantics=("parallel", "parallel"),
            vmem_limit_bytes=vmem_limit,
        ),
        cost_estimate=pl.CostEstimate(
            flops=int(flops),
            transcendentals=int(transcendentals),
            bytes_accessed=bytes_accessed,
        ),
    )(q2, k2, v2, kp)

    # TODO(synk): with n_heads=1 and d_v=64 the context slab cannot be made
    # 128-lane dense (H*d_v < 128); revisit a [B, Lq, H*d_v] repack if this is
    # ever reused with H*d_v >= 128.
    ctx = outs[0][:, :Lq, :].reshape(B, H, Lq, dv)
    if not return_attn:
        return ctx, None
    attn = outs[1][:, :Lq, :Lk].reshape(B, H, Lq, Lk)
    return ctx, attn


# --------------------------------------------------------------------------- #
# 2. Fused MultiHeadAttention kernel (projections + SDPA + fc + residual + LN)
# --------------------------------------------------------------------------- #
def _mha_kernel(xq_ref, xkv_ref, kp_ref, wq_ref, wk_ref, wv_ref, wo_ref,
                out_ref, attn_ref, *, inv_sqrt_dk, ln_eps):
    xq = xq_ref[...]                         # (Gb, Lq, d_model) f32
    xkv = xkv_ref[...]                       # (Gb, Lk, d_model)
    gb = xq.shape[0]

    def bcast(w_ref):                        # weights are grid-invariant; broadcast
        w = w_ref[...]                       # once per grid step (not in a loop).
        return jnp.broadcast_to(w[None], (gb,) + w.shape)

    # Projections as batched einsums, contraction on the last dim -> straight MXU.
    q = jnp.einsum("gld,gkd->glk", xq, bcast(wq_ref),
                   preferred_element_type=jnp.float32)
    k = jnp.einsum("gld,gkd->glk", xkv, bcast(wk_ref),
                   preferred_element_type=jnp.float32)
    v = jnp.einsum("gld,gkd->glk", xkv, bcast(wv_ref),
                   preferred_element_type=jnp.float32)

    scores = jnp.einsum("gqd,gkd->gqk", q * inv_sqrt_dk, k,
                        preferred_element_type=jnp.float32)
    scores = jnp.where(kp_ref[...] != 0, jnp.float32(-1.0e9), scores)

    m = jnp.max(scores, axis=-1, keepdims=True)
    e = jnp.exp(scores - m)
    attn = e * pl.reciprocal(jnp.sum(e, axis=-1, keepdims=True), approx=True)

    ctx = jnp.einsum("gqk,gkd->gqd", attn, v, preferred_element_type=jnp.float32)
    proj = jnp.einsum("glv,gmv->glm", ctx, bcast(wo_ref),
                      preferred_element_type=jnp.float32)

    # residual + LayerNorm(d_model) (torch builds a fresh LN: gamma=1, beta=0).
    y = proj + xq
    mu = jnp.mean(y, axis=-1, keepdims=True)
    var = jnp.mean(jnp.square(y - mu), axis=-1, keepdims=True)
    out = (y - mu) * jax.lax.rsqrt(var + ln_eps)

    out_ref[...] = out.astype(out_ref.dtype)
    attn_ref[...] = attn.astype(attn_ref.dtype)


def multi_head_attention(input_Q, input_K, key_pad_mask, W_Q, W_K, W_V, W_O, *,
                         attn_dtype=jnp.float32, ln_eps=1e-5):
    """Fused MultiHeadAttention.forward for n_heads=1 (the Mymodel_tcr config).
    input_Q:[B,Lq,d_model]  input_K(=input_V):[B,Lk,d_model]
    key_pad_mask:[B,Lk] (True/nonzero == masked key position)
    W_Q/W_K/W_V:[d_k,d_model]  W_O:[d_model,d_v] (torch nn.Linear weight layout)."""
    # TODO(synk): generalize to n_heads > 1 (per-head reshape of the projections).
    B, Lq, dm = input_Q.shape
    Lk = input_K.shape[1]
    dk = W_Q.shape[0]
    dv = W_V.shape[0]

    Lq_p = _round_up(Lq, 8)
    Lk_p = _round_up(Lk, 8)
    xq = _pad_axis(input_Q, 1, Lq_p)
    xkv = _pad_axis(input_K, 1, Lk_p)
    kp = _pad_axis(key_pad_mask.astype(jnp.int32), 1, Lk_p, value=1)
    kp = kp.reshape(B, 1, Lk_p)

    g_steps = min(_num_parallel_tensorcores(), B)
    Gb = pl.cdiv(B, max(g_steps, 1))
    budget = _vmem_working_budget()

    def step_bytes(gb):
        io = (_tile_bytes((gb, Lq_p, dm), input_Q.dtype)
              + _tile_bytes((gb, Lk_p, dm), input_K.dtype)
              + _tile_bytes((gb, 1, Lk_p), jnp.int32)
              + _tile_bytes((gb, Lq_p, dm), input_Q.dtype)       # out
              + _tile_bytes((gb, Lq_p, Lk_p), attn_dtype)        # attn out
              + 3 * _tile_bytes((dk, dm), jnp.float32)
              + _tile_bytes((dm, dv), jnp.float32))
        live = (3 * _tile_bytes((gb, Lq_p, Lk_p), jnp.float32)   # scores/exp/attn
                + 3 * _tile_bytes((gb, Lq_p, dk), jnp.float32)   # q / ctx / proj
                + 2 * _tile_bytes((gb, Lk_p, dk), jnp.float32)   # k / v
                + 4 * _tile_bytes((gb, dk, dm), jnp.float32))    # broadcast weights
        return 2 * io + live

    while step_bytes(Gb) > budget and Gb > 1:
        Gb = max(1, Gb // 2)

    grid = (pl.cdiv(B, Gb),)
    vmem_limit = int(min(max(step_bytes(Gb) + (8 << 20), 16 << 20), 48 << 20))

    flops = 2 * B * (Lq_p * dm * dk + Lk_p * dm * (dk + dv)
                     + Lq_p * Lk_p * (dk + dv) + Lq_p * dv * dm)

    kernel = functools.partial(_mha_kernel,
                               inv_sqrt_dk=float(1.0 / math.sqrt(dk)),
                               ln_eps=float(ln_eps))

    out, attn = pl.pallas_call(
        kernel,
        out_shape=(jax.ShapeDtypeStruct((B, Lq_p, dm), input_Q.dtype),
                   jax.ShapeDtypeStruct((B, Lq_p, Lk_p), attn_dtype)),
        grid_spec=pltpu.PrefetchScalarGridSpec(
            num_scalar_prefetch=0,
            grid=grid,
            in_specs=[
                pl.BlockSpec((Gb, Lq_p, dm), lambda g: (g, 0, 0)),
                pl.BlockSpec((Gb, Lk_p, dm), lambda g: (g, 0, 0)),
                pl.BlockSpec((Gb, 1, Lk_p), lambda g: (g, 0, 0)),
                pl.BlockSpec((dk, dm), lambda g: (0, 0)),
                pl.BlockSpec((dk, dm), lambda g: (0, 0)),
                pl.BlockSpec((dv, dm), lambda g: (0, 0)),
                pl.BlockSpec((dm, dv), lambda g: (0, 0)),
            ],
            out_specs=(pl.BlockSpec((Gb, Lq_p, dm), lambda g: (g, 0, 0)),
                       pl.BlockSpec((Gb, Lq_p, Lk_p), lambda g: (g, 0, 0))),
        ),
        compiler_params=pltpu.CompilerParams(
            dimension_semantics=("parallel",),
            vmem_limit_bytes=vmem_limit,
        ),
        cost_estimate=pl.CostEstimate(
            flops=int(flops),
            transcendentals=int(B * Lq_p * Lk_p + B * Lq_p),
            bytes_accessed=int(xq.nbytes + xkv.nbytes + kp.nbytes
                               + W_Q.nbytes + W_K.nbytes + W_V.nbytes + W_O.nbytes
                               + B * Lq_p * dm * np.dtype(input_Q.dtype).itemsize
                               + B * Lq_p * Lk_p * np.dtype(attn_dtype).itemsize),
        ),
    )(xq, xkv, kp, W_Q, W_K, W_V, W_O)

    out = out[:, :Lq, :]
    attn = attn[:, :Lq, :Lk][:, None, :, :]          # (B, n_heads=1, Lq, Lk)
    return out, attn


# --------------------------------------------------------------------------- #
# Pure-JAX references (match the torch module semantics)
# --------------------------------------------------------------------------- #
def _sdpa_reference(Q, K, V, attn_mask):
    dk = Q.shape[-1]
    scores = jnp.einsum("bhqd,bhkd->bhqk", Q, K) / math.sqrt(dk)
    scores = jnp.where(attn_mask, -1.0e9, scores)
    attn = jax.nn.softmax(scores, axis=-1)
    ctx = jnp.einsum("bhqk,bhkd->bhqd", attn, V)
    return ctx, attn


def _mha_reference(input_Q, input_K, key_pad, W_Q, W_K, W_V, W_O, eps=1e-5):
    q = input_Q @ W_Q.T
    k = input_K @ W_K.T
    v = input_K @ W_V.T
    scores = jnp.einsum("bqd,bkd->bqk", q, k) / math.sqrt(W_Q.shape[0])
    scores = jnp.where(key_pad[:, None, :], -1.0e9, scores)
    attn = jax.nn.softmax(scores, axis=-1)
    ctx = jnp.einsum("bqk,bkd->bqd", attn, v)
    y = ctx @ W_O.T + input_Q
    mu = y.mean(axis=-1, keepdims=True)
    var = ((y - mu) ** 2).mean(axis=-1, keepdims=True)
    return (y - mu) / jnp.sqrt(var + eps), attn


# --------------------------------------------------------------------------- #
# Self-test
# --------------------------------------------------------------------------- #
if __name__ == "__main__":
    key = jax.random.PRNGKey(0)
    # Shapes consistent with Mymodel_tcr: n_heads=1, d_k=d_v=d_model=64,
    # sequence length = tcr_max_len = 34, small batch.
    B, H, L, DK, DV, DM = 16, 1, 34, 64, 64, 64

    kq, kk, kv, kl, kx, kw = jax.random.split(key, 6)
    Q = jax.random.normal(kq, (B, H, L, DK), dtype=jnp.float32)
    K = jax.random.normal(kk, (B, H, L, DK), dtype=jnp.float32)
    V = jax.random.normal(kv, (B, H, L, DV), dtype=jnp.float32)

    # Padding-style mask like get_attn_pad_mask: key positions >= seq length masked.
    lengths = jax.random.randint(kl, (B,), minval=20, maxval=L + 1)
    key_pad = jnp.arange(L)[None, :] >= lengths[:, None]           # (B, L) bool
    full_mask = jnp.broadcast_to(key_pad[:, None, None, :], (B, H, L, L))

    # --- SDPA, f32 path, (B, Lk) key-pad row --------------------------------
    ctx, attn = scaled_dot_product_attention(Q, K, V, key_pad)
    jax.block_until_ready((ctx, attn))
    ctx_ref, attn_ref = _sdpa_reference(Q, K, V, full_mask)
    assert jnp.allclose(ctx, ctx_ref, atol=1e-2, rtol=1e-2), "SDPA context mismatch"
    assert jnp.allclose(attn, attn_ref, atol=1e-2, rtol=1e-2), "SDPA attn mismatch"

    # --- SDPA called with the torch-style 4-D mask (same information) -------
    ctx4, _ = scaled_dot_product_attention(Q, K, V, full_mask)
    jax.block_until_ready(ctx4)
    assert jnp.allclose(ctx4, ctx_ref, atol=1e-2, rtol=1e-2), "SDPA 4-D mask path mismatch"

    # --- Optional bf16 MXU-feed / bf16 attn-writeback path ------------------
    ctx_bf, _ = scaled_dot_product_attention(
        Q, K, V, key_pad, compute_dtype=jnp.bfloat16, attn_dtype=jnp.bfloat16)
    jax.block_until_ready(ctx_bf)
    assert jnp.allclose(ctx_bf.astype(jnp.float32), ctx_ref, atol=2e-1, rtol=2e-1), \
        "SDPA bf16 path mismatch"

    # --- Fused MultiHeadAttention (projections + SDPA + fc + residual + LN) -
    x = jax.random.normal(kx, (B, L, DM), dtype=jnp.float32)
    kw1, kw2, kw3, kw4 = jax.random.split(kw, 4)
    ws = 1.0 / math.sqrt(DM)
    W_Q = jax.random.normal(kw1, (DK, DM), dtype=jnp.float32) * ws
    W_K = jax.random.normal(kw2, (DK, DM), dtype=jnp.float32) * ws
    W_V = jax.random.normal(kw3, (DV, DM), dtype=jnp.float32) * ws
    W_O = jax.random.normal(kw4, (DM, DV), dtype=jnp.float32) * ws

    out, mh_attn = multi_head_attention(x, x, key_pad, W_Q, W_K, W_V, W_O)
    jax.block_until_ready((out, mh_attn))
    out_ref, mh_attn_ref = _mha_reference(x, x, key_pad, W_Q, W_K, W_V, W_O)
    assert jnp.allclose(out, out_ref, atol=2e-2, rtol=2e-2), "MHA output mismatch"
    assert jnp.allclose(mh_attn[:, 0], mh_attn_ref, atol=1e-2, rtol=1e-2), \
        "MHA attn mismatch"

    print("KERNEL_OK")
</pallas_src>

<mosaic_0001>
module attributes {stable_mosaic.version = 11 : i64} {
  func.func @_sdpa_kernel(%arg0: i32, %arg1: i32, %arg2: memref<16x40x64xf32, #tpu.memory_space<vmem>>, %arg3: memref<16x40x64xf32, #tpu.memory_space<vmem>>, %arg4: memref<16x40x64xf32, #tpu.memory_space<vmem>>, %arg5: memref<16x1x40xi32, #tpu.memory_space<vmem>>, %arg6: memref<16x40x64xf32, #tpu.memory_space<vmem>>, %arg7: memref<16x40x40xf32, #tpu.memory_space<vmem>>) attributes {dimension_semantics = [#tpu.dimension_semantics<parallel>, #tpu.dimension_semantics<parallel>], iteration_bounds = array<i64: 1, 1>, scalar_prefetch = 0 : i64, scratch_operands = 0 : i64, tpu.core_type = #tpu.core_type<tc>, window_params = [{transform_indices = @transform_0, window_bounds = array<i64: 16, 40, 64>}, {transform_indices = @transform_1, window_bounds = array<i64: 16, 40, 64>}, {transform_indices = @transform_2, window_bounds = array<i64: 16, 40, 64>}, {transform_indices = @transform_3, window_bounds = array<i64: 16, 1, 40>}, {transform_indices = @transform_4, window_bounds = array<i64: 16, 40, 64>}, {transform_indices = @transform_5, window_bounds = array<i64: 16, 40, 40>}]} {
    %c0 = arith.constant 0 : index
    %c0_0 = arith.constant 0 : index
    %c0_1 = arith.constant 0 : index
    %0 = vector.load %arg2[%c0, %c0_0, %c0_1] : memref<16x40x64xf32, #tpu.memory_space<vmem>>, vector<16x40x64xf32>
    %cst = arith.constant 1.250000e-01 : f32
    %1 = vector.broadcast %cst : f32 to vector<16x40x64xf32>
    %2 = arith.mulf %0, %1 : vector<16x40x64xf32>
    %c0_2 = arith.constant 0 : index
    %c0_3 = arith.constant 0 : index
    %c0_4 = arith.constant 0 : index
    %3 = vector.load %arg3[%c0_2, %c0_3, %c0_4] : memref<16x40x64xf32, #tpu.memory_space<vmem>>, vector<16x40x64xf32>
    %c0_5 = arith.constant 0 : index
    %c0_6 = arith.constant 0 : index
    %c0_7 = arith.constant 0 : index
    %4 = vector.load %arg4[%c0_5, %c0_6, %c0_7] : memref<16x40x64xf32, #tpu.memory_space<vmem>>, vector<16x40x64xf32>
    "tpu.trace_start"() <{level = 10 : i32, message = "gqd,gkd->gqk"}> : () -> ()
    %cst_8 = arith.constant dense<0.000000e+00> : vector<16x40x40xf32>
    %5 = tpu.matmul %2, %3, %cst_8 {dimension_numbers = #tpu.dot_dimension_numbers<[2], [2], [1], [1], [0, 0, 0, 1, 1, 1], [0], [0]>} : vector<16x40x64xf32>, vector<16x40x64xf32>, vector<16x40x40xf32> -> vector<16x40x40xf32>
    "tpu.trace_stop"() : () -> ()
    %c0_9 = arith.constant 0 : index
    %c0_10 = arith.constant 0 : index
    %c0_11 = arith.constant 0 : index
    %6 = vector.load %arg5[%c0_9, %c0_10, %c0_11] : memref<16x1x40xi32, #tpu.memory_space<vmem>>, vector<16x1x40xi32>
    %c0_i32 = arith.constant 0 : i32
    %7 = vector.broadcast %c0_i32 : i32 to vector<16x1x40xi32>
    %8 = arith.cmpi ne, %6, %7 : vector<16x1x40xi32>
    %cst_12 = arith.constant -1.000000e+09 : f32
    %9 = vector.shape_cast %8 : vector<16x1x40xi1> to vector<16x1x40xi1>
    %10 = vector.broadcast %9 : vector<16x1x40xi1> to vector<16x40x40xi1>
    %11 = vector.broadcast %cst_12 : f32 to vector<16x40x40xf32>
    %12 = arith.select %10, %11, %5 : vector<16x40x40xi1>, vector<16x40x40xf32>
    %cst_13 = arith.constant dense<0xFF800000> : vector<16x40xf32>
    %13 = vector.multi_reduction <maximumf>, %12, %cst_13 [2] : vector<16x40x40xf32> to vector<16x40xf32>
    %14 = vector.shape_cast %13 : vector<16x40xf32> to vector<16x40x1xf32>
    %15 = vector.broadcast %14 : vector<16x40x1xf32> to vector<16x40x40xf32>
    %16 = arith.subf %12, %15 : vector<16x40x40xf32>
    %17 = math.exp %16 : vector<16x40x40xf32>
    %cst_14 = arith.constant dense<0.000000e+00> : vector<16x40xf32>
    %18 = vector.multi_reduction <add>, %17, %cst_14 [2] : vector<16x40x40xf32> to vector<16x40xf32>
    %19 = vector.shape_cast %18 : vector<16x40xf32> to vector<16x40x1xf32>
    %20 = tpu.reciprocal %19 {approx = true} : vector<16x40x1xf32> -> vector<16x40x1xf32>
    %21 = vector.broadcast %20 : vector<16x40x1xf32> to vector<16x40x40xf32>
    %22 = arith.mulf %17, %21 : vector<16x40x40xf32>
    "tpu.trace_start"() <{level = 10 : i32, message = "gqk,gkd->gqd"}> : () -> ()
    %cst_15 = arith.constant dense<0.000000e+00> : vector<16x40x64xf32>
    %23 = tpu.matmul %22, %4, %cst_15 {dimension_numbers = #tpu.dot_dimension_numbers<[2], [1], [1], [2], [0, 0, 0, 1, 1, 2], [0], [0]>} : vector<16x40x40xf32>, vector<16x40x64xf32>, vector<16x40x64xf32> -> vector<16x40x64xf32>
    "tpu.trace_stop"() : () -> ()
    %c0_16 = arith.constant 0 : index
    %c0_17 = arith.constant 0 : index
    %c0_18 = arith.constant 0 : index
    %24 = vector.load %arg6[%c0_16, %c0_17, %c0_18] : memref<16x40x64xf32, #tpu.memory_space<vmem>>, vector<16x40x64xf32>
    tpu.vector_store %arg6[%c0_16, %c0_17, %c0_18], %23 {strides = array<i32>} : memref<16x40x64xf32, #tpu.memory_space<vmem>>, vector<16x40x64xf32>,
    %c0_19 = arith.constant 0 : index
    %c0_20 = arith.constant 0 : index
    %c0_21 = arith.constant 0 : index
    %25 = vector.load %arg7[%c0_19, %c0_20, %c0_21] : memref<16x40x40xf32, #tpu.memory_space<vmem>>, vector<16x40x40xf32>
    tpu.vector_store %arg7[%c0_19, %c0_20, %c0_21], %22 {strides = array<i32>} : memref<16x40x40xf32, #tpu.memory_space<vmem>>, vector<16x40x40xf32>,
    return
  }
  func.func @transform_0(%arg0: i32, %arg1: i32) -> (i32, i32, i32) {
    %c0_i32 = arith.constant 0 : i32
    %c0_i32_0 = arith.constant 0 : i32
    return %arg0, %arg1, %c0_i32 : i32, i32, i32
  }
  func.func @transform_1(%arg0: i32, %arg1: i32) -> (i32, i32, i32) {
    %c0_i32 = arith.constant 0 : i32
    %c0_i32_0 = arith.constant 0 : i32
    %c0_i32_1 = arith.constant 0 : i32
    return %arg0, %c0_i32, %c0_i32_0 : i32, i32, i32
  }
  func.func @transform_2(%arg0: i32, %arg1: i32) -> (i32, i32, i32) {
    %c0_i32 = arith.constant 0 : i32
    %c0_i32_0 = arith.constant 0 : i32
    %c0_i32_1 = arith.constant 0 : i32
    return %arg0, %c0_i32, %c0_i32_0 : i32, i32, i32
  }
  func.func @transform_3(%arg0: i32, %arg1: i32) -> (i32, i32, i32) {
    %c0_i32 = arith.constant 0 : i32
    %c0_i32_0 = arith.constant 0 : i32
    %c0_i32_1 = arith.constant 0 : i32
    return %arg0, %c0_i32, %c0_i32_0 : i32, i32, i32
  }
  func.func @transform_4(%arg0: i32, %arg1: i32) -> (i32, i32, i32) {
    %c0_i32 = arith.constant 0 : i32
    %c0_i32_0 = arith.constant 0 : i32
    return %arg0, %arg1, %c0_i32 : i32, i32, i32
  }
  func.func @transform_5(%arg0: i32, %arg1: i32) -> (i32, i32, i32) {
    %c0_i32 = arith.constant 0 : i32
    %c0_i32_0 = arith.constant 0 : i32
    return %arg0, %arg1, %c0_i32 : i32, i32, i32
  }
}

</mosaic_0001>

<llo_original>
// kernel: tpu_custom_call.1
$region0: #{tpu_custom_call.1}
  #allocation0 [shape = 'u32[]', space=smem, size = 0x4, offset = 0x4, fixed_abs, tag = 'smem constant byte address 0x4 - core index']
  #allocation1 [shape = 'u32[144,128]{1,0:T(1,128)}', space=vmem, size = 0x12000, scoped, tag = 'internal scratch']
  %s0 = inlined_call_operand.hbm [shape: f32[16,40,64], index: 0, kind: input, shape index: {}]
  %s1 = inlined_call_operand.hbm [shape: f32[16,40,64], index: 1, kind: input, shape index: {}]
  %s2 = inlined_call_operand.hbm [shape: f32[16,40,64], index: 2, kind: input, shape index: {}]
  %s3 = inlined_call_operand.hbm [shape: s32[16,1,40], index: 3, kind: input, shape index: {}]
  %s4 = inlined_call_operand.hbm [shape: f32[16,40,64], index: 4, kind: output, shape index: {0}]
  %s5 = inlined_call_operand.hbm [shape: f32[16,40,40], index: 5, kind: output, shape index: {1}]
  %6 = xla_tuple %s4, %s5
  %s7 = sld [smem:[#allocation0]]
  $region50: #{tpu_custom_call.1} parent=0
    _
  %s9 = ssub.s32 1, %s7
  %s10 = scalar_select 0, %s9, %s7
  $region1: #{tpu_custom_call.1} parent=0
    #allocation2 [shape = 'u8[327680]{0}', space=vmem, size = 0x50000, scoped, tag = 'input window, operand 0, single buffered']
    #allocation3 [shape = 's32[1]{0}', space=sflag, size = 0x4, scoped, tag = 'scoped memory for tpu_custom_call.1']
    #allocation4 [shape = 's32[1]{0}', space=sflag, size = 0x4, scoped, tag = 'scoped memory for tpu_custom_call.1']
    #allocation5 [shape = 'u8[327680]{0}', space=vmem, size = 0x50000, scoped, tag = 'input window, operand 1, single buffered']
    #allocation6 [shape = 's32[1]{0}', space=sflag, size = 0x4, scoped, tag = 'scoped memory for tpu_custom_call.1']
    #allocation7 [shape = 'u8[327680]{0}', space=vmem, size = 0x50000, scoped, tag = 'input window, operand 2, single buffered']
    #allocation8 [shape = 'u8[8192]{0}', space=vmem, size = 0x2000, scoped, tag = 'input window, operand 3, single buffered']
    #allocation9 [shape = 's32[1]{0}', space=sflag, size = 0x4, scoped, tag = 'scoped memory for tpu_custom_call.1']
    #allocation10 [shape = 'u8[327680]{0}', space=vmem, size = 0x50000, scoped, tag = 'output window, operand 0, single buffered']
    #allocation11 [shape = 'u8[327680]{0}', space=vmem, size = 0x50000, scoped, tag = 'output window, operand 1, single buffered']
    #allocation12 [shape = 's32[1]{0}', space=sflag, size = 0x4, scoped, tag = 'scoped memory for tpu_custom_call.1']
    %11 = vsyncpa [#allocation3], 0
    %12 = vsyncpa [#allocation6], 0
    %13 = vsyncpa [#allocation9], 0
    %14 = vsyncpa [#allocation4], 0
    %15 = vsyncpa [#allocation12], 0
    // Predicated region
    $region2: #{tpu_custom_call.1} parent=1 // pred_check
      _
    $region3: #{tpu_custom_call.1} parent=1 // pred_check_branch
      %17 = sbr.rel (0) target = $region5
    $region4: #{tpu_custom_call.1} parent=1 // pred_region
      %s19 = ssub.s32 10240, 10240
      %20 = vsyncadd [#allocation3], %s19
      %s21 = sshll.u32 [#allocation2], 4
      %s22 = int_to_ptr.vmem [resolvable:$true] %s21
      %27 = dma.hbm_to_vmem [thread:$0]  %s0, 10240, %s22, [#allocation3], 128, 128, 8
    $region5: #{tpu_custom_call.1} parent=1 // pred_fallthru
      _
    // Predicated region
    $region6: #{tpu_custom_call.1} parent=1 // pred_check
      _
    $region7: #{tpu_custom_call.1} parent=1 // pred_check_branch
      %29 = sbr.rel (0) target = $region9
    $region8: #{tpu_custom_call.1} parent=1 // pred_region
      %s31 = ssub.s32 10240, 10240
      %32 = vsyncadd [#allocation6], %s31
      %s33 = sshll.u32 [#allocation5], 4
      %s34 = int_to_ptr.vmem [resolvable:$true] %s33
      %39 = dma.hbm_to_vmem [thread:$0]  %s1, 10240, %s34, [#allocation6], 128, 128, 8
    $region9: #{tpu_custom_call.1} parent=1 // pred_fallthru
      _
    // Predicated region
    $region10: #{tpu_custom_call.1} parent=1 // pred_check
      _
    $region11: #{tpu_custom_call.1} parent=1 // pred_check_branch
      %41 = sbr.rel (0) target = $region13
    $region12: #{tpu_custom_call.1} parent=1 // pred_region
      %s43 = ssub.s32 10240, 10240
      %44 = vsyncadd [#allocation6], %s43
      %s45 = sshll.u32 [#allocation7], 4
      %s46 = int_to_ptr.vmem [resolvable:$true] %s45
      %51 = dma.hbm_to_vmem [thread:$0]  %s2, 10240, %s46, [#allocation6], 128, 128, 8
    $region13: #{tpu_custom_call.1} parent=1 // pred_fallthru
      _
    // Predicated region
    $region14: #{tpu_custom_call.1} parent=1 // pred_check
      _
    $region15: #{tpu_custom_call.1} parent=1 // pred_check_branch
      %53 = sbr.rel (0) target = $region17
    $region16: #{tpu_custom_call.1} parent=1 // pred_region
      %s55 = ssub.s32 256, 256
      %56 = vsyncadd [#allocation9], %s55
      %s57 = sshll.u32 [#allocation8], 4
      %s58 = int_to_ptr.vmem [resolvable:$true] %s57
      %63 = dma.hbm_to_vmem [thread:$0]  %s3, 256, %s58, [#allocation9], 16, 16, 1
    $region17: #{tpu_custom_call.1} parent=1 // pred_fallthru
      _
    // Predicated region
    $region18: #{tpu_custom_call.1} parent=1 // pred_check
      _
    $region19: #{tpu_custom_call.1} parent=1 // pred_check_branch
      %65 = sbr.rel (0) target = $region21
    $region20: #{tpu_custom_call.1} parent=1 // pred_region
      %66 = dma.done [#allocation3], 10240
    $region21: #{tpu_custom_call.1} parent=1 // pred_fallthru
      _
    // Predicated region
    $region22: #{tpu_custom_call.1} parent=1 // pred_check
      _
    $region23: #{tpu_custom_call.1} parent=1 // pred_check_branch
      %68 = sbr.rel (0) target = $region25
    $region24: #{tpu_custom_call.1} parent=1 // pred_region
      %69 = dma.done [#allocation6], 10240
    $region25: #{tpu_custom_call.1} parent=1 // pred_fallthru
      _
    // Predicated region
    $region26: #{tpu_custom_call.1} parent=1 // pred_check
      _
    $region27: #{tpu_custom_call.1} parent=1 // pred_check_branch
      %71 = sbr.rel (0) target = $region29
    $region28: #{tpu_custom_call.1} parent=1 // pred_region
      %72 = dma.done [#allocation6], 10240
    $region29: #{tpu_custom_call.1} parent=1 // pred_fallthru
      _
    // Predicated region
    $region30: #{tpu_custom_call.1} parent=1 // pred_check
      _
    $region31: #{tpu_custom_call.1} parent=1 // pred_check_branch
      %74 = sbr.rel (0) target = $region33
    $region32: #{tpu_custom_call.1} parent=1 // pred_region
      %75 = dma.done [#allocation9], 256
    $region33: #{tpu_custom_call.1} parent=1 // pred_fallthru
      _
    %v76 = vld [vmem:[#allocation2] sm:$0xff]
    %v77 = vld [vmem:[#allocation2 + $0x8] sm:$0xff]
    %v78 = vld [vmem:[#allocation2 + $0x10] sm:$0xff]
    %v79 = vld [vmem:[#allocation2 + $0x18] sm:$0xff]
    %v80 = vld [vmem:[#allocation2 + $0x20] sm:$0xff]
    %v81 = vld [vmem:[#allocation2 + $0x28] sm:$0xff]
    %v82 = vld [vmem:[#allocation2 + $0x30] sm:$0xff]
    %v83 = vld [vmem:[#allocation2 + $0x38] sm:$0xff]
    %v84 = vld [vmem:[#allocation2 + $0x40] sm:$0xff]
    %v85 = vld [vmem:[#allocation2 + $0x48] sm:$0xff]
    %v86 = vld [vmem:[#allocation2 + $0x50] sm:$0xff]
    %v87 = vld [vmem:[#allocation2 + $0x58] sm:$0xff]
    %v88 = vld [vmem:[#allocation2 + $0x60] sm:$0xff]
    %v89 = vld [vmem:[#allocation2 + $0x68] sm:$0xff]
    %v90 = vld [vmem:[#allocation2 + $0x70] sm:$0xff]
    %v91 = vld [vmem:[#allocation2 + $0x78] sm:$0xff]
    %v92 = vld [vmem:[#allocation2 + $0x80] sm:$0xff]
    %v93 = vld [vmem:[#allocation2 + $0x88] sm:$0xff]
    %v94 = vld [vmem:[#allocation2 + $0x90] sm:$0xff]
    %v95 = vld [vmem:[#allocation2 + $0x98] sm:$0xff]
    %v96 = vld [vmem:[#allocation2 + $0xa0] sm:$0xff]
    %v97 = vld [vmem:[#allocation2 + $0xa8] sm:$0xff]
    %v98 = vld [vmem:[#allocation2 + $0xb0] sm:$0xff]
    %v99 = vld [vmem:[#allocation2 + $0xb8] sm:$0xff]
    %v100 = vld [vmem:[#allocation2 + $0xc0] sm:$0xff]
    %v101 = vld [vmem:[#allocation2 + $0xc8] sm:$0xff]
    %v102 = vld [vmem:[#allocation2 + $0xd0] sm:$0xff]
    %v103 = vld [vmem:[#allocation2 + $0xd8] sm:$0xff]
    %v104 = vld [vmem:[#allocation2 + $0xe0] sm:$0xff]
    %v105 = vld [vmem:[#allocation2 + $0xe8] sm:$0xff]
    %v106 = vld [vmem:[#allocation2 + $0xf0] sm:$0xff]
    %v107 = vld [vmem:[#allocation2 + $0xf8] sm:$0xff]
    %v108 = vld [vmem:[#allocation2 + $0x100] sm:$0xff]
    %v109 = vld [vmem:[#allocation2 + $0x108] sm:$0xff]
    %v110 = vld [vmem:[#allocation2 + $0x110] sm:$0xff]
    %v111 = vld [vmem:[#allocation2 + $0x118] sm:$0xff]
    %v112 = vld [vmem:[#allocation2 + $0x120] sm:$0xff]
    %v113 = vld [vmem:[#allocation2 + $0x128] sm:$0xff]
    %v114 = vld [vmem:[#allocation2 + $0x130] sm:$0xff]
    %v115 = vld [vmem:[#allocation2 + $0x138] sm:$0xff]
    %v116 = vld [vmem:[#allocation2 + $0x140] sm:$0xff]
    %v117 = vld [vmem:[#allocation2 + $0x148] sm:$0xff]
    %v118 = vld [vmem:[#allocation2 + $0x150] sm:$0xff]
    %v119 = vld [vmem:[#allocation2 + $0x158] sm:$0xff]
    %v120 = vld [vmem:[#allocation2 + $0x160] sm:$0xff]
    %v121 = vld [vmem:[#allocation2 + $0x168] sm:$0xff]
    %v122 = vld [vmem:[#allocation2 + $0x170] sm:$0xff]
    %v123 = vld [vmem:[#allocation2 + $0x178] sm:$0xff]
    %v124 = vld [vmem:[#allocation2 + $0x180] sm:$0xff]
    %v125 = vld [vmem:[#allocation2 + $0x188] sm:$0xff]
    %v126 = vld [vmem:[#allocation2 + $0x190] sm:$0xff]
    %v127 = vld [vmem:[#allocation2 + $0x198] sm:$0xff]
    %v128 = vld [vmem:[#allocation2 + $0x1a0] sm:$0xff]
    %v129 = vld [vmem:[#allocation2 + $0x1a8] sm:$0xff]
    %v130 = vld [vmem:[#allocation2 + $0x1b0] sm:$0xff]
    %v131 = vld [vmem:[#allocation2 + $0x1b8] sm:$0xff]
    %v132 = vld [vmem:[#allocation2 + $0x1c0] sm:$0xff]
    %v133 = vld [vmem:[#allocation2 + $0x1c8] sm:$0xff]
    %v134 = vld [vmem:[#allocation2 + $0x1d0] sm:$0xff]
    %v135 = vld [vmem:[#allocation2 + $0x1d8] sm:$0xff]
    %v136 = vld [vmem:[#allocation2 + $0x1e0] sm:$0xff]
    %v137 = vld [vmem:[#allocation2 + $0x1e8] sm:$0xff]
    %v138 = vld [vmem:[#allocation2 + $0x1f0] sm:$0xff]
    %v139 = vld [vmem:[#allocation2 + $0x1f8] sm:$0xff]
    %v140 = vld [vmem:[#allocation2 + $0x200] sm:$0xff]
    %v141 = vld [vmem:[#allocation2 + $0x208] sm:$0xff]
    %v142 = vld [vmem:[#allocation2 + $0x210] sm:$0xff]
    %v143 = vld [vmem:[#allocation2 + $0x218] sm:$0xff]
    %v144 = vld [vmem:[#allocation2 + $0x220] sm:$0xff]
    %v145 = vld [vmem:[#allocation2 + $0x228] sm:$0xff]
    %v146 = vld [vmem:[#allocation2 + $0x230] sm:$0xff]
    %v147 = vld [vmem:[#allocation2 + $0x238] sm:$0xff]
    %v148 = vld [vmem:[#allocation2 + $0x240] sm:$0xff]
    %v149 = vld [vmem:[#allocation2 + $0x248] sm:$0xff]
    %v150 = vld [vmem:[#allocation2 + $0x250] sm:$0xff]
    %v151 = vld [vmem:[#allocation2 + $0x258] sm:$0xff]
    %v152 = vld [vmem:[#allocation2 + $0x260] sm:$0xff]
    %v153 = vld [vmem:[#allocation2 + $0x268] sm:$0xff]
    %v154 = vld [vmem:[#allocation2 + $0x270] sm:$0xff]
    %v155 = vld [vmem:[#allocation2 + $0x278] sm:$0xff]
    %v156 = vmul.f32 %v76, 0.125
    %v157 = vmul.f32 %v77, 0.125
    %v158 = vmul.f32 %v78, 0.125
    %v159 = vmul.f32 %v79, 0.125
    %v160 = vmul.f32 %v80, 0.125
    %v161 = vmul.f32 %v81, 0.125
    %v162 = vmul.f32 %v82, 0.125
    %v163 = vmul.f32 %v83, 0.125
    %v164 = vmul.f32 %v84, 0.125
    %v165 = vmul.f32 %v85, 0.125
    %v166 = vmul.f32 %v86, 0.125
    %v167 = vmul.f32 %v87, 0.125
    %v168 = vmul.f32 %v88, 0.125
    %v169 = vmul.f32 %v89, 0.125
    %v170 = vmul.f32 %v90, 0.125
    %v171 = vmul.f32 %v91, 0.125
    %v172 = vmul.f32 %v92, 0.125
    %v173 = vmul.f32 %v93, 0.125
    %v174 = vmul.f32 %v94, 0.125
    %v175 = vmul.f32 %v95, 0.125
    %v176 = vmul.f32 %v96, 0.125
    %v177 = vmul.f32 %v97, 0.125
    %v178 = vmul.f32 %v98, 0.125
    %v179 = vmul.f32 %v99, 0.125
    %v180 = vmul.f32 %v100, 0.125
    %v181 = vmul.f32 %v101, 0.125
    %v182 = vmul.f32 %v102, 0.125
    %v183 = vmul.f32 %v103, 0.125
    %v184 = vmul.f32 %v104, 0.125
    %v185 = vmul.f32 %v105, 0.125
    %v186 = vmul.f32 %v106, 0.125
    %v187 = vmul.f32 %v107, 0.125
    %v188 = vmul.f32 %v108, 0.125
    %v189 = vmul.f32 %v109, 0.125
    %v190 = vmul.f32 %v110, 0.125
    %v191 = vmul.f32 %v111, 0.125
    %v192 = vmul.f32 %v112, 0.125
    %v193 = vmul.f32 %v113, 0.125
    %v194 = vmul.f32 %v114, 0.125
    %v195 = vmul.f32 %v115, 0.125
    %v196 = vmul.f32 %v116, 0.125
    %v197 = vmul.f32 %v117, 0.125
    %v198 = vmul.f32 %v118, 0.125
    %v199 = vmul.f32 %v119, 0.125
    %v200 = vmul.f32 %v120, 0.125
    %v201 = vmul.f32 %v121, 0.125
    %v202 = vmul.f32 %v122, 0.125
    %v203 = vmul.f32 %v123, 0.125
    %v204 = vmul.f32 %v124, 0.125
    %v205 = vmul.f32 %v125, 0.125
    %v206 = vmul.f32 %v126, 0.125
    %v207 = vmul.f32 %v127, 0.125
    %v208 = vmul.f32 %v128, 0.125
    %v209 = vmul.f32 %v129, 0.125
    %v210 = vmul.f32 %v130, 0.125
    %v211 = vmul.f32 %v131, 0.125
    %v212 = vmul.f32 %v132, 0.125
    %v213 = vmul.f32 %v133, 0.125
    %v214 = vmul.f32 %v134, 0.125
    %v215 = vmul.f32 %v135, 0.125
    %v216 = vmul.f32 %v136, 0.125
    %v217 = vmul.f32 %v137, 0.125
    %v218 = vmul.f32 %v138, 0.125
    %v219 = vmul.f32 %v139, 0.125
    %v220 = vmul.f32 %v140, 0.125
    %v221 = vmul.f32 %v141, 0.125
    %v222 = vmul.f32 %v142, 0.125
    %v223 = vmul.f32 %v143, 0.125
    %v224 = vmul.f32 %v144, 0.125
    %v225 = vmul.f32 %v145, 0.125
    %v226 = vmul.f32 %v146, 0.125
    %v227 = vmul.f32 %v147, 0.125
    %v228 = vmul.f32 %v148, 0.125
    %v229 = vmul.f32 %v149, 0.125
    %v230 = vmul.f32 %v150, 0.125
    %v231 = vmul.f32 %v151, 0.125
    %v232 = vmul.f32 %v152, 0.125
    %v233 = vmul.f32 %v153, 0.125
    %v234 = vmul.f32 %v154, 0.125
    %v235 = vmul.f32 %v155, 0.125
    %v236 = vld [vmem:[#allocation5] sm:$0xff]
    %v237 = vld [vmem:[#allocation5 + $0x8] sm:$0xff]
    %v238 = vld [vmem:[#allocation5 + $0x10] sm:$0xff]
    %v239 = vld [vmem:[#allocation5 + $0x18] sm:$0xff]
    %v240 = vld [vmem:[#allocation5 + $0x20] sm:$0xff]
    %v241 = vld [vmem:[#allocation5 + $0x28] sm:$0xff]
    %v242 = vld [vmem:[#allocation5 + $0x30] sm:$0xff]
    %v243 = vld [vmem:[#allocation5 + $0x38] sm:$0xff]
    %v244 = vld [vmem:[#allocation5 + $0x40] sm:$0xff]
    %v245 = vld [vmem:[#allocation5 + $0x48] sm:$0xff]
    %v246 = vld [vmem:[#allocation5 + $0x50] sm:$0xff]
    %v247 = vld [vmem:[#allocation5 + $0x58] sm:$0xff]
    %v248 = vld [vmem:[#allocation5 + $0x60] sm:$0xff]
    %v249 = vld [vmem:[#allocation5 + $0x68] sm:$0xff]
    %v250 = vld [vmem:[#allocation5 + $0x70] sm:$0xff]
    %v251 = vld [vmem:[#allocation5 + $0x78] sm:$0xff]
    %v252 = vld [vmem:[#allocation5 + $0x80] sm:$0xff]
    %v253 = vld [vmem:[#allocation5 + $0x88] sm:$0xff]
    %v254 = vld [vmem:[#allocation5 + $0x90] sm:$0xff]
    %v255 = vld [vmem:[#allocation5 + $0x98] sm:$0xff]
    %v256 = vld [vmem:[#allocation5 + $0xa0] sm:$0xff]
    %v257 = vld [vmem:[#allocation5 + $0xa8] sm:$0xff]
    %v258 = vld [vmem:[#allocation5 + $0xb0] sm:$0xff]
    %v259 = vld [vmem:[#allocation5 + $0xb8] sm:$0xff]
    %v260 = vld [vmem:[#allocation5 + $0xc0] sm:$0xff]
    %v261 = vld [vmem:[#allocation5 + $0xc8] sm:$0xff]
    %v262 = vld [vmem:[#allocation5 + $0xd0] sm:$0xff]
    %v263 = vld [vmem:[#allocation5 + $0xd8] sm:$0xff]
    %v264 = vld [vmem:[#allocation5 + $0xe0] sm:$0xff]
    %v265 = vld [vmem:[#allocation5 + $0xe8] sm:$0xff]
    %v266 = vld [vmem:[#allocation5 + $0xf0] sm:$0xff]
    %v267 = vld [vmem:[#allocation5 + $0xf8] sm:$0xff]
    %v268 = vld [vmem:[#allocation5 + $0x100] sm:$0xff]
    %v269 = vld [vmem:[#allocation5 + $0x108] sm:$0xff]
    %v270 = vld [vmem:[#allocation5 + $0x110] sm:$0xff]
    %v271 = vld [vmem:[#allocation5 + $0x118] sm:$0xff]
    %v272 = vld [vmem:[#allocation5 + $0x120] sm:$0xff]
    %v273 = vld [vmem:[#allocation5 + $0x128] sm:$0xff]
    %v274 = vld [vmem:[#allocation5 + $0x130] sm:$0xff]
    %v275 = vld [vmem:[#allocation5 + $0x138] sm:$0xff]
    %v276 = vld [vmem:[#allocation5 + $0x140] sm:$0xff]
    %v277 = vld [vmem:[#allocation5 + $0x148] sm:$0xff]
    %v278 = vld [vmem:[#allocation5 + $0x150] sm:$0xff]
    %v279 = vld [vmem:[#allocation5 + $0x158] sm:$0xff]
    %v280 = vld [vmem:[#allocation5 + $0x160] sm:$0xff]
    %v281 = vld [vmem:[#allocation5 + $0x168] sm:$0xff]
    %v282 = vld [vmem:[#allocation5 + $0x170] sm:$0xff]
    %v283 = vld [vmem:[#allocation5 + $0x178] sm:$0xff]
    %v284 = vld [vmem:[#allocation5 + $0x180] sm:$0xff]
    %v285 = vld [vmem:[#allocation5 + $0x188] sm:$0xff]
    %v286 = vld [vmem:[#allocation5 + $0x190] sm:$0xff]
    %v287 = vld [vmem:[#allocation5 + $0x198] sm:$0xff]
    %v288 = vld [vmem:[#allocation5 + $0x1a0] sm:$0xff]
    %v289 = vld [vmem:[#allocation5 + $0x1a8] sm:$0xff]
    %v290 = vld [vmem:[#allocation5 + $0x1b0] sm:$0xff]
    %v291 = vld [vmem:[#allocation5 + $0x1b8] sm:$0xff]
    %v292 = vld [vmem:[#allocation5 + $0x1c0] sm:$0xff]
    %v293 = vld [vmem:[#allocation5 + $0x1c8] sm:$0xff]
    %v294 = vld [vmem:[#allocation5 + $0x1d0] sm:$0xff]
    %v295 = vld [vmem:[#allocation5 + $0x1d8] sm:$0xff]
    %v296 = vld [vmem:[#allocation5 + $0x1e0] sm:$0xff]
    %v297 = vld [vmem:[#allocation5 + $0x1e8] sm:$0xff]
    %v298 = vld [vmem:[#allocation5 + $0x1f0] sm:$0xff]
    %v299 = vld [vmem:[#allocation5 + $0x1f8] sm:$0xff]
    %v300 = vld [vmem:[#allocation5 + $0x200] sm:$0xff]
    %v301 = vld [vmem:[#allocation5 + $0x208] sm:$0xff]
    %v302 = vld [vmem:[#allocation5 + $0x210] sm:$0xff]
    %v303 = vld [vmem:[#allocation5 + $0x218] sm:$0xff]
    %v304 = vld [vmem:[#allocation5 + $0x220] sm:$0xff]
    %v305 = vld [vmem:[#allocation5 + $0x228] sm:$0xff]
    %v306 = vld [vmem:[#allocation5 + $0x230] sm:$0xff]
    %v307 = vld [vmem:[#allocation5 + $0x238] sm:$0xff]
    %v308 = vld [vmem:[#allocation5 + $0x240] sm:$0xff]
    %v309 = vld [vmem:[#allocation5 + $0x248] sm:$0xff]
    %v310 = vld [vmem:[#allocation5 + $0x250] sm:$0xff]
    %v311 = vld [vmem:[#allocation5 + $0x258] sm:$0xff]
    %v312 = vld [vmem:[#allocation5 + $0x260] sm:$0xff]
    %v313 = vld [vmem:[#allocation5 + $0x268] sm:$0xff]
    %v314 = vld [vmem:[#allocation5 + $0x270] sm:$0xff]
    %v315 = vld [vmem:[#allocation5 + $0x278] sm:$0xff]
    %v316 = vld [vmem:[#allocation7] sm:$0xff]
    %v317 = vld [vmem:[#allocation7 + $0x8] sm:$0xff]
    %v318 = vld [vmem:[#allocation7 + $0x10] sm:$0xff]
    %v319 = vld [vmem:[#allocation7 + $0x18] sm:$0xff]
    %v320 = vld [vmem:[#allocation7 + $0x20] sm:$0xff]
    %v321 = vld [vmem:[#allocation7 + $0x28] sm:$0xff]
    %v322 = vld [vmem:[#allocation7 + $0x30] sm:$0xff]
    %v323 = vld [vmem:[#allocation7 + $0x38] sm:$0xff]
    %v324 = vld [vmem:[#allocation7 + $0x40] sm:$0xff]
    %v325 = vld [vmem:[#allocation7 + $0x48] sm:$0xff]
    %v326 = vld [vmem:[#allocation7 + $0x50] sm:$0xff]
    %v327 = vld [vmem:[#allocation7 + $0x58] sm:$0xff]
    %v328 = vld [vmem:[#allocation7 + $0x60] sm:$0xff]
    %v329 = vld [vmem:[#allocation7 + $0x68] sm:$0xff]
    %v330 = vld [vmem:[#allocation7 + $0x70] sm:$0xff]
    %v331 = vld [vmem:[#allocation7 + $0x78] sm:$0xff]
    %v332 = vld [vmem:[#allocation7 + $0x80] sm:$0xff]
    %v333 = vld [vmem:[#allocation7 + $0x88] sm:$0xff]
    %v334 = vld [vmem:[#allocation7 + $0x90] sm:$0xff]
    %v335 = vld [vmem:[#allocation7 + $0x98] sm:$0xff]
    %v336 = vld [vmem:[#allocation7 + $0xa0] sm:$0xff]
    %v337 = vld [vmem:[#allocation7 + $0xa8] sm:$0xff]
    %v338 = vld [vmem:[#allocation7 + $0xb0] sm:$0xff]
    %v339 = vld [vmem:[#allocation7 + $0xb8] sm:$0xff]
    %v340 = vld [vmem:[#allocation7 + $0xc0] sm:$0xff]
    %v341 = vld [vmem:[#allocation7 + $0xc8] sm:$0xff]
    %v342 = vld [vmem:[#allocation7 + $0xd0] sm:$0xff]
    %v343 = vld [vmem:[#allocation7 + $0xd8] sm:$0xff]
    %v344 = vld [vmem:[#allocation7 + $0xe0] sm:$0xff]
    %v345 = vld [vmem:[#allocation7 + $0xe8] sm:$0xff]
    %v346 = vld [vmem:[#allocation7 + $0xf0] sm:$0xff]
    %v347 = vld [vmem:[#allocation7 + $0xf8] sm:$0xff]
    %v348 = vld [vmem:[#allocation7 + $0x100] sm:$0xff]
    %v349 = vld [vmem:[#allocation7 + $0x108] sm:$0xff]
    %v350 = vld [vmem:[#allocation7 + $0x110] sm:$0xff]
    %v351 = vld [vmem:[#allocation7 + $0x118] sm:$0xff]
    %v352 = vld [vmem:[#allocation7 + $0x120] sm:$0xff]
    %v353 = vld [vmem:[#allocation7 + $0x128] sm:$0xff]
    %v354 = vld [vmem:[#allocation7 + $0x130] sm:$0xff]
    %v355 = vld [vmem:[#allocation7 + $0x138] sm:$0xff]
    %v356 = vld [vmem:[#allocation7 + $0x140] sm:$0xff]
    %v357 = vld [vmem:[#allocation7 + $0x148] sm:$0xff]
    %v358 = vld [vmem:[#allocation7 + $0x150] sm:$0xff]
    %v359 = vld [vmem:[#allocation7 + $0x158] sm:$0xff]
    %v360 = vld [vmem:[#allocation7 + $0x160] sm:$0xff]
    %v361 = vld [vmem:[#allocation7 + $0x168] sm:$0xff]
    %v362 = vld [vmem:[#allocation7 + $0x170] sm:$0xff]
    %v363 = vld [vmem:[#allocation7 + $0x178] sm:$0xff]
    %v364 = vld [vmem:[#allocation7 + $0x180] sm:$0xff]
    %v365 = vld [vmem:[#allocation7 + $0x188] sm:$0xff]
    %v366 = vld [vmem:[#allocation7 + $0x190] sm:$0xff]
    %v367 = vld [vmem:[#allocation7 + $0x198] sm:$0xff]
    %v368 = vld [vmem:[#allocation7 + $0x1a0] sm:$0xff]
    %v369 = vld [vmem:[#allocation7 + $0x1a8] sm:$0xff]
    %v370 = vld [vmem:[#allocation7 + $0x1b0] sm:$0xff]
    %v371 = vld [vmem:[#allocation7 + $0x1b8] sm:$0xff]
    %v372 = vld [vmem:[#allocation7 + $0x1c0] sm:$0xff]
    %v373 = vld [vmem:[#allocation7 + $0x1c8] sm:$0xff]
    %v374 = vld [vmem:[#allocation7 + $0x1d0] sm:$0xff]
    %v375 = vld [vmem:[#allocation7 + $0x1d8] sm:$0xff]
    %v376 = vld [vmem:[#allocation7 + $0x1e0] sm:$0xff]
    %v377 = vld [vmem:[#allocation7 + $0x1e8] sm:$0xff]
    %v378 = vld [vmem:[#allocation7 + $0x1f0] sm:$0xff]
    %v379 = vld [vmem:[#allocation7 + $0x1f8] sm:$0xff]
    %v380 = vld [vmem:[#allocation7 + $0x200] sm:$0xff]
    %v381 = vld [vmem:[#allocation7 + $0x208] sm:$0xff]
    %v382 = vld [vmem:[#allocation7 + $0x210] sm:$0xff]
    %v383 = vld [vmem:[#allocation7 + $0x218] sm:$0xff]
    %v384 = vld [vmem:[#allocation7 + $0x220] sm:$0xff]
    %v385 = vld [vmem:[#allocation7 + $0x228] sm:$0xff]
    %v386 = vld [vmem:[#allocation7 + $0x230] sm:$0xff]
    %v387 = vld [vmem:[#allocation7 + $0x238] sm:$0xff]
    %v388 = vld [vmem:[#allocation7 + $0x240] sm:$0xff]
    %v389 = vld [vmem:[#allocation7 + $0x248] sm:$0xff]
    %v390 = vld [vmem:[#allocation7 + $0x250] sm:$0xff]
    %v391 = vld [vmem:[#allocation7 + $0x258] sm:$0xff]
    %v392 = vld [vmem:[#allocation7 + $0x260] sm:$0xff]
    %v393 = vld [vmem:[#allocation7 + $0x268] sm:$0xff]
    %v394 = vld [vmem:[#allocation7 + $0x270] sm:$0xff]
    %v395 = vld [vmem:[#allocation7 + $0x278] sm:$0xff]
    %vm396 = vcmask 523264
    %v398 = vsel %vm396, %v156, 0
    %v401 = vsel %vm396, %v157, 0
    %v404 = vsel %vm396, %v158, 0
    %v407 = vsel %vm396, %v159, 0
    %v410 = vsel %vm396, %v160, 0
    %v413 = vsel %vm396, %v236, 0
    %v416 = vsel %vm396, %v237, 0
    %v419 = vsel %vm396, %v238, 0
    %v422 = vsel %vm396, %v239, 0
    %v425 = vsel %vm396, %v240, 0
    %427 = vmatprep.subr.mxu0 0.0
    %428 = vmatpush1.xpose.msra.mxu0 %v413
    %429 = vmatprep.subr.mxu0 0.0
    %430 = vmatpush1.xpose.msra.mxu0 %v416
    %431 = vmatprep.subr.mxu0 0.0
    %432 = vmatpush1.xpose.msra.mxu0 %v419
    %433 = vmatprep.subr.mxu0 0.0
    %434 = vmatpush1.xpose.msra.mxu0 %v422
    %435 = vmatprep.subr.mxu0 0.0
    %436 = vmatpush1.xpose.msra.mxu0 %v425
    %437 = vmatprep.subr.mxu0 0.0
    %438 = vmatpush1.xpose.msra.mxu0 0.0
    %439 = vmatprep.subr.mxu0 0.0
    %440 = vmatpush1.xpose.msra.mxu0 0.0
    %441 = vmatprep.subr.mxu0 0.0
    %442 = vmatpush1.xpose.msra.mxu0 0.0
    %443 = vmatprep.subr.mxu0 0.0
    %444 = vmatpush1.xpose.msra.mxu0 0.0
    %445 = vmatprep.subr.mxu0 0.0
    %446 = vmatpush1.xpose.msra.mxu0 0.0
    %447 = vmatprep.subr.mxu0 0.0
    %448 = vmatpush1.xpose.msra.mxu0 0.0
    %449 = vmatprep.subr.mxu0 0.0
    %450 = vmatpush1.xpose.msra.mxu0 0.0
    %451 = vmatprep.subr.mxu0 0.0
    %452 = vmatpush1.xpose.msra.mxu0 0.0
    %453 = vmatprep.subr.mxu0 0.0
    %454 = vmatpush1.xpose.msra.mxu0 0.0
    %455 = vmatprep.subr.mxu0 0.0
    %456 = vmatpush1.xpose.msra.mxu0 0.0
    %457 = vmatprep.subr.mxu0 0.0
    %458 = vmatpush1.xpose.msra.mxu0 0.0
    %459 = vmatprep.subr.mxu0 0.0
    %460 = vmatpush1.xpose.msra.mxu0 0.0
    %461 = vmatprep.subr.mxu0 0.0
    %462 = vmatpush1.xpose.msra.mxu0 0.0
    %463 = vmatprep.subr.mxu0 0.0
    %464 = vmatpush1.xpose.msra.mxu0 0.0
    %465 = vmatprep.subr.mxu0 0.0
    %466 = vmatpush1.xpose.msra.mxu0 0.0
    %467 = vmatprep.subr.mxu0 0.0
    %468 = vmatpush1.xpose.msra.mxu0 0.0
    %469 = vmatprep.subr.mxu0 0.0
    %470 = vmatpush1.xpose.msra.mxu0 0.0
    %471 = vmatprep.subr.mxu0 0.0
    %472 = vmatpush1.xpose.msra.mxu0 0.0
    %473 = vmatprep.subr.mxu0 0.0
    %474 = vmatpush1.xpose.msra.mxu0 0.0
    %475 = vmatprep.subr.mxu0 0.0
    %476 = vmatpush1.xpose.msra.mxu0 0.0
    %477 = vmatprep.subr.mxu0 0.0
    %478 = vmatpush1.xpose.msra.mxu0 0.0
    %479 = vmatprep.subr.mxu0 0.0
    %480 = vmatpush1.xpose.msra.mxu0 0.0
    %481 = vmatprep.subr.mxu0 0.0
    %482 = vmatpush1.xpose.msra.mxu0 0.0
    %483 = vmatprep.subr.mxu0 0.0
    %484 = vmatpush1.xpose.msra.mxu0 0.0
    %485 = vmatprep.subr.mxu0 0.0
    %486 = vmatpush1.xpose.msra.mxu0 0.0
    %487 = vmatprep.subr.mxu0 0.0
    %488 = vmatpush1.xpose.msra.mxu0 0.0
    %489 = vmatprep.subr.mxu0 0.0
    %490 = vmatpush1.xpose.msra.mxu0 0.0
    %491 = vmatprep.mubr.f32.mxu0 0.0
    %492 = vmatmul.mubr.f32.gmra.mrb[0].mxu0 %v398
    %v493 = vpop.f32.mrb[0].mxu0
    %v494 = vadd.f32 0.0, %v493
    %v495 = vpop.f32.mrb[0].mxu0
    %496 = vmatprep.mubr.f32.mxu0 0.0
    %497 = vmatmul.mubr.f32.gmra.mrb[0].mxu0 %v401
    %v498 = vpop.f32.mrb[0].mxu0
    %v499 = vadd.f32 0.0, %v498
    %v500 = vpop.f32.mrb[0].mxu0
    %501 = vmatprep.mubr.f32.mxu0 0.0
    %502 = vmatmul.mubr.f32.gmra.mrb[0].mxu0 %v404
    %v503 = vpop.f32.mrb[0].mxu0
    %v504 = vadd.f32 0.0, %v503
    %v505 = vpop.f32.mrb[0].mxu0
    %506 = vmatprep.mubr.f32.mxu0 0.0
    %507 = vmatmul.mubr.f32.gmra.mrb[0].mxu0 %v407
    %v508 = vpop.f32.mrb[0].mxu0
    %v509 = vadd.f32 0.0, %v508
    %v510 = vpop.f32.mrb[0].mxu0
    %511 = vmatprep.mubr.f32.mxu0 0.0
    %512 = vmatmul.mubr.f32.gmra.mrb[0].mxu0 %v410
    %v513 = vpop.f32.mrb[0].mxu0
    %v514 = vadd.f32 0.0, %v513
    %v515 = vpop.f32.mrb[0].mxu0
    %516 = vdwg.mxu0
    %v518 = vsel %vm396, %v161, 0
    %v521 = vsel %vm396, %v162, 0
    %v524 = vsel %vm396, %v163, 0
    %v527 = vsel %vm396, %v164, 0
    %v530 = vsel %vm396, %v165, 0
    %v533 = vsel %vm396, %v241, 0
    %v536 = vsel %vm396, %v242, 0
    %v539 = vsel %vm396, %v243, 0
    %v542 = vsel %vm396, %v244, 0
    %v545 = vsel %vm396, %v245, 0
    %547 = vmatprep.subr.mxu0 0.0
    %548 = vmatpush1.xpose.msra.mxu0 %v533
    %549 = vmatprep.subr.mxu0 0.0
    %550 = vmatpush1.xpose.msra.mxu0 %v536
    %551 = vmatprep.subr.mxu0 0.0
    %552 = vmatpush1.xpose.msra.mxu0 %v539
    %553 = vmatprep.subr.mxu0 0.0
    %554 = vmatpush1.xpose.msra.mxu0 %v542
    %555 = vmatprep.subr.mxu0 0.0
    %556 = vmatpush1.xpose.msra.mxu0 %v545
    %557 = vmatprep.subr.mxu0 0.0
    %558 = vmatpush1.xpose.msra.mxu0 0.0
    %559 = vmatprep.subr.mxu0 0.0
    %560 = vmatpush1.xpose.msra.mxu0 0.0
    %561 = vmatprep.subr.mxu0 0.0
    %562 = vmatpush1.xpose.msra.mxu0 0.0
    %563 = vmatprep.subr.mxu0 0.0
    %564 = vmatpush1.xpose.msra.mxu0 0.0
    %565 = vmatprep.subr.mxu0 0.0
    %566 = vmatpush1.xpose.msra.mxu0 0.0
    %567 = vmatprep.subr.mxu0 0.0
    %568 = vmatpush1.xpose.msra.mxu0 0.0
    %569 = vmatprep.subr.mxu0 0.0
    %570 = vmatpush1.xpose.msra.mxu0 0.0
    %571 = vmatprep.subr.mxu0 0.0
    %572 = vmatpush1.xpose.msra.mxu0 0.0
    %573 = vmatprep.subr.mxu0 0.0
    %574 = vmatpush1.xpose.msra.mxu0 0.0
    %575 = vmatprep.subr.mxu0 0.0
    %576 = vmatpush1.xpose.msra.mxu0 0.0
    %577 = vmatprep.subr.mxu0 0.0
    %578 = vmatpush1.xpose.msra.mxu0 0.0
    %579 = vmatprep.subr.mxu0 0.0
    %580 = vmatpush1.xpose.msra.mxu0 0.0
    %581 = vmatprep.subr.mxu0 0.0
    %582 = vmatpush1.xpose.msra.mxu0 0.0
    %583 = vmatprep.subr.mxu0 0.0
    %584 = vmatpush1.xpose.msra.mxu0 0.0
    %585 = vmatprep.subr.mxu0 0.0
    %586 = vmatpush1.xpose.msra.mxu0 0.0
    %587 = vmatprep.subr.mxu0 0.0
    %588 = vmatpush1.xpose.msra.mxu0 0.0
    %589 = vmatprep.subr.mxu0 0.0
    %590 = vmatpush1.xpose.msra.mxu0 0.0
    %591 = vmatprep.subr.mxu0 0.0
    %592 = vmatpush1.xpose.msra.mxu0 0.0
    %593 = vmatprep.subr.mxu0 0.0
    %594 = vmatpush1.xpose.msra.mxu0 0.0
    %595 = vmatprep.subr.mxu0 0.0
    %596 = vmatpush1.xpose.msra.mxu0 0.0
    %597 = vmatprep.subr.mxu0 0.0
    %598 = vmatpush1.xpose.msra.mxu0 0.0
    %599 = vmatprep.subr.mxu0 0.0
    %600 = vmatpush1.xpose.msra.mxu0 0.0
    %601 = vmatprep.subr.mxu0 0.0
    %602 = vmatpush1.xpose.msra.mxu0 0.0
    %603 = vmatprep.subr.mxu0 0.0
    %604 = vmatpush1.xpose.msra.mxu0 0.0
    %605 = vmatprep.subr.mxu0 0.0
    %606 = vmatpush1.xpose.msra.mxu0 0.0
    %607 = vmatprep.subr.mxu0 0.0
    %608 = vmatpush1.xpose.msra.mxu0 0.0
    %609 = vmatprep.subr.mxu0 0.0
    %610 = vmatpush1.xpose.msra.mxu0 0.0
    %611 = vmatprep.mubr.f32.mxu0 0.0
    %612 = vmatmul.mubr.f32.gmra.mrb[0].mxu0 %v518
    %v613 = vpop.f32.mrb[0].mxu0
    %v614 = vadd.f32 0.0, %v613
    %v615 = vpop.f32.mrb[0].mxu0
    %616 = vmatprep.mubr.f32.mxu0 0.0
    %617 = vmatmul.mubr.f32.gmra.mrb[0].mxu0 %v521
    %v618 = vpop.f32.mrb[0].mxu0
    %v619 = vadd.f32 0.0, %v618
    %v620 = vpop.f32.mrb[0].mxu0
    %621 = vmatprep.mubr.f32.mxu0 0.0
    %622 = vmatmul.mubr.f32.gmra.mrb[0].mxu0 %v524
    %v623 = vpop.f32.mrb[0].mxu0
    %v624 = vadd.f32 0.0, %v623
    %v625 = vpop.f32.mrb[0].mxu0
    %626 = vmatprep.mubr.f32.mxu0 0.0
    %627 = vmatmul.mubr.f32.gmra.mrb[0].mxu0 %v527
    %v628 = vpop.f32.mrb[0].mxu0
    %v629 = vadd.f32 0.0, %v628
    %v630 = vpop.f32.mrb[0].mxu0
    %631 = vmatprep.mubr.f32.mxu0 0.0
    %632 = vmatmul.mubr.f32.gmra.mrb[0].mxu0 %v530
    %v633 = vpop.f32.mrb[0].mxu0
    %v634 = vadd.f32 0.0, %v633
    %v635 = vpop.f32.mrb[0].mxu0
    %636 = vdwg.mxu0
    %v638 = vsel %vm396, %v166, 0
    %v641 = vsel %vm396, %v167, 0
    %v644 = vsel %vm396, %v168, 0
    %v647 = vsel %vm396, %v169, 0
    %v650 = vsel %vm396, %v170, 0
    %v653 = vsel %vm396, %v246, 0
    %v656 = vsel %vm396, %v247, 0
    %v659 = vsel %vm396, %v248, 0
    %v662 = vsel %vm396, %v249, 0
    %v665 = vsel %vm396, %v250, 0
    %667 = vmatprep.subr.mxu0 0.0
    %668 = vmatpush1.xpose.msra.mxu0 %v653
    %669 = vmatprep.subr.mxu0 0.0
    %670 = vmatpush1.xpose.msra.mxu0 %v656
    %671 = vmatprep.subr.mxu0 0.0
    %672 = vmatpush1.xpose.msra.mxu0 %v659
    %673 = vmatprep.subr.mxu0 0.0
    %674 = vmatpush1.xpose.msra.mxu0 %v662
    %675 = vmatprep.subr.mxu0 0.0
    %676 = vmatpush1.xpose.msra.mxu0 %v665
    %677 = vmatprep.subr.mxu0 0.0
    %678 = vmatpush1.xpose.msra.mxu0 0.0
    %679 = vmatprep.subr.mxu0 0.0
    %680 = vmatpush1.xpose.msra.mxu0 0.0
    %681 = vmatprep.subr.mxu0 0.0
    %682 = vmatpush1.xpose.msra.mxu0 0.0
    %683 = vmatprep.subr.mxu0 0.0
    %684 = vmatpush1.xpose.msra.mxu0 0.0
    %685 = vmatprep.subr.mxu0 0.0
    %686 = vmatpush1.xpose.msra.mxu0 0.0
    %687 = vmatprep.subr.mxu0 0.0
    %688 = vmatpush1.xpose.msra.mxu0 0.0
    %689 = vmatprep.subr.mxu0 0.0
    %690 = vmatpush1.xpose.msra.mxu0 0.0
    %691 = vmatprep.subr.mxu0 0.0
    %692 = vmatpush1.xpose.msra.mxu0 0.0
    %693 = vmatprep.subr.mxu0 0.0
    %694 = vmatpush1.xpose.msra.mxu0 0.0
    %695 = vmatprep.subr.mxu0 0.0
    %696 = vmatpush1.xpose.msra.mxu0 0.0
    %697 = vmatprep.subr.mxu0 0.0
    %698 = vmatpush1.xpose.msra.mxu0 0.0
    %699 = vmatprep.subr.mxu0 0.0
    %700 = vmatpush1.xpose.msra.mxu0 0.0
    %701 = vmatprep.subr.mxu0 0.0
    %702 = vmatpush1.xpose.msra.mxu0 0.0
    %703 = vmatprep.subr.mxu0 0.0
    %704 = vmatpush1.xpose.msra.mxu0 0.0
    %705 = vmatprep.subr.mxu0 0.0
    %706 = vmatpush1.xpose.msra.mxu0 0.0
    %707 = vmatprep.subr.mxu0 0.0
    %708 = vmatpush1.xpose.msra.mxu0 0.0
    %709 = vmatprep.subr.mxu0 0.0
    %710 = vmatpush1.xpose.msra.mxu0 0.0
    %711 = vmatprep.subr.mxu0 0.0
    %712 = vmatpush1.xpose.msra.mxu0 0.0
    %713 = vmatprep.subr.mxu0 0.0
    %714 = vmatpush1.xpose.msra.mxu0 0.0
    %715 = vmatprep.subr.mxu0 0.0
    %716 = vmatpush1.xpose.msra.mxu0 0.0
    %717 = vmatprep.subr.mxu0 0.0
    %718 = vmatpush1.xpose.msra.mxu0 0.0
    %719 = vmatprep.subr.mxu0 0.0
    %720 = vmatpush1.xpose.msra.mxu0 0.0
    %721 = vmatprep.subr.mxu0 0.0
    %722 = vmatpush1.xpose.msra.mxu0 0.0
    %723 = vmatprep.subr.mxu0 0.0
    %724 = vmatpush1.xpose.msra.mxu0 0.0
    %725 = vmatprep.subr.mxu0 0.0
    %726 = vmatpush1.xpose.msra.mxu0 0.0
    %727 = vmatprep.subr.mxu0 0.0
    %728 = vmatpush1.xpose.msra.mxu0 0.0
    %729 = vmatprep.subr.mxu0 0.0
    %730 = vmatpush1.xpose.msra.mxu0 0.0
    %731 = vmatprep.mubr.f32.mxu0 0.0
    %732 = vmatmul.mubr.f32.gmra.mrb[0].mxu0 %v638
    %v733 = vpop.f32.mrb[0].mxu0
    %v734 = vadd.f32 0.0, %v733
    %v735 = vpop.f32.mrb[0].mxu0
    %736 = vmatprep.mubr.f32.mxu0 0.0
    %737 = vmatmul.mubr.f32.gmra.mrb[0].mxu0 %v641
    %v738 = vpop.f32.mrb[0].mxu0
    %v739 = vadd.f32 0.0, %v738
    %v740 = vpop.f32.mrb[0].mxu0
    %741 = vmatprep.mubr.f32.mxu0 0.0
    %742 = vmatmul.mubr.f32.gmra.mrb[0].mxu0 %v644
    %v743 = vpop.f32.mrb[0].mxu0
    %v744 = vadd.f32 0.0, %v743
    %v745 = vpop.f32.mrb[0].mxu0
    %746 = vmatprep.mubr.f32.mxu0 0.0
    %747 = vmatmul.mubr.f32.gmra.mrb[0].mxu0 %v647
    %v748 = vpop.f32.mrb[0].mxu0
    %v749 = vadd.f32 0.0, %v748
    %v750 = vpop.f32.mrb[0].mxu0
    %751 = vmatprep.mubr.f32.mxu0 0.0
    %752 = vmatmul.mubr.f32.gmra.mrb[0].mxu0 %v650
    %v753 = vpop.f32.mrb[0].mxu0
    %v754 = vadd.f32 0.0, %v753
    %v755 = vpop.f32.mrb[0].mxu0
    %756 = vdwg.mxu0
    %v758 = vsel %vm396, %v171, 0
    %v761 = vsel %vm396, %v172, 0
    %v764 = vsel %vm396, %v173, 0
    %v767 = vsel %vm396, %v174, 0
    %v770 = vsel %vm396, %v175, 0
    %v773 = vsel %vm396, %v251, 0
    %v776 = vsel %vm396, %v252, 0
    %v779 = vsel %vm396, %v253, 0
    %v782 = vsel %vm396, %v254, 0
    %v785 = vsel %vm396, %v255, 0
    %787 = vmatprep.subr.mxu0 0.0
    %788 = vmatpush1.xpose.msra.mxu0 %v773
    %789 = vmatprep.subr.mxu0 0.0
    %790 = vmatpush1.xpose.msra.mxu0 %v776
    %791 = vmatprep.subr.mxu0 0.0
    %792 = vmatpush1.xpose.msra.mxu0 %v779
    %793 = vmatprep.subr.mxu0 0.0
    %794 = vmatpush1.xpose.msra.mxu0 %v782
    %795 = vmatprep.subr.mxu0 0.0
    %796 = vmatpush1.xpose.msra.mxu0 %v785
    %797 = vmatprep.subr.mxu0 0.0
    %798 = vmatpush1.xpose.msra.mxu0 0.0
    %799 = vmatprep.subr.mxu0 0.0
    %800 = vmatpush1.xpose.msra.mxu0 0.0
    %801 = vmatprep.subr.mxu0 0.0
    %802 = vmatpush1.xpose.msra.mxu0 0.0
    %803 = vmatprep.subr.mxu0 0.0
    %804 = vmatpush1.xpose.msra.mxu0 0.0
    %805 = vmatprep.subr.mxu0 0.0
    %806 = vmatpush1.xpose.msra.mxu0 0.0
    %807 = vmatprep.subr.mxu0 0.0
    %808 = vmatpush1.xpose.msra.mxu0 0.0
    %809 = vmatprep.subr.mxu0 0.0
    %810 = vmatpush1.xpose.msra.mxu0 0.0
    %811 = vmatprep.subr.mxu0 0.0
    %812 = vmatpush1.xpose.msra.mxu0 0.0
    %813 = vmatprep.subr.mxu0 0.0
    %814 = vmatpush1.xpose.msra.mxu0 0.0
    %815 = vmatprep.subr.mxu0 0.0
    %816 = vmatpush1.xpose.msra.mxu0 0.0
    %817 = vmatprep.subr.mxu0 0.0
    %818 = vmatpush1.xpose.msra.mxu0 0.0
    %819 = vmatprep.subr.mxu0 0.0
    %820 = vmatpush1.xpose.msra.mxu0 0.0
    %821 = vmatprep.subr.mxu0 0.0
    %822 = vmatpush1.xpose.msra.mxu0 0.0
    %823 = vmatprep.subr.mxu0 0.0
    %824 = vmatpush1.xpose.msra.mxu0 0.0
    %825 = vmatprep.subr.mxu0 0.0
    %826 = vmatpush1.xpose.msra.mxu0 0.0
    %827 = vmatprep.subr.mxu0 0.0
    %828 = vmatpush1.xpose.msra.mxu0 0.0
    %829 = vmatprep.subr.mxu0 0.0
    %830 = vmatpush1.xpose.msra.mxu0 0.0
    %831 = vmatprep.subr.mxu0 0.0
    %832 = vmatpush1.xpose.msra.mxu0 0.0
    %833 = vmatprep.subr.mxu0 0.0
    %834 = vmatpush1.xpose.msra.mxu0 0.0
    %835 = vmatprep.subr.mxu0 0.0
    %836 = vmatpush1.xpose.msra.mxu0 0.0
    %837 = vmatprep.subr.mxu0 0.0
    %838 = vmatpush1.xpose.msra.mxu0 0.0
    %839 = vmatprep.subr.mxu0 0.0
    %840 = vmatpush1.xpose.msra.mxu0 0.0
    %841 = vmatprep.subr.mxu0 0.0
    %842 = vmatpush1.xpose.msra.mxu0 0.0
    %843 = vmatprep.subr.mxu0 0.0
    %844 = vmatpush1.xpose.msra.mxu0 0.0
    %845 = vmatprep.subr.mxu0 0.0
    %846 = vmatpush1.xpose.msra.mxu0 0.0
    %847 = vmatprep.subr.mxu0 0.0
    %848 = vmatpush1.xpose.msra.mxu0 0.0
    %849 = vmatprep.subr.mxu0 0.0
    %850 = vmatpush1.xpose.msra.mxu0 0.0
    %851 = vmatprep.mubr.f32.mxu0 0.0
    %852 = vmatmul.mubr.f32.gmra.mrb[0].mxu0 %v758
    %v853 = vpop.f32.mrb[0].mxu0
    %v854 = vadd.f32 0.0, %v853
    %v855 = vpop.f32.mrb[0].mxu0
    %856 = vmatprep.mubr.f32.mxu0 0.0
    %857 = vmatmul.mubr.f32.gmra.mrb[0].mxu0 %v761
    %v858 = vpop.f32.mrb[0].mxu0
    %v859 = vadd.f32 0.0, %v858
    %v860 = vpop.f32.mrb[0].mxu0
    %861 = vmatprep.mubr.f32.mxu0 0.0
    %862 = vmatmul.mubr.f32.gmra.mrb[0].mxu0 %v764
    %v863 = vpop.f32.mrb[0].mxu0
    %v864 = vadd.f32 0.0, %v863
    %v865 = vpop.f32.mrb[0].mxu0
    %866 = vmatprep.mubr.f32.mxu0 0.0
    %867 = vmatmul.mubr.f32.gmra.mrb[0].mxu0 %v767
    %v868 = vpop.f32.mrb[0].mxu0
    %v869 = vadd.f32 0.0, %v868
    %v870 = vpop.f32.mrb[0].mxu0
    %871 = vmatprep.mubr.f32.mxu0 0.0
    %872 = vmatmul.mubr.f32.gmra.mrb[0].mxu0 %v770
    %v873 = vpop.f32.mrb[0].mxu0
    %v874 = vadd.f32 0.0, %v873
    %v875 = vpop.f32.mrb[0].mxu0
    %876 = vdwg.mxu0
    %v878 = vsel %vm396, %v176, 0
    %v881 = vsel %vm396, %v177, 0
    %v884 = vsel %vm396, %v178, 0
    %v887 = vsel %vm396, %v179, 0
    %v890 = vsel %vm396, %v180, 0
    %v893 = vsel %vm396, %v256, 0
    %v896 = vsel %vm396, %v257, 0
    %v899 = vsel %vm396, %v258, 0
    %v902 = vsel %vm396, %v259, 0
    %v905 = vsel %vm396, %v260, 0
    %907 = vmatprep.subr.mxu0 0.0
    %908 = vmatpush1.xpose.msra.mxu0 %v893
    %909 = vmatprep.subr.mxu0 0.0
    %910 = vmatpush1.xpose.msra.mxu0 %v896
    %911 = vmatprep.subr.mxu0 0.0
    %912 = vmatpush1.xpose.msra.mxu0 %v899
    %913 = vmatprep.subr.mxu0 0.0
    %914 = vmatpush1.xpose.msra.mxu0 %v902
    %915 = vmatprep.subr.mxu0 0.0
    %916 = vmatpush1.xpose.msra.mxu0 %v905
    %917 = vmatprep.subr.mxu0 0.0
    %918 = vmatpush1.xpose.msra.mxu0 0.0
    %919 = vmatprep.subr.mxu0 0.0
    %920 = vmatpush1.xpose.msra.mxu0 0.0
    %921 = vmatprep.subr.mxu0 0.0
    %922 = vmatpush1.xpose.msra.mxu0 0.0
    %923 = vmatprep.subr.mxu0 0.0
    %924 = vmatpush1.xpose.msra.mxu0 0.0
    %925 = vmatprep.subr.mxu0 0.0
    %926 = vmatpush1.xpose.msra.mxu0 0.0
    %927 = vmatprep.subr.mxu0 0.0
    %928 = vmatpush1.xpose.msra.mxu0 0.0
    %929 = vmatprep.subr.mxu0 0.0
    %930 = vmatpush1.xpose.msra.mxu0 0.0
    %931 = vmatprep.subr.mxu0 0.0
    %932 = vmatpush1.xpose.msra.mxu0 0.0
    %933 = vmatprep.subr.mxu0 0.0
    %934 = vmatpush1.xpose.msra.mxu0 0.0
    %935 = vmatprep.subr.mxu0 0.0
    %936 = vmatpush1.xpose.msra.mxu0 0.0
    %937 = vmatprep.subr.mxu0 0.0
    %938 = vmatpush1.xpose.msra.mxu0 0.0
    %939 = vmatprep.subr.mxu0 0.0
    %940 = vmatpush1.xpose.msra.mxu0 0.0
    %941 = vmatprep.subr.mxu0 0.0
    %942 = vmatpush1.xpose.msra.mxu0 0.0
    %943 = vmatprep.subr.mxu0 0.0
    %944 = vmatpush1.xpose.msra.mxu0 0.0
    %945 = vmatprep.subr.mxu0 0.0
    %946 = vmatpush1.xpose.msra.mxu0 0.0
    %947 = vmatprep.subr.mxu0 0.0
    %948 = vmatpush1.xpose.msra.mxu0 0.0
    %949 = vmatprep.subr.mxu0 0.0
    %950 = vmatpush1.xpose.msra.mxu0 0.0
    %951 = vmatprep.subr.mxu0 0.0
    %952 = vmatpush1.xpose.msra.mxu0 0.0
    %953 = vmatprep.subr.mxu0 0.0
    %954 = vmatpush1.xpose.msra.mxu0 0.0
    %955 = vmatprep.subr.mxu0 0.0
    %956 = vmatpush1.xpose.msra.mxu0 0.0
    %957 = vmatprep.subr.mxu0 0.0
    %958 = vmatpush1.xpose.msra.mxu0 0.0
    %959 = vmatprep.subr.mxu0 0.0
    %960 = vmatpush1.xpose.msra.mxu0 0.0
    %961 = vmatprep.subr.mxu0 0.0
    %962 = vmatpush1.xpose.msra.mxu0 0.0
    %963 = vmatprep.subr.mxu0 0.0
    %964 = vmatpush1.xpose.msra.mxu0 0.0
    %965 = vmatprep.subr.mxu0 0.0
    %966 = vmatpush1.xpose.msra.mxu0 0.0
    %967 = vmatprep.subr.mxu0 0.0
    %968 = vmatpush1.xpose.msra.mxu0 0.0
    %969 = vmatprep.subr.mxu0 0.0
    %970 = vmatpush1.xpose.msra.mxu0 0.0
    %971 = vmatprep.mubr.f32.mxu0 0.0
    %972 = vmatmul.mubr.f32.gmra.mrb[0].mxu0 %v878
    %v973 = vpop.f32.mrb[0].mxu0
    %v974 = vadd.f32 0.0, %v973
    %v975 = vpop.f32.mrb[0].mxu0
    %976 = vmatprep.mubr.f32.mxu0 0.0
    %977 = vmatmul.mubr.f32.gmra.mrb[0].mxu0 %v881
    %v978 = vpop.f32.mrb[0].mxu0
    %v979 = vadd.f32 0.0, %v978
    %v980 = vpop.f32.mrb[0].mxu0
    %981 = vmatprep.mubr.f32.mxu0 0.0
    %982 = vmatmul.mubr.f32.gmra.mrb[0].mxu0 %v884
    %v983 = vpop.f32.mrb[0].mxu0
    %v984 = vadd.f32 0.0, %v983
    %v985 = vpop.f32.mrb[0].mxu0
    %986 = vmatprep.mubr.f32.mxu0 0.0
    %987 = vmatmul.mubr.f32.gmra.mrb[0].mxu0 %v887
    %v988 = vpop.f32.mrb[0].mxu0
    %v989 = vadd.f32 0.0, %v988
    %v990 = vpop.f32.mrb[0].mxu0
    %991 = vmatprep.mubr.f32.mxu0 0.0
    %992 = vmatmul.mubr.f32.gmra.mrb[0].mxu0 %v890
    %v993 = vpop.f32.mrb[0].mxu0
    %v994 = vadd.f32 0.0, %v993
    %v995 = vpop.f32.mrb[0].mxu0
    %996 = vdwg.mxu0
    %v998 = vsel %vm396, %v181, 0
    %v1001 = vsel %vm396, %v182, 0
    %v1004 = vsel %vm396, %v183, 0
    %v1007 = vsel %vm396, %v184, 0
    %v1010 = vsel %vm396, %v185, 0
    %v1013 = vsel %vm396, %v261, 0
    %v1016 = vsel %vm396, %v262, 0
    %v1019 = vsel %vm396, %v263, 0
    %v1022 = vsel %vm396, %v264, 0
    %v1025 = vsel %vm396, %v265, 0
    %1027 = vmatprep.subr.mxu0 0.0
    %1028 = vmatpush1.xpose.msra.mxu0 %v1013
    %1029 = vmatprep.subr.mxu0 0.0
    %1030 = vmatpush1.xpose.msra.mxu0 %v1016
    %1031 = vmatprep.subr.mxu0 0.0
    %1032 = vmatpush1.xpose.msra.mxu0 %v1019
    %1033 = vmatprep.subr.mxu0 0.0
    %1034 = vmatpush1.xpose.msra.mxu0 %v1022
    %1035 = vmatprep.subr.mxu0 0.0
    %1036 = vmatpush1.xpose.msra.mxu0 %v1025
    %1037 = vmatprep.subr.mxu0 0.0
    %1038 = vmatpush1.xpose.msra.mxu0 0.0
    %1039 = vmatprep.subr.mxu0 0.0
    %1040 = vmatpush1.xpose.msra.mxu0 0.0
    %1041 = vmatprep.subr.mxu0 0.0
    %1042 = vmatpush1.xpose.msra.mxu0 0.0
    %1043 = vmatprep.subr.mxu0 0.0
    %1044 = vmatpush1.xpose.msra.mxu0 0.0
    %1045 = vmatprep.subr.mxu0 0.0
    %1046 = vmatpush1.xpose.msra.mxu0 0.0
    %1047 = vmatprep.subr.mxu0 0.0
    %1048 = vmatpush1.xpose.msra.mxu0 0.0
    %1049 = vmatprep.subr.mxu0 0.0
    %1050 = vmatpush1.xpose.msra.mxu0 0.0
    %1051 = vmatprep.subr.mxu0 0.0
    %1052 = vmatpush1.xpose.msra.mxu0 0.0
    %1053 = vmatprep.subr.mxu0 0.0
    %1054 = vmatpush1.xpose.msra.mxu0 0.0
    %1055 = vmatprep.subr.mxu0 0.0
    %1056 = vmatpush1.xpose.msra.mxu0 0.0
    %1057 = vmatprep.subr.mxu0 0.0
    %1058 = vmatpush1.xpose.msra.mxu0 0.0
    %1059 = vmatprep.subr.mxu0 0.0
    %1060 = vmatpush1.xpose.msra.mxu0 0.0
    %1061 = vmatprep.subr.mxu0 0.0
    %1062 = vmatpush1.xpose.msra.mxu0 0.0
    %1063 = vmatprep.subr.mxu0 0.0
    %1064 = vmatpush1.xpose.msra.mxu0 0.0
    %1065 = vmatprep.subr.mxu0 0.0
    %1066 = vmatpush1.xpose.msra.mxu0 0.0
    %1067 = vmatprep.subr.mxu0 0.0
    %1068 = vmatpush1.xpose.msra.mxu0 0.0
    %1069 = vmatprep.subr.mxu0 0.0
    %1070 = vmatpush1.xpose.msra.mxu0 0.0
    %1071 = vmatprep.subr.mxu0 0.0
    %1072 = vmatpush1.xpose.msra.mxu0 0.0
    %1073 = vmatprep.subr.mxu0 0.0
    %1074 = vmatpush1.xpose.msra.mxu0 0.0
    %1075 = vmatprep.subr.mxu0 0.0
    %1076 = vmatpush1.xpose.msra.mxu0 0.0
    %1077 = vmatprep.subr.mxu0 0.0
    %1078 = vmatpush1.xpose.msra.mxu0 0.0
    %1079 = vmatprep.subr.mxu0 0.0
    %1080 = vmatpush1.xpose.msra.mxu0 0.0
    %1081 = vmatprep.subr.mxu0 0.0
    %1082 = vmatpush1.xpose.msra.mxu0 0.0
    %1083 = vmatprep.subr.mxu0 0.0
    %1084 = vmatpush1.xpose.msra.mxu0 0.0
    %1085 = vmatprep.subr.mxu0 0.0
    %1086 = vmatpush1.xpose.msra.mxu0 0.0
    %1087 = vmatprep.subr.mxu0 0.0
    %1088 = vmatpush1.xpose.msra.mxu0 0.0
    %1089 = vmatprep.subr.mxu0 0.0
    %1090 = vmatpush1.xpose.msra.mxu0 0.0
    %1091 = vmatprep.mubr.f32.mxu0 0.0
    %1092 = vmatmul.mubr.f32.gmra.mrb[0].mxu0 %v998
    %v1093 = vpop.f32.mrb[0].mxu0
    %v1094 = vadd.f32 0.0, %v1093
    %v1095 = vpop.f32.mrb[0].mxu0
    %1096 = vmatprep.mubr.f32.mxu0 0.0
    %1097 = vmatmul.mubr.f32.gmra.mrb[0].mxu0 %v1001
    %v1098 = vpop.f32.mrb[0].mxu0
    %v1099 = vadd.f32 0.0, %v1098
    %v1100 = vpop.f32.mrb[0].mxu0
    %1101 = vmatprep.mubr.f32.mxu0 0.0
    %1102 = vmatmul.mubr.f32.gmra.mrb[0].mxu0 %v1004
    %v1103 = vpop.f32.mrb[0].mxu0
    %v1104 = vadd.f32 0.0, %v1103
    %v1105 = vpop.f32.mrb[0].mxu0
    %1106 = vmatprep.mubr.f32.mxu0 0.0
    %1107 = vmatmul.mubr.f32.gmra.mrb[0].mxu0 %v1007
    %v1108 = vpop.f32.mrb[0].mxu0
    %v1109 = vadd.f32 0.0, %v1108
    %v1110 = vpop.f32.mrb[0].mxu0
    %1111 = vmatprep.mubr.f32.mxu0 0.0
    %1112 = vmatmul.mubr.f32.gmra.mrb[0].mxu0 %v1010
    %v1113 = vpop.f32.mrb[0].mxu0
    %v1114 = vadd.f32 0.0, %v1113
    %v1115 = vpop.f32.mrb[0].mxu0
    %1116 = vdwg.mxu0
    %v1118 = vsel %vm396, %v186, 0
    %v1121 = vsel %vm396, %v187, 0
    %v1124 = vsel %vm396, %v188, 0
    %v1127 = vsel %vm396, %v189, 0
    %v1130 = vsel %vm396, %v190, 0
    %v1133 = vsel %vm396, %v266, 0
    %v1136 = vsel %vm396, %v267, 0
    %v1139 = vsel %vm396, %v268, 0
    %v1142 = vsel %vm396, %v269, 0
    %v1145 = vsel %vm396, %v270, 0
    %1147 = vmatprep.subr.mxu0 0.0
    %1148 = vmatpush1.xpose.msra.mxu0 %v1133
    %1149 = vmatprep.subr.mxu0 0.0
    %1150 = vmatpush1.xpose.msra.mxu0 %v1136
    %1151 = vmatprep.subr.mxu0 0.0
    %1152 = vmatpush1.xpose.msra.mxu0 %v1139
    %1153 = vmatprep.subr.mxu0 0.0
    %1154 = vmatpush1.xpose.msra.mxu0 %v1142
    %1155 = vmatprep.subr.mxu0 0.0
    %1156 = vmatpush1.xpose.msra.mxu0 %v1145
    %1157 = vmatprep.subr.mxu0 0.0
    %1158 = vmatpush1.xpose.msra.mxu0 0.0
    %1159 = vmatprep.subr.mxu0 0.0
    %1160 = vmatpush1.xpose.msra.mxu0 0.0
    %1161 = vmatprep.subr.mxu0 0.0
    %1162 = vmatpush1.xpose.msra.mxu0 0.0
    %1163 = vmatprep.subr.mxu0 0.0
    %1164 = vmatpush1.xpose.msra.mxu0 0.0
    %1165 = vmatprep.subr.mxu0 0.0
    %1166 = vmatpush1.xpose.msra.mxu0 0.0
    %1167 = vmatprep.subr.mxu0 0.0
    %1168 = vmatpush1.xpose.msra.mxu0 0.0
    %1169 = vmatprep.subr.mxu0 0.0
    %1170 = vmatpush1.xpose.msra.mxu0 0.0
    %1171 = vmatprep.subr.mxu0 0.0
    %1172 = vmatpush1.xpose.msra.mxu0 0.0
    %1173 = vmatprep.subr.mxu0 0.0
    %1174 = vmatpush1.xpose.msra.mxu0 0.0
    %1175 = vmatprep.subr.mxu0 0.0
    %1176 = vmatpush1.xpose.msra.mxu0 0.0
    %1177 = vmatprep.subr.mxu0 0.0
    %1178 = vmatpush1.xpose.msra.mxu0 0.0
    %1179 = vmatprep.subr.mxu0 0.0
    %1180 = vmatpush1.xpose.msra.mxu0 0.0
    %1181 = vmatprep.subr.mxu0 0.0
    %1182 = vmatpush1.xpose.msra.mxu0 0.0
    %1183 = vmatprep.subr.mxu0 0.0
    %1184 = vmatpush1.xpose.msra.mxu0 0.0
    %1185 = vmatprep.subr.mxu0 0.0
    %1186 = vmatpush1.xpose.msra.mxu0 0.0
    %1187 = vmatprep.subr.mxu0 0.0
    %1188 = vmatpush1.xpose.msra.mxu0 0.0
    %1189 = vmatprep.subr.mxu0 0.0
    %1190 = vmatpush1.xpose.msra.mxu0 0.0
    %1191 = vmatprep.subr.mxu0 0.0
    %1192 = vmatpush1.xpose.msra.mxu0 0.0
    %1193 = vmatprep.subr.mxu0 0.0
    %1194 = vmatpush1.xpose.msra.mxu0 0.0
    %1195 = vmatprep.subr.mxu0 0.0
    %1196 = vmatpush1.xpose.msra.mxu0 0.0
    %1197 = vmatprep.subr.mxu0 0.0
    %1198 = vmatpush1.xpose.msra.mxu0 0.0
    %1199 = vmatprep.subr.mxu0 0.0
    %1200 = vmatpush1.xpose.msra.mxu0 0.0
    %1201 = vmatprep.subr.mxu0 0.0
    %1202 = vmatpush1.xpose.msra.mxu0 0.0
    %1203 = vmatprep.subr.mxu0 0.0
    %1204 = vmatpush1.xpose.msra.mxu0 0.0
    %1205 = vmatprep.subr.mxu0 0.0
    %1206 = vmatpush1.xpose.msra.mxu0 0.0
    %1207 = vmatprep.subr.mxu0 0.0
    %1208 = vmatpush1.xpose.msra.mxu0 0.0
    %1209 = vmatprep.subr.mxu0 0.0
    %1210 = vmatpush1.xpose.msra.mxu0 0.0
    %1211 = vmatprep.mubr.f32.mxu0 0.0
    %1212 = vmatmul.mubr.f32.gmra.mrb[0].mxu0 %v1118
    %v1213 = vpop.f32.mrb[0].mxu0
    %v1214 = vadd.f32 0.0, %v1213
    %v1215 = vpop.f32.mrb[0].mxu0
    %1216 = vmatprep.mubr.f32.mxu0 0.0
    %1217 = vmatmul.mubr.f32.gmra.mrb[0].mxu0 %v1121
    %v1218 = vpop.f32.mrb[0].mxu0
    %v1219 = vadd.f32 0.0, %v1218
    %v1220 = vpop.f32.mrb[0].mxu0
    %1221 = vmatprep.mubr.f32.mxu0 0.0
    %1222 = vmatmul.mubr.f32.gmra.mrb[0].mxu0 %v1124
    %v1223 = vpop.f32.mrb[0].mxu0
    %v1224 = vadd.f32 0.0, %v1223
    %v1225 = vpop.f32.mrb[0].mxu0
    %1226 = vmatprep.mubr.f32.mxu0 0.0
    %1227 = vmatmul.mubr.f32.gmra.mrb[0].mxu0 %v1127
    %v1228 = vpop.f32.mrb[0].mxu0
    %v1229 = vadd.f32 0.0, %v1228
    %v1230 = vpop.f32.mrb[0].mxu0
    %1231 = vmatprep.mubr.f32.mxu0 0.0
    %1232 = vmatmul.mubr.f32.gmra.mrb[0].mxu0 %v1130
    %v1233 = vpop.f32.mrb[0].mxu0
    %v1234 = vadd.f32 0.0, %v1233
    %v1235 = vpop.f32.mrb[0].mxu0
    %1236 = vdwg.mxu0
    %v1238 = vsel %vm396, %v191, 0
    %v1241 = vsel %vm396, %v192, 0
    %v1244 = vsel %vm396, %v193, 0
    %v1247 = vsel %vm396, %v194, 0
    %v1250 = vsel %vm396, %v195, 0
    %v1253 = vsel %vm396, %v271, 0
    %v1256 = vsel %vm396, %v272, 0
    %v1259 = vsel %vm396, %v273, 0
    %v1262 = vsel %vm396, %v274, 0
    %v1265 = vsel %vm396, %v275, 0
    %1267 = vmatprep.subr.mxu0 0.0
    %1268 = vmatpush1.xpose.msra.mxu0 %v1253
    %1269 = vmatprep.subr.mxu0 0.0
    %1270 = vmatpush1.xpose.msra.mxu0 %v1256
    %1271 = vmatprep.subr.mxu0 0.0
    %1272 = vmatpush1.xpose.msra.mxu0 %v1259
    %1273 = vmatprep.subr.mxu0 0.0
    %1274 = vmatpush1.xpose.msra.mxu0 %v1262
    %1275 = vmatprep.subr.mxu0 0.0
    %1276 = vmatpush1.xpose.msra.mxu0 %v1265
    %1277 = vmatprep.subr.mxu0 0.0
    %1278 = vmatpush1.xpose.msra.mxu0 0.0
    %1279 = vmatprep.subr.mxu0 0.0
    %1280 = vmatpush1.xpose.msra.mxu0 0.0
    %1281 = vmatprep.subr.mxu0 0.0
    %1282 = vmatpush1.xpose.msra.mxu0 0.0
    %1283 = vmatprep.subr.mxu0 0.0
    %1284 = vmatpush1.xpose.msra.mxu0 0.0
    %1285 = vmatprep.subr.mxu0 0.0
    %1286 = vmatpush1.xpose.msra.mxu0 0.0
    %1287 = vmatprep.subr.mxu0 0.0
    %1288 = vmatpush1.xpose.msra.mxu0 0.0
    %1289 = vmatprep.subr.mxu0 0.0
    %1290 = vmatpush1.xpose.msra.mxu0 0.0
    %1291 = vmatprep.subr.mxu0 0.0
    %1292 = vmatpush1.xpose.msra.mxu0 0.0
    %1293 = vmatprep.subr.mxu0 0.0
    %1294 = vmatpush1.xpose.msra.mxu0 0.0
    %1295 = vmatprep.subr.mxu0 0.0
    %1296 = vmatpush1.xpose.msra.mxu0 0.0
    %1297 = vmatprep.subr.mxu0 0.0
    %1298 = vmatpush1.xpose.msra.mxu0 0.0
    %1299 = vmatprep.subr.mxu0 0.0
    %1300 = vmatpush1.xpose.msra.mxu0 0.0
    %1301 = vmatprep.subr.mxu0 0.0
    %1302 = vmatpush1.xpose.msra.mxu0 0.0
    %1303 = vmatprep.subr.mxu0 0.0
    %1304 = vmatpush1.xpose.msra.mxu0 0.0
    %1305 = vmatprep.subr.mxu0 0.0
    %1306 = vmatpush1.xpose.msra.mxu0 0.0
    %1307 = vmatprep.subr.mxu0 0.0
    %1308 = vmatpush1.xpose.msra.mxu0 0.0
    %1309 = vmatprep.subr.mxu0 0.0
    %1310 = vmatpush1.xpose.msra.mxu0 0.0
    %1311 = vmatprep.subr.mxu0 0.0
    %1312 = vmatpush1.xpose.msra.mxu0 0.0
    %1313 = vmatprep.subr.mxu0 0.0
    %1314 = vmatpush1.xpose.msra.mxu0 0.0
    %1315 = vmatprep.subr.mxu0 0.0
    %1316 = vmatpush1.xpose.msra.mxu0 0.0
    %1317 = vmatprep.subr.mxu0 0.0
    %1318 = vmatpush1.xpose.msra.mxu0 0.0
    %1319 = vmatprep.subr.mxu0 0.0
    %1320 = vmatpush1.xpose.msra.mxu0 0.0
    %1321 = vmatprep.subr.mxu0 0.0
    %1322 = vmatpush1.xpose.msra.mxu0 0.0
    %1323 = vmatprep.subr.mxu0 0.0
    %1324 = vmatpush1.xpose.msra.mxu0 0.0
    %1325 = vmatprep.subr.mxu0 0.0
    %1326 = vmatpush1.xpose.msra.mxu0 0.0
    %1327 = vmatprep.subr.mxu0 0.0
    %1328 = vmatpush1.xpose.msra.mxu0 0.0
    %1329 = vmatprep.subr.mxu0 0.0
    %1330 = vmatpush1.xpose.msra.mxu0 0.0
    %1331 = vmatprep.mubr.f32.mxu0 0.0
    %1332 = vmatmul.mubr.f32.gmra.mrb[0].mxu0 %v1238
    %v1333 = vpop.f32.mrb[0].mxu0
    %v1334 = vadd.f32 0.0, %v1333
    %v1335 = vpop.f32.mrb[0].mxu0
    %1336 = vmatprep.mubr.f32.mxu0 0.0
    %1337 = vmatmul.mubr.f32.gmra.mrb[0].mxu0 %v1241
    %v1338 = vpop.f32.mrb[0].mxu0
    %v1339 = vadd.f32 0.0, %v1338
    %v1340 = vpop.f32.mrb[0].mxu0
    %1341 = vmatprep.mubr.f32.mxu0 0.0
    %1342 = vmatmul.mubr.f32.gmra.mrb[0].mxu0 %v1244
    %v1343 = vpop.f32.mrb[0].mxu0
    %v1344 = vadd.f32 0.0, %v1343
    %v1345 = vpop.f32.mrb[0].mxu0
    %1346 = vmatprep.mubr.f32.mxu0 0.0
    %1347 = vmatmul.mubr.f32.gmra.mrb[0].mxu0 %v1247
    %v1348 = vpop.f32.mrb[0].mxu0
    %v1349 = vadd.f32 0.0, %v1348
    %v1350 = vpop.f32.mrb[0].mxu0
    %1351 = vmatprep.mubr.f32.mxu0 0.0
    %1352 = vmatmul.mubr.f32.gmra.mrb[0].mxu0 %v1250
    %v1353 = vpop.f32.mrb[0].mxu0
    %v1354 = vadd.f32 0.0, %v1353
    %v1355 = vpop.f32.mrb[0].mxu0
    %1356 = vdwg.mxu0
    %v1358 = vsel %vm396, %v196, 0
    %v1361 = vsel %vm396, %v197, 0
    %v1364 = vsel %vm396, %v198, 0
    %v1367 = vsel %vm396, %v199, 0
    %v1370 = vsel %vm396, %v200, 0
    %v1373 = vsel %vm396, %v276, 0
    %v1376 = vsel %vm396, %v277, 0
    %v1379 = vsel %vm396, %v278, 0
    %v1382 = vsel %vm396, %v279, 0
    %v1385 = vsel %vm396, %v280, 0
    %1387 = vmatprep.subr.mxu0 0.0
    %1388 = vmatpush1.xpose.msra.mxu0 %v1373
    %1389 = vmatprep.subr.mxu0 0.0
    %1390 = vmatpush1.xpose.msra.mxu0 %v1376
    %1391 = vmatprep.subr.mxu0 0.0
    %1392 = vmatpush1.xpose.msra.mxu0 %v1379
    %1393 = vmatprep.subr.mxu0 0.0
    %1394 = vmatpush1.xpose.msra.mxu0 %v1382
    %1395 = vmatprep.subr.mxu0 0.0
    %1396 = vmatpush1.xpose.msra.mxu0 %v1385
    %1397 = vmatprep.subr.mxu0 0.0
    %1398 = vmatpush1.xpose.msra.mxu0 0.0
    %1399 = vmatprep.subr.mxu0 0.0
    %1400 = vmatpush1.xpose.msra.mxu0 0.0
    %1401 = vmatprep.subr.mxu0 0.0
    %1402 = vmatpush1.xpose.msra.mxu0 0.0
    %1403 = vmatprep.subr.mxu0 0.0
    %1404 = vmatpush1.xpose.msra.mxu0 0.0
    %1405 = vmatprep.subr.mxu0 0.0
    %1406 = vmatpush1.xpose.msra.mxu0 0.0
    %1407 = vmatprep.subr.mxu0 0.0
    %1408 = vmatpush1.xpose.msra.mxu0 0.0
    %1409 = vmatprep.subr.mxu0 0.0
    %1410 = vmatpush1.xpose.msra.mxu0 0.0
    %1411 = vmatprep.subr.mxu0 0.0
    %1412 = vmatpush1.xpose.msra.mxu0 0.0
    %1413 = vmatprep.subr.mxu0 0.0
    %1414 = vmatpush1.xpose.msra.mxu0 0.0
    %1415 = vmatprep.subr.mxu0 0.0
    %1416 = vmatpush1.xpose.msra.mxu0 0.0
    %1417 = vmatprep.subr.mxu0 0.0
    %1418 = vmatpush1.xpose.msra.mxu0 0.0
    %1419 = vmatprep.subr.mxu0 0.0
    %1420 = vmatpush1.xpose.msra.mxu0 0.0
    %1421 = vmatprep.subr.mxu0 0.0
    %1422 = vmatpush1.xpose.msra.mxu0 0.0
    %1423 = vmatprep.subr.mxu0 0.0
    %1424 = vmatpush1.xpose.msra.mxu0 0.0
    %1425 = vmatprep.subr.mxu0 0.0
    %1426 = vmatpush1.xpose.msra.mxu0 0.0
    %1427 = vmatprep.subr.mxu0 0.0
    %1428 = vmatpush1.xpose.msra.mxu0 0.0
    %1429 = vmatprep.subr.mxu0 0.0
    %1430 = vmatpush1.xpose.msra.mxu0 0.0
    %1431 = vmatprep.subr.mxu0 0.0
    %1432 = vmatpush1.xpose.msra.mxu0 0.0
    %1433 = vmatprep.subr.mxu0 0.0
    %1434 = vmatpush1.xpose.msra.mxu0 0.0
    %1435 = vmatprep.subr.mxu0 0.0
    %1436 = vmatpush1.xpose.msra.mxu0 0.0
    %1437 = vmatprep.subr.mxu0 0.0
    %1438 = vmatpush1.xpose.msra.mxu0 0.0
    %1439 = vmatprep.subr.mxu0 0.0
    %1440 = vmatpush1.xpose.msra.mxu0 0.0
    %1441 = vmatprep.subr.mxu0 0.0
    %1442 = vmatpush1.xpose.msra.mxu0 0.0
    %1443 = vmatprep.subr.mxu0 0.0
    %1444 = vmatpush1.xpose.msra.mxu0 0.0
    %1445 = vmatprep.subr.mxu0 0.0
    %1446 = vmatpush1.xpose.msra.mxu0 0.0
    %1447 = vmatprep.subr.mxu0 0.0
    %1448 = vmatpush1.xpose.msra.mxu0 0.0
    %1449 = vmatprep.subr.mxu0 0.0
    %1450 = vmatpush1.xpose.msra.mxu0 0.0
    %1451 = vmatprep.mubr.f32.mxu0 0.0
    %1452 = vmatmul.mubr.f32.gmra.mrb[0].mxu0 %v1358
    %v1453 = vpop.f32.mrb[0].mxu0
    %v1454 = vadd.f32 0.0, %v1453
    %v1455 = vpop.f32.mrb[0].mxu0
    %1456 = vmatprep.mubr.f32.mxu0 0.0
    %1457 = vmatmul.mubr.f32.gmra.mrb[0].mxu0 %v1361
    %v1458 = vpop.f32.mrb[0].mxu0
    %v1459 = vadd.f32 0.0, %v1458
    %v1460 = vpop.f32.mrb[0].mxu0
    %1461 = vmatprep.mubr.f32.mxu0 0.0
    %1462 = vmatmul.mubr.f32.gmra.mrb[0].mxu0 %v1364
    %v1463 = vpop.f32.mrb[0].mxu0
    %v1464 = vadd.f32 0.0, %v1463
    %v1465 = vpop.f32.mrb[0].mxu0
    %1466 = vmatprep.mubr.f32.mxu0 0.0
    %1467 = vmatmul.mubr.f32.gmra.mrb[0].mxu0 %v1367
    %v1468 = vpop.f32.mrb[0].mxu0
    %v1469 = vadd.f32 0.0, %v1468
    %v1470 = vpop.f32.mrb[0].mxu0
    %1471 = vmatprep.mubr.f32.mxu0 0.0
    %1472 = vmatmul.mubr.f32.gmra.mrb[0].mxu0 %v1370
    %v1473 = vpop.f32.mrb[0].mxu0
    %v1474 = vadd.f32 0.0, %v1473
    %v1475 = vpop.f32.mrb[0].mxu0
    %1476 = vdwg.mxu0
    %v1478 = vsel %vm396, %v201, 0
    %v1481 = vsel %vm396, %v202, 0
    %v1484 = vsel %vm396, %v203, 0
    %v1487 = vsel %vm396, %v204, 0
    %v1490 = vsel %vm396, %v205, 0
    %v1493 = vsel %vm396, %v281, 0
    %v1496 = vsel %vm396, %v282, 0
    %v1499 = vsel %vm396, %v283, 0
    %v1502 = vsel %vm396, %v284, 0
    %v1505 = vsel %vm396, %v285, 0
    %1507 = vmatprep.subr.mxu0 0.0
    %1508 = vmatpush1.xpose.msra.mxu0 %v1493
    %1509 = vmatprep.subr.mxu0 0.0
    %1510 = vmatpush1.xpose.msra.mxu0 %v1496
    %1511 = vmatprep.subr.mxu0 0.0
    %1512 = vmatpush1.xpose.msra.mxu0 %v1499
    %1513 = vmatprep.subr.mxu0 0.0
    %1514 = vmatpush1.xpose.msra.mxu0 %v1502
    %1515 = vmatprep.subr.mxu0 0.0
    %1516 = vmatpush1.xpose.msra.mxu0 %v1505
    %1517 = vmatprep.subr.mxu0 0.0
    %1518 = vmatpush1.xpose.msra.mxu0 0.0
    %1519 = vmatprep.subr.mxu0 0.0
    %1520 = vmatpush1.xpose.msra.mxu0 0.0
    %1521 = vmatprep.subr.mxu0 0.0
    %1522 = vmatpush1.xpose.msra.mxu0 0.0
    %1523 = vmatprep.subr.mxu0 0.0
    %1524 = vmatpush1.xpose.msra.mxu0 0.0
    %1525 = vmatprep.subr.mxu0 0.0
    %1526 = vmatpush1.xpose.msra.mxu0 0.0
    %1527 = vmatprep.subr.mxu0 0.0
    %1528 = vmatpush1.xpose.msra.mxu0 0.0
    %1529 = vmatprep.subr.mxu0 0.0
    %1530 = vmatpush1.xpose.msra.mxu0 0.0
    %1531 = vmatprep.subr.mxu0 0.0
    %1532 = vmatpush1.xpose.msra.mxu0 0.0
    %1533 = vmatprep.subr.mxu0 0.0
    %1534 = vmatpush1.xpose.msra.mxu0 0.0
    %1535 = vmatprep.subr.mxu0 0.0
    %1536 = vmatpush1.xpose.msra.mxu0 0.0
    %1537 = vmatprep.subr.mxu0 0.0
    %1538 = vmatpush1.xpose.msra.mxu0 0.0
    %1539 = vmatprep.subr.mxu0 0.0
    %1540 = vmatpush1.xpose.msra.mxu0 0.0
    %1541 = vmatprep.subr.mxu0 0.0
    %1542 = vmatpush1.xpose.msra.mxu0 0.0
    %1543 = vmatprep.subr.mxu0 0.0
    %1544 = vmatpush1.xpose.msra.mxu0 0.0
    %1545 = vmatprep.subr.mxu0 0.0
    %1546 = vmatpush1.xpose.msra.mxu0 0.0
    %1547 = vmatprep.subr.mxu0 0.0
    %1548 = vmatpush1.xpose.msra.mxu0 0.0
    %1549 = vmatprep.subr.mxu0 0.0
    %1550 = vmatpush1.xpose.msra.mxu0 0.0
    %1551 = vmatprep.subr.mxu0 0.0
    %1552 = vmatpush1.xpose.msra.mxu0 0.0
    %1553 = vmatprep.subr.mxu0 0.0
    %1554 = vmatpush1.xpose.msra.mxu0 0.0
    %1555 = vmatprep.subr.mxu0 0.0
    %1556 = vmatpush1.xpose.msra.mxu0 0.0
    %1557 = vmatprep.subr.mxu0 0.0
    %1558 = vmatpush1.xpose.msra.mxu0 0.0
    %1559 = vmatprep.subr.mxu0 0.0
    %1560 = vmatpush1.xpose.msra.mxu0 0.0
    %1561 = vmatprep.subr.mxu0 0.0
    %1562 = vmatpush1.xpose.msra.mxu0 0.0
    %1563 = vmatprep.subr.mxu0 0.0
    %1564 = vmatpush1.xpose.msra.mxu0 0.0
    %1565 = vmatprep.subr.mxu0 0.0
    %1566 = vmatpush1.xpose.msra.mxu0 0.0
    %1567 = vmatprep.subr.mxu0 0.0
    %1568 = vmatpush1.xpose.msra.mxu0 0.0
    %1569 = vmatprep.subr.mxu0 0.0
    %1570 = vmatpush1.xpose.msra.mxu0 0.0
    %1571 = vmatprep.mubr.f32.mxu0 0.0
    %1572 = vmatmul.mubr.f32.gmra.mrb[0].mxu0 %v1478
    %v1573 = vpop.f32.mrb[0].mxu0
    %v1574 = vadd.f32 0.0, %v1573
    %v1575 = vpop.f32.mrb[0].mxu0
    %1576 = vmatprep.mubr.f32.mxu0 0.0
    %1577 = vmatmul.mubr.f32.gmra.mrb[0].mxu0 %v1481
    %v1578 = vpop.f32.mrb[0].mxu0
    %v1579 = vadd.f32 0.0, %v1578
    %v1580 = vpop.f32.mrb[0].mxu0
    %1581 = vmatprep.mubr.f32.mxu0 0.0
    %1582 = vmatmul.mubr.f32.gmra.mrb[0].mxu0 %v1484
    %v1583 = vpop.f32.mrb[0].mxu0
    %v1584 = vadd.f32 0.0, %v1583
    %v1585 = vpop.f32.mrb[0].mxu0
    %1586 = vmatprep.mubr.f32.mxu0 0.0
    %1587 = vmatmul.mubr.f32.gmra.mrb[0].mxu0 %v1487
    %v1588 = vpop.f32.mrb[0].mxu0
    %v1589 = vadd.f32 0.0, %v1588
    %v1590 = vpop.f32.mrb[0].mxu0
    %1591 = vmatprep.mubr.f32.mxu0 0.0
    %1592 = vmatmul.mubr.f32.gmra.mrb[0].mxu0 %v1490
    %v1593 = vpop.f32.mrb[0].mxu0
    %v1594 = vadd.f32 0.0, %v1593
    %v1595 = vpop.f32.mrb[0].mxu0
    %1596 = vdwg.mxu0
    %v1598 = vsel %vm396, %v206, 0
    %v1601 = vsel %vm396, %v207, 0
    %v1604 = vsel %vm396, %v208, 0
    %v1607 = vsel %vm396, %v209, 0
    %v1610 = vsel %vm396, %v210, 0
    %v1613 = vsel %vm396, %v286, 0
    %v1616 = vsel %vm396, %v287, 0
    %v1619 = vsel %vm396, %v288, 0
    %v1622 = vsel %vm396, %v289, 0
    %v1625 = vsel %vm396, %v290, 0
    %1627 = vmatprep.subr.mxu0 0.0
    %1628 = vmatpush1.xpose.msra.mxu0 %v1613
    %1629 = vmatprep.subr.mxu0 0.0
    %1630 = vmatpush1.xpose.msra.mxu0 %v1616
    %1631 = vmatprep.subr.mxu0 0.0
    %1632 = vmatpush1.xpose.msra.mxu0 %v1619
    %1633 = vmatprep.subr.mxu0 0.0
    %1634 = vmatpush1.xpose.msra.mxu0 %v1622
    %1635 = vmatprep.subr.mxu0 0.0
    %1636 = vmatpush1.xpose.msra.mxu0 %v1625
    %1637 = vmatprep.subr.mxu0 0.0
    %1638 = vmatpush1.xpose.msra.mxu0 0.0
    %1639 = vmatprep.subr.mxu0 0.0
    %1640 = vmatpush1.xpose.msra.mxu0 0.0
    %1641 = vmatprep.subr.mxu0 0.0
    %1642 = vmatpush1.xpose.msra.mxu0 0.0
    %1643 = vmatprep.subr.mxu0 0.0
    %1644 = vmatpush1.xpose.msra.mxu0 0.0
    %1645 = vmatprep.subr.mxu0 0.0
    %1646 = vmatpush1.xpose.msra.mxu0 0.0
    %1647 = vmatprep.subr.mxu0 0.0
    %1648 = vmatpush1.xpose.msra.mxu0 0.0
    %1649 = vmatprep.subr.mxu0 0.0
    %1650 = vmatpush1.xpose.msra.mxu0 0.0
    %1651 = vmatprep.subr.mxu0 0.0
    %1652 = vmatpush1.xpose.msra.mxu0 0.0
    %1653 = vmatprep.subr.mxu0 0.0
    %1654 = vmatpush1.xpose.msra.mxu0 0.0
    %1655 = vmatprep.subr.mxu0 0.0
    %1656 = vmatpush1.xpose.msra.mxu0 0.0
    %1657 = vmatprep.subr.mxu0 0.0
    %1658 = vmatpush1.xpose.msra.mxu0 0.0
    %1659 = vmatprep.subr.mxu0 0.0
    %1660 = vmatpush1.xpose.msra.mxu0 0.0
    %1661 = vmatprep.subr.mxu0 0.0
    %1662 = vmatpush1.xpose.msra.mxu0 0.0
    %1663 = vmatprep.subr.mxu0 0.0
    %1664 = vmatpush1.xpose.msra.mxu0 0.0
    %1665 = vmatprep.subr.mxu0 0.0
    %1666 = vmatpush1.xpose.msra.mxu0 0.0
    %1667 = vmatprep.subr.mxu0 0.0
    %1668 = vmatpush1.xpose.msra.mxu0 0.0
    %1669 = vmatprep.subr.mxu0 0.0
    %1670 = vmatpush1.xpose.msra.mxu0 0.0
    %1671 = vmatprep.subr.mxu0 0.0
    %1672 = vmatpush1.xpose.msra.mxu0 0.0
    %1673 = vmatprep.subr.mxu0 0.0
    %1674 = vmatpush1.xpose.msra.mxu0 0.0
    %1675 = vmatprep.subr.mxu0 0.0
    %1676 = vmatpush1.xpose.msra.mxu0 0.0
    %1677 = vmatprep.subr.mxu0 0.0
    %1678 = vmatpush1.xpose.msra.mxu0 0.0
    %1679 = vmatprep.subr.mxu0 0.0
    %1680 = vmatpush1.xpose.msra.mxu0 0.0
    %1681 = vmatprep.subr.mxu0 0.0
    %1682 = vmatpush1.xpose.msra.mxu0 0.0
    %1683 = vmatprep.subr.mxu0 0.0
    %1684 = vmatpush1.xpose.msra.mxu0 0.0
    %1685 = vmatprep.subr.mxu0 0.0
    %1686 = vmatpush1.xpose.msra.mxu0 0.0
    %1687 = vmatprep.subr.mxu0 0.0
    %1688 = vmatpush1.xpose.msra.mxu0 0.0
    %1689 = vmatprep.subr.mxu0 0.0
    %1690 = vmatpush1.xpose.msra.mxu0 0.0
    %1691 = vmatprep.mubr.f32.mxu0 0.0
    %1692 = vmatmul.mubr.f32.gmra.mrb[0].mxu0 %v1598
    %v1693 = vpop.f32.mrb[0].mxu0
    %v1694 = vadd.f32 0.0, %v1693
    %v1695 = vpop.f32.mrb[0].mxu0
    %1696 = vmatprep.mubr.f32.mxu0 0.0
    %1697 = vmatmul.mubr.f32.gmra.mrb[0].mxu0 %v1601
    %v1698 = vpop.f32.mrb[0].mxu0
    %v1699 = vadd.f32 0.0, %v1698
    %v1700 = vpop.f32.mrb[0].mxu0
    %1701 = vmatprep.mubr.f32.mxu0 0.0
    %1702 = vmatmul.mubr.f32.gmra.mrb[0].mxu0 %v1604
    %v1703 = vpop.f32.mrb[0].mxu0
    %v1704 = vadd.f32 0.0, %v1703
    %v1705 = vpop.f32.mrb[0].mxu0
    %1706 = vmatprep.mubr.f32.mxu0 0.0
    %1707 = vmatmul.mubr.f32.gmra.mrb[0].mxu0 %v1607
    %v1708 = vpop.f32.mrb[0].mxu0
    %v1709 = vadd.f32 0.0, %v1708
    %v1710 = vpop.f32.mrb[0].mxu0
    %1711 = vmatprep.mubr.f32.mxu0 0.0
    %1712 = vmatmul.mubr.f32.gmra.mrb[0].mxu0 %v1610
    %v1713 = vpop.f32.mrb[0].mxu0
    %v1714 = vadd.f32 0.0, %v1713
    %v1715 = vpop.f32.mrb[0].mxu0
    %1716 = vdwg.mxu0
    %v1718 = vsel %vm396, %v211, 0
    %v1721 = vsel %vm396, %v212, 0
    %v1724 = vsel %vm396, %v213, 0
    %v1727 = vsel %vm396, %v214, 0
    %v1730 = vsel %vm396, %v215, 0
    %v1733 = vsel %vm396, %v291, 0
    %v1736 = vsel %vm396, %v292, 0
    %v1739 = vsel %vm396, %v293, 0
    %v1742 = vsel %vm396, %v294, 0
    %v1745 = vsel %vm396, %v295, 0
    %1747 = vmatprep.subr.mxu0 0.0
    %1748 = vmatpush1.xpose.msra.mxu0 %v1733
    %1749 = vmatprep.subr.mxu0 0.0
    %1750 = vmatpush1.xpose.msra.mxu0 %v1736
    %1751 = vmatprep.subr.mxu0 0.0
    %1752 = vmatpush1.xpose.msra.mxu0 %v1739
    %1753 = vmatprep.subr.mxu0 0.0
    %1754 = vmatpush1.xpose.msra.mxu0 %v1742
    %1755 = vmatprep.subr.mxu0 0.0
    %1756 = vmatpush1.xpose.msra.mxu0 %v1745
    %1757 = vmatprep.subr.mxu0 0.0
    %1758 = vmatpush1.xpose.msra.mxu0 0.0
    %1759 = vmatprep.subr.mxu0 0.0
    %1760 = vmatpush1.xpose.msra.mxu0 0.0
    %1761 = vmatprep.subr.mxu0 0.0
    %1762 = vmatpush1.xpose.msra.mxu0 0.0
    %1763 = vmatprep.subr.mxu0 0.0
    %1764 = vmatpush1.xpose.msra.mxu0 0.0
    %1765 = vmatprep.subr.mxu0 0.0
    %1766 = vmatpush1.xpose.msra.mxu0 0.0
    %1767 = vmatprep.subr.mxu0 0.0
    %1768 = vmatpush1.xpose.msra.mxu0 0.0
    %1769 = vmatprep.subr.mxu0 0.0
    %1770 = vmatpush1.xpose.msra.mxu0 0.0
    %1771 = vmatprep.subr.mxu0 0.0
    %1772 = vmatpush1.xpose.msra.mxu0 0.0
    %1773 = vmatprep.subr.mxu0 0.0
    %1774 = vmatpush1.xpose.msra.mxu0 0.0
    %1775 = vmatprep.subr.mxu0 0.0
    %1776 = vmatpush1.xpose.msra.mxu0 0.0
    %1777 = vmatprep.subr.mxu0 0.0
    %1778 = vmatpush1.xpose.msra.mxu0 0.0
    %1779 = vmatprep.subr.mxu0 0.0
    %1780 = vmatpush1.xpose.msra.mxu0 0.0
    %1781 = vmatprep.subr.mxu0 0.0
    %1782 = vmatpush1.xpose.msra.mxu0 0.0
    %1783 = vmatprep.subr.mxu0 0.0
    %1784 = vmatpush1.xpose.msra.mxu0 0.0
    %1785 = vmatprep.subr.mxu0 0.0
    %1786 = vmatpush1.xpose.msra.mxu0 0.0
    %1787 = vmatprep.subr.mxu0 0.0
    %1788 = vmatpush1.xpose.msra.mxu0 0.0
    %1789 = vmatprep.subr.mxu0 0.0
    %1790 = vmatpush1.xpose.msra.mxu0 0.0
    %1791 = vmatprep.subr.mxu0 0.0
    %1792 = vmatpush1.xpose.msra.mxu0 0.0
    %1793 = vmatprep.subr.mxu0 0.0
    %1794 = vmatpush1.xpose.msra.mxu0 0.0
    %1795 = vmatprep.subr.mxu0 0.0
    %1796 = vmatpush1.xpose.msra.mxu0 0.0
    %1797 = vmatprep.subr.mxu0 0.0
    %1798 = vmatpush1.xpose.msra.mxu0 0.0
    %1799 = vmatprep.subr.mxu0 0.0
    %1800 = vmatpush1.xpose.msra.mxu0 0.0
    %1801 = vmatprep.subr.mxu0 0.0
    %1802 = vmatpush1.xpose.msra.mxu0 0.0
    %1803 = vmatprep.subr.mxu0 0.0
    %1804 = vmatpush1.xpose.msra.mxu0 0.0
    %1805 = vmatprep.subr.mxu0 0.0
    %1806 = vmatpush1.xpose.msra.mxu0 0.0
    %1807 = vmatprep.subr.mxu0 0.0
    %1808 = vmatpush1.xpose.msra.mxu0 0.0
    %1809 = vmatprep.subr.mxu0 0.0
    %1810 = vmatpush1.xpose.msra.mxu0 0.0
    %1811 = vmatprep.mubr.f32.mxu0 0.0
    %1812 = vmatmul.mubr.f32.gmra.mrb[0].mxu0 %v1718
    %v1813 = vpop.f32.mrb[0].mxu0
    %v1814 = vadd.f32 0.0, %v1813
    %v1815 = vpop.f32.mrb[0].mxu0
    %1816 = vmatprep.mubr.f32.mxu0 0.0
    %1817 = vmatmul.mubr.f32.gmra.mrb[0].mxu0 %v1721
    %v1818 = vpop.f32.mrb[0].mxu0
    %v1819 = vadd.f32 0.0, %v1818
    %v1820 = vpop.f32.mrb[0].mxu0
    %1821 = vmatprep.mubr.f32.mxu0 0.0
    %1822 = vmatmul.mubr.f32.gmra.mrb[0].mxu0 %v1724
    %v1823 = vpop.f32.mrb[0].mxu0
    %v1824 = vadd.f32 0.0, %v1823
    %v1825 = vpop.f32.mrb[0].mxu0
    %1826 = vmatprep.mubr.f32.mxu0 0.0
    %1827 = vmatmul.mubr.f32.gmra.mrb[0].mxu0 %v1727
    %v1828 = vpop.f32.mrb[0].mxu0
    %v1829 = vadd.f32 0.0, %v1828
    %v1830 = vpop.f32.mrb[0].mxu0
    %1831 = vmatprep.mubr.f32.mxu0 0.0
    %1832 = vmatmul.mubr.f32.gmra.mrb[0].mxu0 %v1730
    %v1833 = vpop.f32.mrb[0].mxu0
    %v1834 = vadd.f32 0.0, %v1833
    %v1835 = vpop.f32.mrb[0].mxu0
    %1836 = vdwg.mxu0
    %v1838 = vsel %vm396, %v216, 0
    %v1841 = vsel %vm396, %v217, 0
    %v1844 = vsel %vm396, %v218, 0
    %v1847 = vsel %vm396, %v219, 0
    %v1850 = vsel %vm396, %v220, 0
    %v1853 = vsel %vm396, %v296, 0
    %v1856 = vsel %vm396, %v297, 0
    %v1859 = vsel %vm396, %v298, 0
    %v1862 = vsel %vm396, %v299, 0
    %v1865 = vsel %vm396, %v300, 0
    %1867 = vmatprep.subr.mxu0 0.0
    %1868 = vmatpush1.xpose.msra.mxu0 %v1853
    %1869 = vmatprep.subr.mxu0 0.0
    %1870 = vmatpush1.xpose.msra.mxu0 %v1856
    %1871 = vmatprep.subr.mxu0 0.0
    %1872 = vmatpush1.xpose.msra.mxu0 %v1859
    %1873 = vmatprep.subr.mxu0 0.0
    %1874 = vmatpush1.xpose.msra.mxu0 %v1862
    %1875 = vmatprep.subr.mxu0 0.0
    %1876 = vmatpush1.xpose.msra.mxu0 %v1865
    %1877 = vmatprep.subr.mxu0 0.0
    %1878 = vmatpush1.xpose.msra.mxu0 0.0
    %1879 = vmatprep.subr.mxu0 0.0
    %1880 = vmatpush1.xpose.msra.mxu0 0.0
    %1881 = vmatprep.subr.mxu0 0.0
    %1882 = vmatpush1.xpose.msra.mxu0 0.0
    %1883 = vmatprep.subr.mxu0 0.0
    %1884 = vmatpush1.xpose.msra.mxu0 0.0
    %1885 = vmatprep.subr.mxu0 0.0
    %1886 = vmatpush1.xpose.msra.mxu0 0.0
    %1887 = vmatprep.subr.mxu0 0.0
    %1888 = vmatpush1.xpose.msra.mxu0 0.0
    %1889 = vmatprep.subr.mxu0 0.0
    %1890 = vmatpush1.xpose.msra.mxu0 0.0
    %1891 = vmatprep.subr.mxu0 0.0
    %1892 = vmatpush1.xpose.msra.mxu0 0.0
    %1893 = vmatprep.subr.mxu0 0.0
    %1894 = vmatpush1.xpose.msra.mxu0 0.0
    %1895 = vmatprep.subr.mxu0 0.0
    %1896 = vmatpush1.xpose.msra.mxu0 0.0
    %1897 = vmatprep.subr.mxu0 0.0
    %1898 = vmatpush1.xpose.msra.mxu0 0.0
    %1899 = vmatprep.subr.mxu0 0.0
    %1900 = vmatpush1.xpose.msra.mxu0 0.0
    %1901 = vmatprep.subr.mxu0 0.0
    %1902 = vmatpush1.xpose.msra.mxu0 0.0
    %1903 = vmatprep.subr.mxu0 0.0
    %1904 = vmatpush1.xpose.msra.mxu0 0.0
    %1905 = vmatprep.subr.mxu0 0.0
    %1906 = vmatpush1.xpose.msra.mxu0 0.0
    %1907 = vmatprep.subr.mxu0 0.0
    %1908 = vmatpush1.xpose.msra.mxu0 0.0
    %1909 = vmatprep.subr.mxu0 0.0
    %1910 = vmatpush1.xpose.msra.mxu0 0.0
    %1911 = vmatprep.subr.mxu0 0.0
    %1912 = vmatpush1.xpose.msra.mxu0 0.0
    %1913 = vmatprep.subr.mxu0 0.0
    %1914 = vmatpush1.xpose.msra.mxu0 0.0
    %1915 = vmatprep.subr.mxu0 0.0
    %1916 = vmatpush1.xpose.msra.mxu0 0.0
    %1917 = vmatprep.subr.mxu0 0.0
    %1918 = vmatpush1.xpose.msra.mxu0 0.0
    %1919 = vmatprep.subr.mxu0 0.0
    %1920 = vmatpush1.xpose.msra.mxu0 0.0
    %1921 = vmatprep.subr.mxu0 0.0
    %1922 = vmatpush1.xpose.msra.mxu0 0.0
    %1923 = vmatprep.subr.mxu0 0.0
    %1924 = vmatpush1.xpose.msra.mxu0 0.0
    %1925 = vmatprep.subr.mxu0 0.0
    %1926 = vmatpush1.xpose.msra.mxu0 0.0
    %1927 = vmatprep.subr.mxu0 0.0
    %1928 = vmatpush1.xpose.msra.mxu0 0.0
    %1929 = vmatprep.subr.mxu0 0.0
    %1930 = vmatpush1.xpose.msra.mxu0 0.0
    %1931 = vmatprep.mubr.f32.mxu0 0.0
    %1932 = vmatmul.mubr.f32.gmra.mrb[0].mxu0 %v1838
    %v1933 = vpop.f32.mrb[0].mxu0
    %v1934 = vadd.f32 0.0, %v1933
    %v1935 = vpop.f32.mrb[0].mxu0
    %1936 = vmatprep.mubr.f32.mxu0 0.0
    %1937 = vmatmul.mubr.f32.gmra.mrb[0].mxu0 %v1841
    %v1938 = vpop.f32.mrb[0].mxu0
    %v1939 = vadd.f32 0.0, %v1938
    %v1940 = vpop.f32.mrb[0].mxu0
    %1941 = vmatprep.mubr.f32.mxu0 0.0
    %1942 = vmatmul.mubr.f32.gmra.mrb[0].mxu0 %v1844
    %v1943 = vpop.f32.mrb[0].mxu0
    %v1944 = vadd.f32 0.0, %v1943
    %v1945 = vpop.f32.mrb[0].mxu0
    %1946 = vmatprep.mubr.f32.mxu0 0.0
    %1947 = vmatmul.mubr.f32.gmra.mrb[0].mxu0 %v1847
    %v1948 = vpop.f32.mrb[0].mxu0
    %v1949 = vadd.f32 0.0, %v1948
    %v1950 = vpop.f32.mrb[0].mxu0
    %1951 = vmatprep.mubr.f32.mxu0 0.0
    %1952 = vmatmul.mubr.f32.gmra.mrb[0].mxu0 %v1850
    %v1953 = vpop.f32.mrb[0].mxu0
    %v1954 = vadd.f32 0.0, %v1953
    %v1955 = vpop.f32.mrb[0].mxu0
    %1956 = vdwg.mxu0
    %v1958 = vsel %vm396, %v221, 0
    %v1961 = vsel %vm396, %v222, 0
    %v1964 = vsel %vm396, %v223, 0
    %v1967 = vsel %vm396, %v224, 0
    %v1970 = vsel %vm396, %v225, 0
    %v1973 = vsel %vm396, %v301, 0
    %v1976 = vsel %vm396, %v302, 0
    %v1979 = vsel %vm396, %v303, 0
    %v1982 = vsel %vm396, %v304, 0
    %v1985 = vsel %vm396, %v305, 0
    %1987 = vmatprep.subr.mxu0 0.0
    %1988 = vmatpush1.xpose.msra.mxu0 %v1973
    %1989 = vmatprep.subr.mxu0 0.0
    %1990 = vmatpush1.xpose.msra.mxu0 %v1976
    %1991 = vmatprep.subr.mxu0 0.0
    %1992 = vmatpush1.xpose.msra.mxu0 %v1979
    %1993 = vmatprep.subr.mxu0 0.0
    %1994 = vmatpush1.xpose.msra.mxu0 %v1982
    %1995 = vmatprep.subr.mxu0 0.0
    %1996 = vmatpush1.xpose.msra.mxu0 %v1985
    %1997 = vmatprep.subr.mxu0 0.0
    %1998 = vmatpush1.xpose.msra.mxu0 0.0
    %1999 = vmatprep.subr.mxu0 0.0
    %2000 = vmatpush1.xpose.msra.mxu0 0.0
    %2001 = vmatprep.subr.mxu0 0.0
    %2002 = vmatpush1.xpose.msra.mxu0 0.0
    %2003 = vmatprep.subr.mxu0 0.0
    %2004 = vmatpush1.xpose.msra.mxu0 0.0
    %2005 = vmatprep.subr.mxu0 0.0
    %2006 = vmatpush1.xpose.msra.mxu0 0.0
    %2007 = vmatprep.subr.mxu0 0.0
    %2008 = vmatpush1.xpose.msra.mxu0 0.0
    %2009 = vmatprep.subr.mxu0 0.0
    %2010 = vmatpush1.xpose.msra.mxu0 0.0
    %2011 = vmatprep.subr.mxu0 0.0
    %2012 = vmatpush1.xpose.msra.mxu0 0.0
    %2013 = vmatprep.subr.mxu0 0.0
    %2014 = vmatpush1.xpose.msra.mxu0 0.0
    %2015 = vmatprep.subr.mxu0 0.0
    %2016 = vmatpush1.xpose.msra.mxu0 0.0
    %2017 = vmatprep.subr.mxu0 0.0
    %2018 = vmatpush1.xpose.msra.mxu0 0.0
    %2019 = vmatprep.subr.mxu0 0.0
    %2020 = vmatpush1.xpose.msra.mxu0 0.0
    %2021 = vmatprep.subr.mxu0 0.0
    %2022 = vmatpush1.xpose.msra.mxu0 0.0
    %2023 = vmatprep.subr.mxu0 0.0
    %2024 = vmatpush1.xpose.msra.mxu0 0.0
    %2025 = vmatprep.subr.mxu0 0.0
    %2026 = vmatpush1.xpose.msra.mxu0 0.0
    %2027 = vmatprep.subr.mxu0 0.0
    %2028 = vmatpush1.xpose.msra.mxu0 0.0
    %2029 = vmatprep.subr.mxu0 0.0
    %2030 = vmatpush1.xpose.msra.mxu0 0.0
    %2031 = vmatprep.subr.mxu0 0.0
    %2032 = vmatpush1.xpose.msra.mxu0 0.0
    %2033 = vmatprep.subr.mxu0 0.0
    %2034 = vmatpush1.xpose.msra.mxu0 0.0
    %2035 = vmatprep.subr.mxu0 0.0
    %2036 = vmatpush1.xpose.msra.mxu0 0.0
    %2037 = vmatprep.subr.mxu0 0.0
    %2038 = vmatpush1.xpose.msra.mxu0 0.0
    %2039 = vmatprep.subr.mxu0 0.0
    %2040 = vmatpush1.xpose.msra.mxu0 0.0
    %2041 = vmatprep.subr.mxu0 0.0
    %2042 = vmatpush1.xpose.msra.mxu0 0.0
    %2043 = vmatprep.subr.mxu0 0.0
    %2044 = vmatpush1.xpose.msra.mxu0 0.0
    %2045 = vmatprep.subr.mxu0 0.0
    %2046 = vmatpush1.xpose.msra.mxu0 0.0
    %2047 = vmatprep.subr.mxu0 0.0
    %2048 = vmatpush1.xpose.msra.mxu0 0.0
    %2049 = vmatprep.subr.mxu0 0.0
    %2050 = vmatpush1.xpose.msra.mxu0 0.0
    %2051 = vmatprep.mubr.f32.mxu0 0.0
    %2052 = vmatmul.mubr.f32.gmra.mrb[0].mxu0 %v1958
    %v2053 = vpop.f32.mrb[0].mxu0
    %v2054 = vadd.f32 0.0, %v2053
    %v2055 = vpop.f32.mrb[0].mxu0
    %2056 = vmatprep.mubr.f32.mxu0 0.0
    %2057 = vmatmul.mubr.f32.gmra.mrb[0].mxu0 %v1961
    %v2058 = vpop.f32.mrb[0].mxu0
    %v2059 = vadd.f32 0.0, %v2058
    %v2060 = vpop.f32.mrb[0].mxu0
    %2061 = vmatprep.mubr.f32.mxu0 0.0
    %2062 = vmatmul.mubr.f32.gmra.mrb[0].mxu0 %v1964
    %v2063 = vpop.f32.mrb[0].mxu0
    %v2064 = vadd.f32 0.0, %v2063
    %v2065 = vpop.f32.mrb[0].mxu0
    %2066 = vmatprep.mubr.f32.mxu0 0.0
    %2067 = vmatmul.mubr.f32.gmra.mrb[0].mxu0 %v1967
    %v2068 = vpop.f32.mrb[0].mxu0
    %v2069 = vadd.f32 0.0, %v2068
    %v2070 = vpop.f32.mrb[0].mxu0
    %2071 = vmatprep.mubr.f32.mxu0 0.0
    %2072 = vmatmul.mubr.f32.gmra.mrb[0].mxu0 %v1970
    %v2073 = vpop.f32.mrb[0].mxu0
    %v2074 = vadd.f32 0.0, %v2073
    %v2075 = vpop.f32.mrb[0].mxu0
    %2076 = vdwg.mxu0
    %v2078 = vsel %vm396, %v226, 0
    %v2081 = vsel %vm396, %v227, 0
    %v2084 = vsel %vm396, %v228, 0
    %v2087 = vsel %vm396, %v229, 0
    %v2090 = vsel %vm396, %v230, 0
    %v2093 = vsel %vm396, %v306, 0
    %v2096 = vsel %vm396, %v307, 0
    %v2099 = vsel %vm396, %v308, 0
    %v2102 = vsel %vm396, %v309, 0
    %v2105 = vsel %vm396, %v310, 0
    %2107 = vmatprep.subr.mxu0 0.0
    %2108 = vmatpush1.xpose.msra.mxu0 %v2093
    %2109 = vmatprep.subr.mxu0 0.0
    %2110 = vmatpush1.xpose.msra.mxu0 %v2096
    %2111 = vmatprep.subr.mxu0 0.0
    %2112 = vmatpush1.xpose.msra.mxu0 %v2099
    %2113 = vmatprep.subr.mxu0 0.0
    %2114 = vmatpush1.xpose.msra.mxu0 %v2102
    %2115 = vmatprep.subr.mxu0 0.0
    %2116 = vmatpush1.xpose.msra.mxu0 %v2105
    %2117 = vmatprep.subr.mxu0 0.0
    %2118 = vmatpush1.xpose.msra.mxu0 0.0
    %2119 = vmatprep.subr.mxu0 0.0
    %2120 = vmatpush1.xpose.msra.mxu0 0.0
    %2121 = vmatprep.subr.mxu0 0.0
    %2122 = vmatpush1.xpose.msra.mxu0 0.0
    %2123 = vmatprep.subr.mxu0 0.0
    %2124 = vmatpush1.xpose.msra.mxu0 0.0
    %2125 = vmatprep.subr.mxu0 0.0
    %2126 = vmatpush1.xpose.msra.mxu0 0.0
    %2127 = vmatprep.subr.mxu0 0.0
    %2128 = vmatpush1.xpose.msra.mxu0 0.0
    %2129 = vmatprep.subr.mxu0 0.0
    %2130 = vmatpush1.xpose.msra.mxu0 0.0
    %2131 = vmatprep.subr.mxu0 0.0
    %2132 = vmatpush1.xpose.msra.mxu0 0.0
    %2133 = vmatprep.subr.mxu0 0.0
    %2134 = vmatpush1.xpose.msra.mxu0 0.0
    %2135 = vmatprep.subr.mxu0 0.0
    %2136 = vmatpush1.xpose.msra.mxu0 0.0
    %2137 = vmatprep.subr.mxu0 0.0
    %2138 = vmatpush1.xpose.msra.mxu0 0.0
    %2139 = vmatprep.subr.mxu0 0.0
    %2140 = vmatpush1.xpose.msra.mxu0 0.0
    %2141 = vmatprep.subr.mxu0 0.0
    %2142 = vmatpush1.xpose.msra.mxu0 0.0
    %2143 = vmatprep.subr.mxu0 0.0
    %2144 = vmatpush1.xpose.msra.mxu0 0.0
    %2145 = vmatprep.subr.mxu0 0.0
    %2146 = vmatpush1.xpose.msra.mxu0 0.0
    %2147 = vmatprep.subr.mxu0 0.0
    %2148 = vmatpush1.xpose.msra.mxu0 0.0
    %2149 = vmatprep.subr.mxu0 0.0
    %2150 = vmatpush1.xpose.msra.mxu0 0.0
    %2151 = vmatprep.subr.mxu0 0.0
    %2152 = vmatpush1.xpose.msra.mxu0 0.0
    %2153 = vmatprep.subr.mxu0 0.0
    %2154 = vmatpush1.xpose.msra.mxu0 0.0
    %2155 = vmatprep.subr.mxu0 0.0
    %2156 = vmatpush1.xpose.msra.mxu0 0.0
    %2157 = vmatprep.subr.mxu0 0.0
    %2158 = vmatpush1.xpose.msra.mxu0 0.0
    %2159 = vmatprep.subr.mxu0 0.0
    %2160 = vmatpush1.xpose.msra.mxu0 0.0
    %2161 = vmatprep.subr.mxu0 0.0
    %2162 = vmatpush1.xpose.msra.mxu0 0.0
    %2163 = vmatprep.subr.mxu0 0.0
    %2164 = vmatpush1.xpose.msra.mxu0 0.0
    %2165 = vmatprep.subr.mxu0 0.0
    %2166 = vmatpush1.xpose.msra.mxu0 0.0
    %2167 = vmatprep.subr.mxu0 0.0
    %2168 = vmatpush1.xpose.msra.mxu0 0.0
    %2169 = vmatprep.subr.mxu0 0.0
    %2170 = vmatpush1.xpose.msra.mxu0 0.0
    %2171 = vmatprep.mubr.f32.mxu0 0.0
    %2172 = vmatmul.mubr.f32.gmra.mrb[0].mxu0 %v2078
    %v2173 = vpop.f32.mrb[0].mxu0
    %v2174 = vadd.f32 0.0, %v2173
    %v2175 = vpop.f32.mrb[0].mxu0
    %2176 = vmatprep.mubr.f32.mxu0 0.0
    %2177 = vmatmul.mubr.f32.gmra.mrb[0].mxu0 %v2081
    %v2178 = vpop.f32.mrb[0].mxu0
    %v2179 = vadd.f32 0.0, %v2178
    %v2180 = vpop.f32.mrb[0].mxu0
    %2181 = vmatprep.mubr.f32.mxu0 0.0
    %2182 = vmatmul.mubr.f32.gmra.mrb[0].mxu0 %v2084
    %v2183 = vpop.f32.mrb[0].mxu0
    %v2184 = vadd.f32 0.0, %v2183
    %v2185 = vpop.f32.mrb[0].mxu0
    %2186 = vmatprep.mubr.f32.mxu0 0.0
    %2187 = vmatmul.mubr.f32.gmra.mrb[0].mxu0 %v2087
    %v2188 = vpop.f32.mrb[0].mxu0
    %v2189 = vadd.f32 0.0, %v2188
    %v2190 = vpop.f32.mrb[0].mxu0
    %2191 = vmatprep.mubr.f32.mxu0 0.0
    %2192 = vmatmul.mubr.f32.gmra.mrb[0].mxu0 %v2090
    %v2193 = vpop.f32.mrb[0].mxu0
    %v2194 = vadd.f32 0.0, %v2193
    %v2195 = vpop.f32.mrb[0].mxu0
    %2196 = vdwg.mxu0
    %v2198 = vsel %vm396, %v231, 0
    %v2201 = vsel %vm396, %v232, 0
    %v2204 = vsel %vm396, %v233, 0
    %v2207 = vsel %vm396, %v234, 0
    %v2210 = vsel %vm396, %v235, 0
    %v2213 = vsel %vm396, %v311, 0
    %v2216 = vsel %vm396, %v312, 0
    %v2219 = vsel %vm396, %v313, 0
    %v2222 = vsel %vm396, %v314, 0
    %v2225 = vsel %vm396, %v315, 0
    %2227 = vmatprep.subr.mxu0 0.0
    %2228 = vmatpush1.xpose.msra.mxu0 %v2213
    %2229 = vmatprep.subr.mxu0 0.0
    %2230 = vmatpush1.xpose.msra.mxu0 %v2216
    %2231 = vmatprep.subr.mxu0 0.0
    %2232 = vmatpush1.xpose.msra.mxu0 %v2219
    %2233 = vmatprep.subr.mxu0 0.0
    %2234 = vmatpush1.xpose.msra.mxu0 %v2222
    %2235 = vmatprep.subr.mxu0 0.0
    %2236 = vmatpush1.xpose.msra.mxu0 %v2225
    %2237 = vmatprep.subr.mxu0 0.0
    %2238 = vmatpush1.xpose.msra.mxu0 0.0
    %2239 = vmatprep.subr.mxu0 0.0
    %2240 = vmatpush1.xpose.msra.mxu0 0.0
    %2241 = vmatprep.subr.mxu0 0.0
    %2242 = vmatpush1.xpose.msra.mxu0 0.0
    %2243 = vmatprep.subr.mxu0 0.0
    %2244 = vmatpush1.xpose.msra.mxu0 0.0
    %2245 = vmatprep.subr.mxu0 0.0
    %2246 = vmatpush1.xpose.msra.mxu0 0.0
    %2247 = vmatprep.subr.mxu0 0.0
    %2248 = vmatpush1.xpose.msra.mxu0 0.0
    %2249 = vmatprep.subr.mxu0 0.0
    %2250 = vmatpush1.xpose.msra.mxu0 0.0
    %2251 = vmatprep.subr.mxu0 0.0
    %2252 = vmatpush1.xpose.msra.mxu0 0.0
    %2253 = vmatprep.subr.mxu0 0.0
    %2254 = vmatpush1.xpose.msra.mxu0 0.0
    %2255 = vmatprep.subr.mxu0 0.0
    %2256 = vmatpush1.xpose.msra.mxu0 0.0
    %2257 = vmatprep.subr.mxu0 0.0
    %2258 = vmatpush1.xpose.msra.mxu0 0.0
    %2259 = vmatprep.subr.mxu0 0.0
    %2260 = vmatpush1.xpose.msra.mxu0 0.0
    %2261 = vmatprep.subr.mxu0 0.0
    %2262 = vmatpush1.xpose.msra.mxu0 0.0
    %2263 = vmatprep.subr.mxu0 0.0
    %2264 = vmatpush1.xpose.msra.mxu0 0.0
    %2265 = vmatprep.subr.mxu0 0.0
    %2266 = vmatpush1.xpose.msra.mxu0 0.0
    %2267 = vmatprep.subr.mxu0 0.0
    %2268 = vmatpush1.xpose.msra.mxu0 0.0
    %2269 = vmatprep.subr.mxu0 0.0
    %2270 = vmatpush1.xpose.msra.mxu0 0.0
    %2271 = vmatprep.subr.mxu0 0.0
    %2272 = vmatpush1.xpose.msra.mxu0 0.0
    %2273 = vmatprep.subr.mxu0 0.0
    %2274 = vmatpush1.xpose.msra.mxu0 0.0
    %2275 = vmatprep.subr.mxu0 0.0
    %2276 = vmatpush1.xpose.msra.mxu0 0.0
    %2277 = vmatprep.subr.mxu0 0.0
    %2278 = vmatpush1.xpose.msra.mxu0 0.0
    %2279 = vmatprep.subr.mxu0 0.0
    %2280 = vmatpush1.xpose.msra.mxu0 0.0
    %2281 = vmatprep.subr.mxu0 0.0
    %2282 = vmatpush1.xpose.msra.mxu0 0.0
    %2283 = vmatprep.subr.mxu0 0.0
    %2284 = vmatpush1.xpose.msra.mxu0 0.0
    %2285 = vmatprep.subr.mxu0 0.0
    %2286 = vmatpush1.xpose.msra.mxu0 0.0
    %2287 = vmatprep.subr.mxu0 0.0
    %2288 = vmatpush1.xpose.msra.mxu0 0.0
    %2289 = vmatprep.subr.mxu0 0.0
    %2290 = vmatpush1.xpose.msra.mxu0 0.0
    %2291 = vmatprep.mubr.f32.mxu0 0.0
    %2292 = vmatmul.mubr.f32.gmra.mrb[0].mxu0 %v2198
    %v2293 = vpop.f32.mrb[0].mxu0
    %v2294 = vadd.f32 0.0, %v2293
    %v2295 = vpop.f32.mrb[0].mxu0
    %2296 = vmatprep.mubr.f32.mxu0 0.0
    %2297 = vmatmul.mubr.f32.gmra.mrb[0].mxu0 %v2201
    %v2298 = vpop.f32.mrb[0].mxu0
    %v2299 = vadd.f32 0.0, %v2298
    %v2300 = vpop.f32.mrb[0].mxu0
    %2301 = vmatprep.mubr.f32.mxu0 0.0
    %2302 = vmatmul.mubr.f32.gmra.mrb[0].mxu0 %v2204
    %v2303 = vpop.f32.mrb[0].mxu0
    %v2304 = vadd.f32 0.0, %v2303
    %v2305 = vpop.f32.mrb[0].mxu0
    %2306 = vmatprep.mubr.f32.mxu0 0.0
    %2307 = vmatmul.mubr.f32.gmra.mrb[0].mxu0 %v2207
    %v2308 = vpop.f32.mrb[0].mxu0
    %v2309 = vadd.f32 0.0, %v2308
    %v2310 = vpop.f32.mrb[0].mxu0
    %2311 = vmatprep.mubr.f32.mxu0 0.0
    %2312 = vmatmul.mubr.f32.gmra.mrb[0].mxu0 %v2210
    %v2313 = vpop.f32.mrb[0].mxu0
    %v2314 = vadd.f32 0.0, %v2313
    %v2315 = vpop.f32.mrb[0].mxu0
    %2316 = vdwg.mxu0
    %v2317 = vld [vmem:[#allocation8] sm:$0x1]
    %v2318 = vld [vmem:[#allocation8 + $0x1] sm:$0x1]
    %v2319 = vld [vmem:[#allocation8 + $0x2] sm:$0x1]
    %v2320 = vld [vmem:[#allocation8 + $0x3] sm:$0x1]
    %v2321 = vld [vmem:[#allocation8 + $0x4] sm:$0x1]
    %v2322 = vld [vmem:[#allocation8 + $0x5] sm:$0x1]
    %v2323 = vld [vmem:[#allocation8 + $0x6] sm:$0x1]
    %v2324 = vld [vmem:[#allocation8 + $0x7] sm:$0x1]
    %v2325 = vld [vmem:[#allocation8 + $0x8] sm:$0x1]
    %v2326 = vld [vmem:[#allocation8 + $0x9] sm:$0x1]
    %v2327 = vld [vmem:[#allocation8 + $0xa] sm:$0x1]
    %v2328 = vld [vmem:[#allocation8 + $0xb] sm:$0x1]
    %v2329 = vld [vmem:[#allocation8 + $0xc] sm:$0x1]
    %v2330 = vld [vmem:[#allocation8 + $0xd] sm:$0x1]
    %v2331 = vld [vmem:[#allocation8 + $0xe] sm:$0x1]
    %v2332 = vld [vmem:[#allocation8 + $0xf] sm:$0x1]
    %vm2333 = vcmp.ne.s32.totalorder %v2317, 0
    %vm2334 = vcmp.ne.s32.totalorder %v2318, 0
    %vm2335 = vcmp.ne.s32.totalorder %v2319, 0
    %vm2336 = vcmp.ne.s32.totalorder %v2320, 0
    %vm2337 = vcmp.ne.s32.totalorder %v2321, 0
    %vm2338 = vcmp.ne.s32.totalorder %v2322, 0
    %vm2339 = vcmp.ne.s32.totalorder %v2323, 0
    %vm2340 = vcmp.ne.s32.totalorder %v2324, 0
    %vm2341 = vcmp.ne.s32.totalorder %v2325, 0
    %vm2342 = vcmp.ne.s32.totalorder %v2326, 0
    %vm2343 = vcmp.ne.s32.totalorder %v2327, 0
    %vm2344 = vcmp.ne.s32.totalorder %v2328, 0
    %vm2345 = vcmp.ne.s32.totalorder %v2329, 0
    %vm2346 = vcmp.ne.s32.totalorder %v2330, 0
    %vm2347 = vcmp.ne.s32.totalorder %v2331, 0
    %vm2348 = vcmp.ne.s32.totalorder %v2332, 0
    %v2349 = vsel %vm2333, 1, 0
    %v2350 = vsel %vm2334, 1, 0
    %v2351 = vsel %vm2335, 1, 0
    %v2352 = vsel %vm2336, 1, 0
    %v2353 = vsel %vm2337, 1, 0
    %v2354 = vsel %vm2338, 1, 0
    %v2355 = vsel %vm2339, 1, 0
    %v2356 = vsel %vm2340, 1, 0
    %v2357 = vsel %vm2341, 1, 0
    %v2358 = vsel %vm2342, 1, 0
    %v2359 = vsel %vm2343, 1, 0
    %v2360 = vsel %vm2344, 1, 0
    %v2361 = vsel %vm2345, 1, 0
    %v2362 = vsel %vm2346, 1, 0
    %v2363 = vsel %vm2347, 1, 0
    %v2364 = vsel %vm2348, 1, 0
    %v2365 = vlaneseq
    %v2366 = vshrl.u32 %v2365, 7
    %v2367 = vsub.s32 0, %v2366
    %v2368 = vrot.slane %v2349, %v2367
    %v2369 = vlaneseq
    %v2370 = vshrl.u32 %v2369, 7
    %v2371 = vsub.s32 0, %v2370
    %v2372 = vrot.slane %v2350, %v2371
    %v2373 = vlaneseq
    %v2374 = vshrl.u32 %v2373, 7
    %v2375 = vsub.s32 0, %v2374
    %v2376 = vrot.slane %v2351, %v2375
    %v2377 = vlaneseq
    %v2378 = vshrl.u32 %v2377, 7
    %v2379 = vsub.s32 0, %v2378
    %v2380 = vrot.slane %v2352, %v2379
    %v2381 = vlaneseq
    %v2382 = vshrl.u32 %v2381, 7
    %v2383 = vsub.s32 0, %v2382
    %v2384 = vrot.slane %v2353, %v2383
    %v2385 = vlaneseq
    %v2386 = vshrl.u32 %v2385, 7
    %v2387 = vsub.s32 0, %v2386
    %v2388 = vrot.slane %v2354, %v2387
    %v2389 = vlaneseq
    %v2390 = vshrl.u32 %v2389, 7
    %v2391 = vsub.s32 0, %v2390
    %v2392 = vrot.slane %v2355, %v2391
    %v2393 = vlaneseq
    %v2394 = vshrl.u32 %v2393, 7
    %v2395 = vsub.s32 0, %v2394
    %v2396 = vrot.slane %v2356, %v2395
    %v2397 = vlaneseq
    %v2398 = vshrl.u32 %v2397, 7
    %v2399 = vsub.s32 0, %v2398
    %v2400 = vrot.slane %v2357, %v2399
    %v2401 = vlaneseq
    %v2402 = vshrl.u32 %v2401, 7
    %v2403 = vsub.s32 0, %v2402
    %v2404 = vrot.slane %v2358, %v2403
    %v2405 = vlaneseq
    %v2406 = vshrl.u32 %v2405, 7
    %v2407 = vsub.s32 0, %v2406
    %v2408 = vrot.slane %v2359, %v2407
    %v2409 = vlaneseq
    %v2410 = vshrl.u32 %v2409, 7
    %v2411 = vsub.s32 0, %v2410
    %v2412 = vrot.slane %v2360, %v2411
    %v2413 = vlaneseq
    %v2414 = vshrl.u32 %v2413, 7
    %v2415 = vsub.s32 0, %v2414
    %v2416 = vrot.slane %v2361, %v2415
    %v2417 = vlaneseq
    %v2418 = vshrl.u32 %v2417, 7
    %v2419 = vsub.s32 0, %v2418
    %v2420 = vrot.slane %v2362, %v2419
    %v2421 = vlaneseq
    %v2422 = vshrl.u32 %v2421, 7
    %v2423 = vsub.s32 0, %v2422
    %v2424 = vrot.slane %v2363, %v2423
    %v2425 = vlaneseq
    %v2426 = vshrl.u32 %v2425, 7
    %v2427 = vsub.s32 0, %v2426
    %v2428 = vrot.slane %v2364, %v2427
    %vm2429 = vcmp.eq.s32.totalorder %v2368, 1
    %vm2430 = vcmp.eq.s32.totalorder %v2372, 1
    %vm2431 = vcmp.eq.s32.totalorder %v2376, 1
    %vm2432 = vcmp.eq.s32.totalorder %v2380, 1
    %vm2433 = vcmp.eq.s32.totalorder %v2384, 1
    %vm2434 = vcmp.eq.s32.totalorder %v2388, 1
    %vm2435 = vcmp.eq.s32.totalorder %v2392, 1
    %vm2436 = vcmp.eq.s32.totalorder %v2396, 1
    %vm2437 = vcmp.eq.s32.totalorder %v2400, 1
    %vm2438 = vcmp.eq.s32.totalorder %v2404, 1
    %vm2439 = vcmp.eq.s32.totalorder %v2408, 1
    %vm2440 = vcmp.eq.s32.totalorder %v2412, 1
    %vm2441 = vcmp.eq.s32.totalorder %v2416, 1
    %vm2442 = vcmp.eq.s32.totalorder %v2420, 1
    %vm2443 = vcmp.eq.s32.totalorder %v2424, 1
    %vm2444 = vcmp.eq.s32.totalorder %v2428, 1
    %v2445 = vsel %vm2429, -1e+09, %v494
    %v2446 = vsel %vm2429, -1e+09, %v499
    %v2447 = vsel %vm2429, -1e+09, %v504
    %v2448 = vsel %vm2429, -1e+09, %v509
    %v2449 = vsel %vm2429, -1e+09, %v514
    %v2450 = vsel %vm2430, -1e+09, %v614
    %v2451 = vsel %vm2430, -1e+09, %v619
    %v2452 = vsel %vm2430, -1e+09, %v624
    %v2453 = vsel %vm2430, -1e+09, %v629
    %v2454 = vsel %vm2430, -1e+09, %v634
    %v2455 = vsel %vm2431, -1e+09, %v734
    %v2456 = vsel %vm2431, -1e+09, %v739
    %v2457 = vsel %vm2431, -1e+09, %v744
    %v2458 = vsel %vm2431, -1e+09, %v749
    %v2459 = vsel %vm2431, -1e+09, %v754
    %v2460 = vsel %vm2432, -1e+09, %v854
    %v2461 = vsel %vm2432, -1e+09, %v859
    %v2462 = vsel %vm2432, -1e+09, %v864
    %v2463 = vsel %vm2432, -1e+09, %v869
    %v2464 = vsel %vm2432, -1e+09, %v874
    %v2465 = vsel %vm2433, -1e+09, %v974
    %v2466 = vsel %vm2433, -1e+09, %v979
    %v2467 = vsel %vm2433, -1e+09, %v984
    %v2468 = vsel %vm2433, -1e+09, %v989
    %v2469 = vsel %vm2433, -1e+09, %v994
    %v2470 = vsel %vm2434, -1e+09, %v1094
    %v2471 = vsel %vm2434, -1e+09, %v1099
    %v2472 = vsel %vm2434, -1e+09, %v1104
    %v2473 = vsel %vm2434, -1e+09, %v1109
    %v2474 = vsel %vm2434, -1e+09, %v1114
    %v2475 = vsel %vm2435, -1e+09, %v1214
    %v2476 = vsel %vm2435, -1e+09, %v1219
    %v2477 = vsel %vm2435, -1e+09, %v1224
    %v2478 = vsel %vm2435, -1e+09, %v1229
    %v2479 = vsel %vm2435, -1e+09, %v1234
    %v2480 = vsel %vm2436, -1e+09, %v1334
    %v2481 = vsel %vm2436, -1e+09, %v1339
    %v2482 = vsel %vm2436, -1e+09, %v1344
    %v2483 = vsel %vm2436, -1e+09, %v1349
    %v2484 = vsel %vm2436, -1e+09, %v1354
    %v2485 = vsel %vm2437, -1e+09, %v1454
    %v2486 = vsel %vm2437, -1e+09, %v1459
    %v2487 = vsel %vm2437, -1e+09, %v1464
    %v2488 = vsel %vm2437, -1e+09, %v1469
    %v2489 = vsel %vm2437, -1e+09, %v1474
    %v2490 = vsel %vm2438, -1e+09, %v1574
    %v2491 = vsel %vm2438, -1e+09, %v1579
    %v2492 = vsel %vm2438, -1e+09, %v1584
    %v2493 = vsel %vm2438, -1e+09, %v1589
    %v2494 = vsel %vm2438, -1e+09, %v1594
    %v2495 = vsel %vm2439, -1e+09, %v1694
    %v2496 = vsel %vm2439, -1e+09, %v1699
    %v2497 = vsel %vm2439, -1e+09, %v1704
    %v2498 = vsel %vm2439, -1e+09, %v1709
    %v2499 = vsel %vm2439, -1e+09, %v1714
    %v2500 = vsel %vm2440, -1e+09, %v1814
    %v2501 = vsel %vm2440, -1e+09, %v1819
    %v2502 = vsel %vm2440, -1e+09, %v1824
    %v2503 = vsel %vm2440, -1e+09, %v1829
    %v2504 = vsel %vm2440, -1e+09, %v1834
    %v2505 = vsel %vm2441, -1e+09, %v1934
    %v2506 = vsel %vm2441, -1e+09, %v1939
    %v2507 = vsel %vm2441, -1e+09, %v1944
    %v2508 = vsel %vm2441, -1e+09, %v1949
    %v2509 = vsel %vm2441, -1e+09, %v1954
    %v2510 = vsel %vm2442, -1e+09, %v2054
    %v2511 = vsel %vm2442, -1e+09, %v2059
    %v2512 = vsel %vm2442, -1e+09, %v2064
    %v2513 = vsel %vm2442, -1e+09, %v2069
    %v2514 = vsel %vm2442, -1e+09, %v2074
    %v2515 = vsel %vm2443, -1e+09, %v2174
    %v2516 = vsel %vm2443, -1e+09, %v2179
    %v2517 = vsel %vm2443, -1e+09, %v2184
    %v2518 = vsel %vm2443, -1e+09, %v2189
    %v2519 = vsel %vm2443, -1e+09, %v2194
    %v2520 = vsel %vm2444, -1e+09, %v2294
    %v2521 = vsel %vm2444, -1e+09, %v2299
    %v2522 = vsel %vm2444, -1e+09, %v2304
    %v2523 = vsel %vm2444, -1e+09, %v2309
    %v2524 = vsel %vm2444, -1e+09, %v2314
    %vm2525 = vcmask 326656
    %v2526 = vsel %vm2525, %v2445, -inf
    %2527 = vmax.xlane.f32.xlu0 %v2526
    %v2528 = vpop.xlane.xlu0 %2527
    %v2529 = vsel %vm2525, %v2446, -inf
    %2530 = vmax.xlane.f32.xlu0 %v2529
    %v2531 = vpop.xlane.xlu0 %2530
    %v2532 = vsel %vm2525, %v2447, -inf
    %2533 = vmax.xlane.f32.xlu0 %v2532
    %v2534 = vpop.xlane.xlu0 %2533
    %v2535 = vsel %vm2525, %v2448, -inf
    %2536 = vmax.xlane.f32.xlu0 %v2535
    %v2537 = vpop.xlane.xlu0 %2536
    %v2538 = vsel %vm2525, %v2449, -inf
    %2539 = vmax.xlane.f32.xlu0 %v2538
    %v2540 = vpop.xlane.xlu0 %2539
    %v2541 = vsel %vm2525, %v2450, -inf
    %2542 = vmax.xlane.f32.xlu0 %v2541
    %v2543 = vpop.xlane.xlu0 %2542
    %v2544 = vsel %vm2525, %v2451, -inf
    %2545 = vmax.xlane.f32.xlu0 %v2544
    %v2546 = vpop.xlane.xlu0 %2545
    %v2547 = vsel %vm2525, %v2452, -inf
    %2548 = vmax.xlane.f32.xlu0 %v2547
    %v2549 = vpop.xlane.xlu0 %2548
    %v2550 = vsel %vm2525, %v2453, -inf
    %2551 = vmax.xlane.f32.xlu0 %v2550
    %v2552 = vpop.xlane.xlu0 %2551
    %v2553 = vsel %vm2525, %v2454, -inf
    %2554 = vmax.xlane.f32.xlu0 %v2553
    %v2555 = vpop.xlane.xlu0 %2554
    %v2556 = vsel %vm2525, %v2455, -inf
    %2557 = vmax.xlane.f32.xlu0 %v2556
    %v2558 = vpop.xlane.xlu0 %2557
    %v2559 = vsel %vm2525, %v2456, -inf
    %2560 = vmax.xlane.f32.xlu0 %v2559
    %v2561 = vpop.xlane.xlu0 %2560
    %v2562 = vsel %vm2525, %v2457, -inf
    %2563 = vmax.xlane.f32.xlu0 %v2562
    %v2564 = vpop.xlane.xlu0 %2563
    %v2565 = vsel %vm2525, %v2458, -inf
    %2566 = vmax.xlane.f32.xlu0 %v2565
    %v2567 = vpop.xlane.xlu0 %2566
    %v2568 = vsel %vm2525, %v2459, -inf
    %2569 = vmax.xlane.f32.xlu0 %v2568
    %v2570 = vpop.xlane.xlu0 %2569
    %v2571 = vsel %vm2525, %v2460, -inf
    %2572 = vmax.xlane.f32.xlu0 %v2571
    %v2573 = vpop.xlane.xlu0 %2572
    %v2574 = vsel %vm2525, %v2461, -inf
    %2575 = vmax.xlane.f32.xlu0 %v2574
    %v2576 = vpop.xlane.xlu0 %2575
    %v2577 = vsel %vm2525, %v2462, -inf
    %2578 = vmax.xlane.f32.xlu0 %v2577
    %v2579 = vpop.xlane.xlu0 %2578
    %v2580 = vsel %vm2525, %v2463, -inf
    %2581 = vmax.xlane.f32.xlu0 %v2580
    %v2582 = vpop.xlane.xlu0 %2581
    %v2583 = vsel %vm2525, %v2464, -inf
    %2584 = vmax.xlane.f32.xlu0 %v2583
    %v2585 = vpop.xlane.xlu0 %2584
    %v2586 = vsel %vm2525, %v2465, -inf
    %2587 = vmax.xlane.f32.xlu0 %v2586
    %v2588 = vpop.xlane.xlu0 %2587
    %v2589 = vsel %vm2525, %v2466, -inf
    %2590 = vmax.xlane.f32.xlu0 %v2589
    %v2591 = vpop.xlane.xlu0 %2590
    %v2592 = vsel %vm2525, %v2467, -inf
    %2593 = vmax.xlane.f32.xlu0 %v2592
    %v2594 = vpop.xlane.xlu0 %2593
    %v2595 = vsel %vm2525, %v2468, -inf
    %2596 = vmax.xlane.f32.xlu0 %v2595
    %v2597 = vpop.xlane.xlu0 %2596
    %v2598 = vsel %vm2525, %v2469, -inf
    %2599 = vmax.xlane.f32.xlu0 %v2598
    %v2600 = vpop.xlane.xlu0 %2599
    %v2601 = vsel %vm2525, %v2470, -inf
    %2602 = vmax.xlane.f32.xlu0 %v2601
    %v2603 = vpop.xlane.xlu0 %2602
    %v2604 = vsel %vm2525, %v2471, -inf
    %2605 = vmax.xlane.f32.xlu0 %v2604
    %v2606 = vpop.xlane.xlu0 %2605
    %v2607 = vsel %vm2525, %v2472, -inf
    %2608 = vmax.xlane.f32.xlu0 %v2607
    %v2609 = vpop.xlane.xlu0 %2608
    %v2610 = vsel %vm2525, %v2473, -inf
    %2611 = vmax.xlane.f32.xlu0 %v2610
    %v2612 = vpop.xlane.xlu0 %2611
    %v2613 = vsel %vm2525, %v2474, -inf
    %2614 = vmax.xlane.f32.xlu0 %v2613
    %v2615 = vpop.xlane.xlu0 %2614
    %v2616 = vsel %vm2525, %v2475, -inf
    %2617 = vmax.xlane.f32.xlu0 %v2616
    %v2618 = vpop.xlane.xlu0 %2617
    %v2619 = vsel %vm2525, %v2476, -inf
    %2620 = vmax.xlane.f32.xlu0 %v2619
    %v2621 = vpop.xlane.xlu0 %2620
    %v2622 = vsel %vm2525, %v2477, -inf
    %2623 = vmax.xlane.f32.xlu0 %v2622
    %v2624 = vpop.xlane.xlu0 %2623
    %v2625 = vsel %vm2525, %v2478, -inf
    %2626 = vmax.xlane.f32.xlu0 %v2625
    %v2627 = vpop.xlane.xlu0 %2626
    %v2628 = vsel %vm2525, %v2479, -inf
    %2629 = vmax.xlane.f32.xlu0 %v2628
    %v2630 = vpop.xlane.xlu0 %2629
    %v2631 = vsel %vm2525, %v2480, -inf
    %2632 = vmax.xlane.f32.xlu0 %v2631
    %v2633 = vpop.xlane.xlu0 %2632
    %v2634 = vsel %vm2525, %v2481, -inf
    %2635 = vmax.xlane.f32.xlu0 %v2634
    %v2636 = vpop.xlane.xlu0 %2635
    %v2637 = vsel %vm2525, %v2482, -inf
    %2638 = vmax.xlane.f32.xlu0 %v2637
    %v2639 = vpop.xlane.xlu0 %2638
    %v2640 = vsel %vm2525, %v2483, -inf
    %2641 = vmax.xlane.f32.xlu0 %v2640
    %v2642 = vpop.xlane.xlu0 %2641
    %v2643 = vsel %vm2525, %v2484, -inf
    %2644 = vmax.xlane.f32.xlu0 %v2643
    %v2645 = vpop.xlane.xlu0 %2644
    %v2646 = vsel %vm2525, %v2485, -inf
    %2647 = vmax.xlane.f32.xlu0 %v2646
    %v2648 = vpop.xlane.xlu0 %2647
    %v2649 = vsel %vm2525, %v2486, -inf
    %2650 = vmax.xlane.f32.xlu0 %v2649
    %v2651 = vpop.xlane.xlu0 %2650
    %v2652 = vsel %vm2525, %v2487, -inf
    %2653 = vmax.xlane.f32.xlu0 %v2652
    %v2654 = vpop.xlane.xlu0 %2653
    %v2655 = vsel %vm2525, %v2488, -inf
    %2656 = vmax.xlane.f32.xlu0 %v2655
    %v2657 = vpop.xlane.xlu0 %2656
    %v2658 = vsel %vm2525, %v2489, -inf
    %2659 = vmax.xlane.f32.xlu0 %v2658
    %v2660 = vpop.xlane.xlu0 %2659
    %v2661 = vsel %vm2525, %v2490, -inf
    %2662 = vmax.xlane.f32.xlu0 %v2661
    %v2663 = vpop.xlane.xlu0 %2662
    %v2664 = vsel %vm2525, %v2491, -inf
    %2665 = vmax.xlane.f32.xlu0 %v2664
    %v2666 = vpop.xlane.xlu0 %2665
    %v2667 = vsel %vm2525, %v2492, -inf
    %2668 = vmax.xlane.f32.xlu0 %v2667
    %v2669 = vpop.xlane.xlu0 %2668
    %v2670 = vsel %vm2525, %v2493, -inf
    %2671 = vmax.xlane.f32.xlu0 %v2670
    %v2672 = vpop.xlane.xlu0 %2671
    %v2673 = vsel %vm2525, %v2494, -inf
    %2674 = vmax.xlane.f32.xlu0 %v2673
    %v2675 = vpop.xlane.xlu0 %2674
    %v2676 = vsel %vm2525, %v2495, -inf
    %2677 = vmax.xlane.f32.xlu0 %v2676
    %v2678 = vpop.xlane.xlu0 %2677
    %v2679 = vsel %vm2525, %v2496, -inf
    %2680 = vmax.xlane.f32.xlu0 %v2679
    %v2681 = vpop.xlane.xlu0 %2680
    %v2682 = vsel %vm2525, %v2497, -inf
    %2683 = vmax.xlane.f32.xlu0 %v2682
    %v2684 = vpop.xlane.xlu0 %2683
    %v2685 = vsel %vm2525, %v2498, -inf
    %2686 = vmax.xlane.f32.xlu0 %v2685
    %v2687 = vpop.xlane.xlu0 %2686
    %v2688 = vsel %vm2525, %v2499, -inf
    %2689 = vmax.xlane.f32.xlu0 %v2688
    %v2690 = vpop.xlane.xlu0 %2689
    %v2691 = vsel %vm2525, %v2500, -inf
    %2692 = vmax.xlane.f32.xlu0 %v2691
    %v2693 = vpop.xlane.xlu0 %2692
    %v2694 = vsel %vm2525, %v2501, -inf
    %2695 = vmax.xlane.f32.xlu0 %v2694
    %v2696 = vpop.xlane.xlu0 %2695
    %v2697 = vsel %vm2525, %v2502, -inf
    %2698 = vmax.xlane.f32.xlu0 %v2697
    %v2699 = vpop.xlane.xlu0 %2698
    %v2700 = vsel %vm2525, %v2503, -inf
    %2701 = vmax.xlane.f32.xlu0 %v2700
    %v2702 = vpop.xlane.xlu0 %2701
    %v2703 = vsel %vm2525, %v2504, -inf
    %2704 = vmax.xlane.f32.xlu0 %v2703
    %v2705 = vpop.xlane.xlu0 %2704
    %v2706 = vsel %vm2525, %v2505, -inf
    %2707 = vmax.xlane.f32.xlu0 %v2706
    %v2708 = vpop.xlane.xlu0 %2707
    %v2709 = vsel %vm2525, %v2506, -inf
    %2710 = vmax.xlane.f32.xlu0 %v2709
    %v2711 = vpop.xlane.xlu0 %2710
    %v2712 = vsel %vm2525, %v2507, -inf
    %2713 = vmax.xlane.f32.xlu0 %v2712
    %v2714 = vpop.xlane.xlu0 %2713
    %v2715 = vsel %vm2525, %v2508, -inf
    %2716 = vmax.xlane.f32.xlu0 %v2715
    %v2717 = vpop.xlane.xlu0 %2716
    %v2718 = vsel %vm2525, %v2509, -inf
    %2719 = vmax.xlane.f32.xlu0 %v2718
    %v2720 = vpop.xlane.xlu0 %2719
    %v2721 = vsel %vm2525, %v2510, -inf
    %2722 = vmax.xlane.f32.xlu0 %v2721
    %v2723 = vpop.xlane.xlu0 %2722
    %v2724 = vsel %vm2525, %v2511, -inf
    %2725 = vmax.xlane.f32.xlu0 %v2724
    %v2726 = vpop.xlane.xlu0 %2725
    %v2727 = vsel %vm2525, %v2512, -inf
    %2728 = vmax.xlane.f32.xlu0 %v2727
    %v2729 = vpop.xlane.xlu0 %2728
    %v2730 = vsel %vm2525, %v2513, -inf
    %2731 = vmax.xlane.f32.xlu0 %v2730
    %v2732 = vpop.xlane.xlu0 %2731
    %v2733 = vsel %vm2525, %v2514, -inf
    %2734 = vmax.xlane.f32.xlu0 %v2733
    %v2735 = vpop.xlane.xlu0 %2734
    %v2736 = vsel %vm2525, %v2515, -inf
    %2737 = vmax.xlane.f32.xlu0 %v2736
    %v2738 = vpop.xlane.xlu0 %2737
    %v2739 = vsel %vm2525, %v2516, -inf
    %2740 = vmax.xlane.f32.xlu0 %v2739
    %v2741 = vpop.xlane.xlu0 %2740
    %v2742 = vsel %vm2525, %v2517, -inf
    %2743 = vmax.xlane.f32.xlu0 %v2742
    %v2744 = vpop.xlane.xlu0 %2743
    %v2745 = vsel %vm2525, %v2518, -inf
    %2746 = vmax.xlane.f32.xlu0 %v2745
    %v2747 = vpop.xlane.xlu0 %2746
    %v2748 = vsel %vm2525, %v2519, -inf
    %2749 = vmax.xlane.f32.xlu0 %v2748
    %v2750 = vpop.xlane.xlu0 %2749
    %v2751 = vsel %vm2525, %v2520, -inf
    %2752 = vmax.xlane.f32.xlu0 %v2751
    %v2753 = vpop.xlane.xlu0 %2752
    %v2754 = vsel %vm2525, %v2521, -inf
    %2755 = vmax.xlane.f32.xlu0 %v2754
    %v2756 = vpop.xlane.xlu0 %2755
    %v2757 = vsel %vm2525, %v2522, -inf
    %2758 = vmax.xlane.f32.xlu0 %v2757
    %v2759 = vpop.xlane.xlu0 %2758
    %v2760 = vsel %vm2525, %v2523, -inf
    %2761 = vmax.xlane.f32.xlu0 %v2760
    %v2762 = vpop.xlane.xlu0 %2761
    %v2763 = vsel %vm2525, %v2524, -inf
    %2764 = vmax.xlane.f32.xlu0 %v2763
    %v2765 = vpop.xlane.xlu0 %2764
    %v2766 = vsub.f32 %v2445, %v2528
    %v2767 = vsub.f32 %v2446, %v2531
    %v2768 = vsub.f32 %v2447, %v2534
    %v2769 = vsub.f32 %v2448, %v2537
    %v2770 = vsub.f32 %v2449, %v2540
    %v2771 = vsub.f32 %v2450, %v2543
    %v2772 = vsub.f32 %v2451, %v2546
    %v2773 = vsub.f32 %v2452, %v2549
    %v2774 = vsub.f32 %v2453, %v2552
    %v2775 = vsub.f32 %v2454, %v2555
    %v2776 = vsub.f32 %v2455, %v2558
    %v2777 = vsub.f32 %v2456, %v2561
    %v2778 = vsub.f32 %v2457, %v2564
    %v2779 = vsub.f32 %v2458, %v2567
    %v2780 = vsub.f32 %v2459, %v2570
    %v2781 = vsub.f32 %v2460, %v2573
    %v2782 = vsub.f32 %v2461, %v2576
    %v2783 = vsub.f32 %v2462, %v2579
    %v2784 = vsub.f32 %v2463, %v2582
    %v2785 = vsub.f32 %v2464, %v2585
    %v2786 = vsub.f32 %v2465, %v2588
    %v2787 = vsub.f32 %v2466, %v2591
    %v2788 = vsub.f32 %v2467, %v2594
    %v2789 = vsub.f32 %v2468, %v2597
    %v2790 = vsub.f32 %v2469, %v2600
    %v2791 = vsub.f32 %v2470, %v2603
    %v2792 = vsub.f32 %v2471, %v2606
    %v2793 = vsub.f32 %v2472, %v2609
    %v2794 = vsub.f32 %v2473, %v2612
    %v2795 = vsub.f32 %v2474, %v2615
    %v2796 = vsub.f32 %v2475, %v2618
    %v2797 = vsub.f32 %v2476, %v2621
    %v2798 = vsub.f32 %v2477, %v2624
    %v2799 = vsub.f32 %v2478, %v2627
    %v2800 = vsub.f32 %v2479, %v2630
    %v2801 = vsub.f32 %v2480, %v2633
    %v2802 = vsub.f32 %v2481, %v2636
    %v2803 = vsub.f32 %v2482, %v2639
    %v2804 = vsub.f32 %v2483, %v2642
    %v2805 = vsub.f32 %v2484, %v2645
    %v2806 = vsub.f32 %v2485, %v2648
    %v2807 = vsub.f32 %v2486, %v2651
    %v2808 = vsub.f32 %v2487, %v2654
    %v2809 = vsub.f32 %v2488, %v2657
    %v2810 = vsub.f32 %v2489, %v2660
    %v2811 = vsub.f32 %v2490, %v2663
    %v2812 = vsub.f32 %v2491, %v2666
    %v2813 = vsub.f32 %v2492, %v2669
    %v2814 = vsub.f32 %v2493, %v2672
    %v2815 = vsub.f32 %v2494, %v2675
    %v2816 = vsub.f32 %v2495, %v2678
    %v2817 = vsub.f32 %v2496, %v2681
    %v2818 = vsub.f32 %v2497, %v2684
    %v2819 = vsub.f32 %v2498, %v2687
    %v2820 = vsub.f32 %v2499, %v2690
    %v2821 = vsub.f32 %v2500, %v2693
    %v2822 = vsub.f32 %v2501, %v2696
    %v2823 = vsub.f32 %v2502, %v2699
    %v2824 = vsub.f32 %v2503, %v2702
    %v2825 = vsub.f32 %v2504, %v2705
    %v2826 = vsub.f32 %v2505, %v2708
    %v2827 = vsub.f32 %v2506, %v2711
    %v2828 = vsub.f32 %v2507, %v2714
    %v2829 = vsub.f32 %v2508, %v2717
    %v2830 = vsub.f32 %v2509, %v2720
    %v2831 = vsub.f32 %v2510, %v2723
    %v2832 = vsub.f32 %v2511, %v2726
    %v2833 = vsub.f32 %v2512, %v2729
    %v2834 = vsub.f32 %v2513, %v2732
    %v2835 = vsub.f32 %v2514, %v2735
    %v2836 = vsub.f32 %v2515, %v2738
    %v2837 = vsub.f32 %v2516, %v2741
    %v2838 = vsub.f32 %v2517, %v2744
    %v2839 = vsub.f32 %v2518, %v2747
    %v2840 = vsub.f32 %v2519, %v2750
    %v2841 = vsub.f32 %v2520, %v2753
    %v2842 = vsub.f32 %v2521, %v2756
    %v2843 = vsub.f32 %v2522, %v2759
    %v2844 = vsub.f32 %v2523, %v2762
    %v2845 = vsub.f32 %v2524, %v2765
    %v2846 = vmul.f32 %v2766, 1.442695
    %v2847 = vpow.pop %v2846
    %v2848 = vmul.f32 %v2767, 1.442695
    %v2849 = vpow.pop %v2848
    %v2850 = vmul.f32 %v2768, 1.442695
    %v2851 = vpow.pop %v2850
    %v2852 = vmul.f32 %v2769, 1.442695
    %v2853 = vpow.pop %v2852
    %v2854 = vmul.f32 %v2770, 1.442695
    %v2855 = vpow.pop %v2854
    %v2856 = vmul.f32 %v2771, 1.442695
    %v2857 = vpow.pop %v2856
    %v2858 = vmul.f32 %v2772, 1.442695
    %v2859 = vpow.pop %v2858
    %v2860 = vmul.f32 %v2773, 1.442695
    %v2861 = vpow.pop %v2860
    %v2862 = vmul.f32 %v2774, 1.442695
    %v2863 = vpow.pop %v2862
    %v2864 = vmul.f32 %v2775, 1.442695
    %v2865 = vpow.pop %v2864
    %v2866 = vmul.f32 %v2776, 1.442695
    %v2867 = vpow.pop %v2866
    %v2868 = vmul.f32 %v2777, 1.442695
    %v2869 = vpow.pop %v2868
    %v2870 = vmul.f32 %v2778, 1.442695
    %v2871 = vpow.pop %v2870
    %v2872 = vmul.f32 %v2779, 1.442695
    %v2873 = vpow.pop %v2872
    %v2874 = vmul.f32 %v2780, 1.442695
    %v2875 = vpow.pop %v2874
    %v2876 = vmul.f32 %v2781, 1.442695
    %v2877 = vpow.pop %v2876
    %v2878 = vmul.f32 %v2782, 1.442695
    %v2879 = vpow.pop %v2878
    %v2880 = vmul.f32 %v2783, 1.442695
    %v2881 = vpow.pop %v2880
    %v2882 = vmul.f32 %v2784, 1.442695
    %v2883 = vpow.pop %v2882
    %v2884 = vmul.f32 %v2785, 1.442695
    %v2885 = vpow.pop %v2884
    %v2886 = vmul.f32 %v2786, 1.442695
    %v2887 = vpow.pop %v2886
    %v2888 = vmul.f32 %v2787, 1.442695
    %v2889 = vpow.pop %v2888
    %v2890 = vmul.f32 %v2788, 1.442695
    %v2891 = vpow.pop %v2890
    %v2892 = vmul.f32 %v2789, 1.442695
    %v2893 = vpow.pop %v2892
    %v2894 = vmul.f32 %v2790, 1.442695
    %v2895 = vpow.pop %v2894
    %v2896 = vmul.f32 %v2791, 1.442695
    %v2897 = vpow.pop %v2896
    %v2898 = vmul.f32 %v2792, 1.442695
    %v2899 = vpow.pop %v2898
    %v2900 = vmul.f32 %v2793, 1.442695
    %v2901 = vpow.pop %v2900
    %v2902 = vmul.f32 %v2794, 1.442695
    %v2903 = vpow.pop %v2902
    %v2904 = vmul.f32 %v2795, 1.442695
    %v2905 = vpow.pop %v2904
    %v2906 = vmul.f32 %v2796, 1.442695
    %v2907 = vpow.pop %v2906
    %v2908 = vmul.f32 %v2797, 1.442695
    %v2909 = vpow.pop %v2908
    %v2910 = vmul.f32 %v2798, 1.442695
    %v2911 = vpow.pop %v2910
    %v2912 = vmul.f32 %v2799, 1.442695
    %v2913 = vpow.pop %v2912
    %v2914 = vmul.f32 %v2800, 1.442695
    %v2915 = vpow.pop %v2914
    %v2916 = vmul.f32 %v2801, 1.442695
    %v2917 = vpow.pop %v2916
    %v2918 = vmul.f32 %v2802, 1.442695
    %v2919 = vpow.pop %v2918
    %v2920 = vmul.f32 %v2803, 1.442695
    %v2921 = vpow.pop %v2920
    %v2922 = vmul.f32 %v2804, 1.442695
    %v2923 = vpow.pop %v2922
    %v2924 = vmul.f32 %v2805, 1.442695
    %v2925 = vpow.pop %v2924
    %v2926 = vmul.f32 %v2806, 1.442695
    %v2927 = vpow.pop %v2926
    %v2928 = vmul.f32 %v2807, 1.442695
    %v2929 = vpow.pop %v2928
    %v2930 = vmul.f32 %v2808, 1.442695
    %v2931 = vpow.pop %v2930
    %v2932 = vmul.f32 %v2809, 1.442695
    %v2933 = vpow.pop %v2932
    %v2934 = vmul.f32 %v2810, 1.442695
    %v2935 = vpow.pop %v2934
    %v2936 = vmul.f32 %v2811, 1.442695
    %v2937 = vpow.pop %v2936
    %v2938 = vmul.f32 %v2812, 1.442695
    %v2939 = vpow.pop %v2938
    %v2940 = vmul.f32 %v2813, 1.442695
    %v2941 = vpow.pop %v2940
    %v2942 = vmul.f32 %v2814, 1.442695
    %v2943 = vpow.pop %v2942
    %v2944 = vmul.f32 %v2815, 1.442695
    %v2945 = vpow.pop %v2944
    %v2946 = vmul.f32 %v2816, 1.442695
    %v2947 = vpow.pop %v2946
    %v2948 = vmul.f32 %v2817, 1.442695
    %v2949 = vpow.pop %v2948
    %v2950 = vmul.f32 %v2818, 1.442695
    %v2951 = vpow.pop %v2950
    %v2952 = vmul.f32 %v2819, 1.442695
    %v2953 = vpow.pop %v2952
    %v2954 = vmul.f32 %v2820, 1.442695
    %v2955 = vpow.pop %v2954
    %v2956 = vmul.f32 %v2821, 1.442695
    %v2957 = vpow.pop %v2956
    %v2958 = vmul.f32 %v2822, 1.442695
    %v2959 = vpow.pop %v2958
    %v2960 = vmul.f32 %v2823, 1.442695
    %v2961 = vpow.pop %v2960
    %v2962 = vmul.f32 %v2824, 1.442695
    %v2963 = vpow.pop %v2962
    %v2964 = vmul.f32 %v2825, 1.442695
    %v2965 = vpow.pop %v2964
    %v2966 = vmul.f32 %v2826, 1.442695
    %v2967 = vpow.pop %v2966
    %v2968 = vmul.f32 %v2827, 1.442695
    %v2969 = vpow.pop %v2968
    %v2970 = vmul.f32 %v2828, 1.442695
    %v2971 = vpow.pop %v2970
    %v2972 = vmul.f32 %v2829, 1.442695
    %v2973 = vpow.pop %v2972
    %v2974 = vmul.f32 %v2830, 1.442695
    %v2975 = vpow.pop %v2974
    %v2976 = vmul.f32 %v2831, 1.442695
    %v2977 = vpow.pop %v2976
    %v2978 = vmul.f32 %v2832, 1.442695
    %v2979 = vpow.pop %v2978
    %v2980 = vmul.f32 %v2833, 1.442695
    %v2981 = vpow.pop %v2980
    %v2982 = vmul.f32 %v2834, 1.442695
    %v2983 = vpow.pop %v2982
    %v2984 = vmul.f32 %v2835, 1.442695
    %v2985 = vpow.pop %v2984
    %v2986 = vmul.f32 %v2836, 1.442695
    %v2987 = vpow.pop %v2986
    %v2988 = vmul.f32 %v2837, 1.442695
    %v2989 = vpow.pop %v2988
    %v2990 = vmul.f32 %v2838, 1.442695
    %v2991 = vpow.pop %v2990
    %v2992 = vmul.f32 %v2839, 1.442695
    %v2993 = vpow.pop %v2992
    %v2994 = vmul.f32 %v2840, 1.442695
    %v2995 = vpow.pop %v2994
    %v2996 = vmul.f32 %v2841, 1.442695
    %v2997 = vpow.pop %v2996
    %v2998 = vmul.f32 %v2842, 1.442695
    %v2999 = vpow.pop %v2998
    %v3000 = vmul.f32 %v2843, 1.442695
    %v3001 = vpow.pop %v3000
    %v3002 = vmul.f32 %v2844, 1.442695
    %v3003 = vpow.pop %v3002
    %v3004 = vmul.f32 %v2845, 1.442695
    %v3005 = vpow.pop %v3004
    %v3006 = vsel %vm2525, %v2847, 0.0
    %3007 = vadd.xlane.f32.xlu0 %v3006
    %v3008 = vpop.xlane.xlu0 %3007
    %v3009 = vsel %vm2525, %v2849, 0.0
    %3010 = vadd.xlane.f32.xlu0 %v3009
    %v3011 = vpop.xlane.xlu0 %3010
    %v3012 = vsel %vm2525, %v2851, 0.0
    %3013 = vadd.xlane.f32.xlu0 %v3012
    %v3014 = vpop.xlane.xlu0 %3013
    %v3015 = vsel %vm2525, %v2853, 0.0
    %3016 = vadd.xlane.f32.xlu0 %v3015
    %v3017 = vpop.xlane.xlu0 %3016
    %v3018 = vsel %vm2525, %v2855, 0.0
    %3019 = vadd.xlane.f32.xlu0 %v3018
    %v3020 = vpop.xlane.xlu0 %3019
    %v3021 = vsel %vm2525, %v2857, 0.0
    %3022 = vadd.xlane.f32.xlu0 %v3021
    %v3023 = vpop.xlane.xlu0 %3022
    %v3024 = vsel %vm2525, %v2859, 0.0
    %3025 = vadd.xlane.f32.xlu0 %v3024
    %v3026 = vpop.xlane.xlu0 %3025
    %v3027 = vsel %vm2525, %v2861, 0.0
    %3028 = vadd.xlane.f32.xlu0 %v3027
    %v3029 = vpop.xlane.xlu0 %3028
    %v3030 = vsel %vm2525, %v2863, 0.0
    %3031 = vadd.xlane.f32.xlu0 %v3030
    %v3032 = vpop.xlane.xlu0 %3031
    %v3033 = vsel %vm2525, %v2865, 0.0
    %3034 = vadd.xlane.f32.xlu0 %v3033
    %v3035 = vpop.xlane.xlu0 %3034
    %v3036 = vsel %vm2525, %v2867, 0.0
    %3037 = vadd.xlane.f32.xlu0 %v3036
    %v3038 = vpop.xlane.xlu0 %3037
    %v3039 = vsel %vm2525, %v2869, 0.0
    %3040 = vadd.xlane.f32.xlu0 %v3039
    %v3041 = vpop.xlane.xlu0 %3040
    %v3042 = vsel %vm2525, %v2871, 0.0
    %3043 = vadd.xlane.f32.xlu0 %v3042
    %v3044 = vpop.xlane.xlu0 %3043
    %v3045 = vsel %vm2525, %v2873, 0.0
    %3046 = vadd.xlane.f32.xlu0 %v3045
    %v3047 = vpop.xlane.xlu0 %3046
    %v3048 = vsel %vm2525, %v2875, 0.0
    %3049 = vadd.xlane.f32.xlu0 %v3048
    %v3050 = vpop.xlane.xlu0 %3049
    %v3051 = vsel %vm2525, %v2877, 0.0
    %3052 = vadd.xlane.f32.xlu0 %v3051
    %v3053 = vpop.xlane.xlu0 %3052
    %v3054 = vsel %vm2525, %v2879, 0.0
    %3055 = vadd.xlane.f32.xlu0 %v3054
    %v3056 = vpop.xlane.xlu0 %3055
    %v3057 = vsel %vm2525, %v2881, 0.0
    %3058 = vadd.xlane.f32.xlu0 %v3057
    %v3059 = vpop.xlane.xlu0 %3058
    %v3060 = vsel %vm2525, %v2883, 0.0
    %3061 = vadd.xlane.f32.xlu0 %v3060
    %v3062 = vpop.xlane.xlu0 %3061
    %v3063 = vsel %vm2525, %v2885, 0.0
    %3064 = vadd.xlane.f32.xlu0 %v3063
    %v3065 = vpop.xlane.xlu0 %3064
    %v3066 = vsel %vm2525, %v2887, 0.0
    %3067 = vadd.xlane.f32.xlu0 %v3066
    %v3068 = vpop.xlane.xlu0 %3067
    %v3069 = vsel %vm2525, %v2889, 0.0
    %3070 = vadd.xlane.f32.xlu0 %v3069
    %v3071 = vpop.xlane.xlu0 %3070
    %v3072 = vsel %vm2525, %v2891, 0.0
    %3073 = vadd.xlane.f32.xlu0 %v3072
    %v3074 = vpop.xlane.xlu0 %3073
    %v3075 = vsel %vm2525, %v2893, 0.0
    %3076 = vadd.xlane.f32.xlu0 %v3075
    %v3077 = vpop.xlane.xlu0 %3076
    %v3078 = vsel %vm2525, %v2895, 0.0
    %3079 = vadd.xlane.f32.xlu0 %v3078
    %v3080 = vpop.xlane.xlu0 %3079
    %v3081 = vsel %vm2525, %v2897, 0.0
    %3082 = vadd.xlane.f32.xlu0 %v3081
    %v3083 = vpop.xlane.xlu0 %3082
    %v3084 = vsel %vm2525, %v2899, 0.0
    %3085 = vadd.xlane.f32.xlu0 %v3084
    %v3086 = vpop.xlane.xlu0 %3085
    %v3087 = vsel %vm2525, %v2901, 0.0
    %3088 = vadd.xlane.f32.xlu0 %v3087
    %v3089 = vpop.xlane.xlu0 %3088
    %v3090 = vsel %vm2525, %v2903, 0.0
    %3091 = vadd.xlane.f32.xlu0 %v3090
    %v3092 = vpop.xlane.xlu0 %3091
    %v3093 = vsel %vm2525, %v2905, 0.0
    %3094 = vadd.xlane.f32.xlu0 %v3093
    %v3095 = vpop.xlane.xlu0 %3094
    %v3096 = vsel %vm2525, %v2907, 0.0
    %3097 = vadd.xlane.f32.xlu0 %v3096
    %v3098 = vpop.xlane.xlu0 %3097
    %v3099 = vsel %vm2525, %v2909, 0.0
    %3100 = vadd.xlane.f32.xlu0 %v3099
    %v3101 = vpop.xlane.xlu0 %3100
    %v3102 = vsel %vm2525, %v2911, 0.0
    %3103 = vadd.xlane.f32.xlu0 %v3102
    %v3104 = vpop.xlane.xlu0 %3103
    %v3105 = vsel %vm2525, %v2913, 0.0
    %3106 = vadd.xlane.f32.xlu0 %v3105
    %v3107 = vpop.xlane.xlu0 %3106
    %v3108 = vsel %vm2525, %v2915, 0.0
    %3109 = vadd.xlane.f32.xlu0 %v3108
    %v3110 = vpop.xlane.xlu0 %3109
    %v3111 = vsel %vm2525, %v2917, 0.0
    %3112 = vadd.xlane.f32.xlu0 %v3111
    %v3113 = vpop.xlane.xlu0 %3112
    %v3114 = vsel %vm2525, %v2919, 0.0
    %3115 = vadd.xlane.f32.xlu0 %v3114
    %v3116 = vpop.xlane.xlu0 %3115
    %v3117 = vsel %vm2525, %v2921, 0.0
    %3118 = vadd.xlane.f32.xlu0 %v3117
    %v3119 = vpop.xlane.xlu0 %3118
    %v3120 = vsel %vm2525, %v2923, 0.0
    %3121 = vadd.xlane.f32.xlu0 %v3120
    %v3122 = vpop.xlane.xlu0 %3121
    %v3123 = vsel %vm2525, %v2925, 0.0
    %3124 = vadd.xlane.f32.xlu0 %v3123
    %v3125 = vpop.xlane.xlu0 %3124
    %v3126 = vsel %vm2525, %v2927, 0.0
    %3127 = vadd.xlane.f32.xlu0 %v3126
    %v3128 = vpop.xlane.xlu0 %3127
    %v3129 = vsel %vm2525, %v2929, 0.0
    %3130 = vadd.xlane.f32.xlu0 %v3129
    %v3131 = vpop.xlane.xlu0 %3130
    %v3132 = vsel %vm2525, %v2931, 0.0
    %3133 = vadd.xlane.f32.xlu0 %v3132
    %v3134 = vpop.xlane.xlu0 %3133
    %v3135 = vsel %vm2525, %v2933, 0.0
    %3136 = vadd.xlane.f32.xlu0 %v3135
    %v3137 = vpop.xlane.xlu0 %3136
    %v3138 = vsel %vm2525, %v2935, 0.0
    %3139 = vadd.xlane.f32.xlu0 %v3138
    %v3140 = vpop.xlane.xlu0 %3139
    %v3141 = vsel %vm2525, %v2937, 0.0
    %3142 = vadd.xlane.f32.xlu0 %v3141
    %v3143 = vpop.xlane.xlu0 %3142
    %v3144 = vsel %vm2525, %v2939, 0.0
    %3145 = vadd.xlane.f32.xlu0 %v3144
    %v3146 = vpop.xlane.xlu0 %3145
    %v3147 = vsel %vm2525, %v2941, 0.0
    %3148 = vadd.xlane.f32.xlu0 %v3147
    %v3149 = vpop.xlane.xlu0 %3148
    %v3150 = vsel %vm2525, %v2943, 0.0
    %3151 = vadd.xlane.f32.xlu0 %v3150
    %v3152 = vpop.xlane.xlu0 %3151
    %v3153 = vsel %vm2525, %v2945, 0.0
    %3154 = vadd.xlane.f32.xlu0 %v3153
    %v3155 = vpop.xlane.xlu0 %3154
    %v3156 = vsel %vm2525, %v2947, 0.0
    %3157 = vadd.xlane.f32.xlu0 %v3156
    %v3158 = vpop.xlane.xlu0 %3157
    %v3159 = vsel %vm2525, %v2949, 0.0
    %3160 = vadd.xlane.f32.xlu0 %v3159
    %v3161 = vpop.xlane.xlu0 %3160
    %v3162 = vsel %vm2525, %v2951, 0.0
    %3163 = vadd.xlane.f32.xlu0 %v3162
    %v3164 = vpop.xlane.xlu0 %3163
    %v3165 = vsel %vm2525, %v2953, 0.0
    %3166 = vadd.xlane.f32.xlu0 %v3165
    %v3167 = vpop.xlane.xlu0 %3166
    %v3168 = vsel %vm2525, %v2955, 0.0
    %3169 = vadd.xlane.f32.xlu0 %v3168
    %v3170 = vpop.xlane.xlu0 %3169
    %v3171 = vsel %vm2525, %v2957, 0.0
    %3172 = vadd.xlane.f32.xlu0 %v3171
    %v3173 = vpop.xlane.xlu0 %3172
    %v3174 = vsel %vm2525, %v2959, 0.0
    %3175 = vadd.xlane.f32.xlu0 %v3174
    %v3176 = vpop.xlane.xlu0 %3175
    %v3177 = vsel %vm2525, %v2961, 0.0
    %3178 = vadd.xlane.f32.xlu0 %v3177
    %v3179 = vpop.xlane.xlu0 %3178
    %v3180 = vsel %vm2525, %v2963, 0.0
    %3181 = vadd.xlane.f32.xlu0 %v3180
    %v3182 = vpop.xlane.xlu0 %3181
    %v3183 = vsel %vm2525, %v2965, 0.0
    %3184 = vadd.xlane.f32.xlu0 %v3183
    %v3185 = vpop.xlane.xlu0 %3184
    %v3186 = vsel %vm2525, %v2967, 0.0
    %3187 = vadd.xlane.f32.xlu0 %v3186
    %v3188 = vpop.xlane.xlu0 %3187
    %v3189 = vsel %vm2525, %v2969, 0.0
    %3190 = vadd.xlane.f32.xlu0 %v3189
    %v3191 = vpop.xlane.xlu0 %3190
    %v3192 = vsel %vm2525, %v2971, 0.0
    %3193 = vadd.xlane.f32.xlu0 %v3192
    %v3194 = vpop.xlane.xlu0 %3193
    %v3195 = vsel %vm2525, %v2973, 0.0
    %3196 = vadd.xlane.f32.xlu0 %v3195
    %v3197 = vpop.xlane.xlu0 %3196
    %v3198 = vsel %vm2525, %v2975, 0.0
    %3199 = vadd.xlane.f32.xlu0 %v3198
    %v3200 = vpop.xlane.xlu0 %3199
    %v3201 = vsel %vm2525, %v2977, 0.0
    %3202 = vadd.xlane.f32.xlu0 %v3201
    %v3203 = vpop.xlane.xlu0 %3202
    %v3204 = vsel %vm2525, %v2979, 0.0
    %3205 = vadd.xlane.f32.xlu0 %v3204
    %v3206 = vpop.xlane.xlu0 %3205
    %v3207 = vsel %vm2525, %v2981, 0.0
    %3208 = vadd.xlane.f32.xlu0 %v3207
    %v3209 = vpop.xlane.xlu0 %3208
    %v3210 = vsel %vm2525, %v2983, 0.0
    %3211 = vadd.xlane.f32.xlu0 %v3210
    %v3212 = vpop.xlane.xlu0 %3211
    %v3213 = vsel %vm2525, %v2985, 0.0
    %3214 = vadd.xlane.f32.xlu0 %v3213
    %v3215 = vpop.xlane.xlu0 %3214
    %v3216 = vsel %vm2525, %v2987, 0.0
    %3217 = vadd.xlane.f32.xlu0 %v3216
    %v3218 = vpop.xlane.xlu0 %3217
    %v3219 = vsel %vm2525, %v2989, 0.0
    %3220 = vadd.xlane.f32.xlu0 %v3219
    %v3221 = vpop.xlane.xlu0 %3220
    %v3222 = vsel %vm2525, %v2991, 0.0
    %3223 = vadd.xlane.f32.xlu0 %v3222
    %v3224 = vpop.xlane.xlu0 %3223
    %v3225 = vsel %vm2525, %v2993, 0.0
    %3226 = vadd.xlane.f32.xlu0 %v3225
    %v3227 = vpop.xlane.xlu0 %3226
    %v3228 = vsel %vm2525, %v2995, 0.0
    %3229 = vadd.xlane.f32.xlu0 %v3228
    %v3230 = vpop.xlane.xlu0 %3229
    %v3231 = vsel %vm2525, %v2997, 0.0
    %3232 = vadd.xlane.f32.xlu0 %v3231
    %v3233 = vpop.xlane.xlu0 %3232
    %v3234 = vsel %vm2525, %v2999, 0.0
    %3235 = vadd.xlane.f32.xlu0 %v3234
    %v3236 = vpop.xlane.xlu0 %3235
    %v3237 = vsel %vm2525, %v3001, 0.0
    %3238 = vadd.xlane.f32.xlu0 %v3237
    %v3239 = vpop.xlane.xlu0 %3238
    %v3240 = vsel %vm2525, %v3003, 0.0
    %3241 = vadd.xlane.f32.xlu0 %v3240
    %v3242 = vpop.xlane.xlu0 %3241
    %v3243 = vsel %vm2525, %v3005, 0.0
    %3244 = vadd.xlane.f32.xlu0 %v3243
    %v3245 = vpop.xlane.xlu0 %3244
    %v3246 = vrcp.pop %v3008
    %v3247 = vrcp.pop %v3011
    %v3248 = vrcp.pop %v3014
    %v3249 = vrcp.pop %v3017
    %v3250 = vrcp.pop %v3020
    %v3251 = vrcp.pop %v3023
    %v3252 = vrcp.pop %v3026
    %v3253 = vrcp.pop %v3029
    %v3254 = vrcp.pop %v3032
    %v3255 = vrcp.pop %v3035
    %v3256 = vrcp.pop %v3038
    %v3257 = vrcp.pop %v3041
    %v3258 = vrcp.pop %v3044
    %v3259 = vrcp.pop %v3047
    %v3260 = vrcp.pop %v3050
    %v3261 = vrcp.pop %v3053
    %v3262 = vrcp.pop %v3056
    %v3263 = vrcp.pop %v3059
    %v3264 = vrcp.pop %v3062
    %v3265 = vrcp.pop %v3065
    %v3266 = vrcp.pop %v3068
    %v3267 = vrcp.pop %v3071
    %v3268 = vrcp.pop %v3074
    %v3269 = vrcp.pop %v3077
    %v3270 = vrcp.pop %v3080
    %v3271 = vrcp.pop %v3083
    %v3272 = vrcp.pop %v3086
    %v3273 = vrcp.pop %v3089
    %v3274 = vrcp.pop %v3092
    %v3275 = vrcp.pop %v3095
    %v3276 = vrcp.pop %v3098
    %v3277 = vrcp.pop %v3101
    %v3278 = vrcp.pop %v3104
    %v3279 = vrcp.pop %v3107
    %v3280 = vrcp.pop %v3110
    %v3281 = vrcp.pop %v3113
    %v3282 = vrcp.pop %v3116
    %v3283 = vrcp.pop %v3119
    %v3284 = vrcp.pop %v3122
    %v3285 = vrcp.pop %v3125
    %v3286 = vrcp.pop %v3128
    %v3287 = vrcp.pop %v3131
    %v3288 = vrcp.pop %v3134
    %v3289 = vrcp.pop %v3137
    %v3290 = vrcp.pop %v3140
    %v3291 = vrcp.pop %v3143
    %v3292 = vrcp.pop %v3146
    %v3293 = vrcp.pop %v3149
    %v3294 = vrcp.pop %v3152
    %v3295 = vrcp.pop %v3155
    %v3296 = vrcp.pop %v3158
    %v3297 = vrcp.pop %v3161
    %v3298 = vrcp.pop %v3164
    %v3299 = vrcp.pop %v3167
    %v3300 = vrcp.pop %v3170
    %v3301 = vrcp.pop %v3173
    %v3302 = vrcp.pop %v3176
    %v3303 = vrcp.pop %v3179
    %v3304 = vrcp.pop %v3182
    %v3305 = vrcp.pop %v3185
    %v3306 = vrcp.pop %v3188
    %v3307 = vrcp.pop %v3191
    %v3308 = vrcp.pop %v3194
    %v3309 = vrcp.pop %v3197
    %v3310 = vrcp.pop %v3200
    %v3311 = vrcp.pop %v3203
    %v3312 = vrcp.pop %v3206
    %v3313 = vrcp.pop %v3209
    %v3314 = vrcp.pop %v3212
    %v3315 = vrcp.pop %v3215
    %v3316 = vrcp.pop %v3218
    %v3317 = vrcp.pop %v3221
    %v3318 = vrcp.pop %v3224
    %v3319 = vrcp.pop %v3227
    %v3320 = vrcp.pop %v3230
    %v3321 = vrcp.pop %v3233
    %v3322 = vrcp.pop %v3236
    %v3323 = vrcp.pop %v3239
    %v3324 = vrcp.pop %v3242
    %v3325 = vrcp.pop %v3245
    %v3326 = vmul.f32 %v2847, %v3246
    %v3327 = vmul.f32 %v2849, %v3247
    %v3328 = vmul.f32 %v2851, %v3248
    %v3329 = vmul.f32 %v2853, %v3249
    %v3330 = vmul.f32 %v2855, %v3250
    %v3331 = vmul.f32 %v2857, %v3251
    %v3332 = vmul.f32 %v2859, %v3252
    %v3333 = vmul.f32 %v2861, %v3253
    %v3334 = vmul.f32 %v2863, %v3254
    %v3335 = vmul.f32 %v2865, %v3255
    %v3336 = vmul.f32 %v2867, %v3256
    %v3337 = vmul.f32 %v2869, %v3257
    %v3338 = vmul.f32 %v2871, %v3258
    %v3339 = vmul.f32 %v2873, %v3259
    %v3340 = vmul.f32 %v2875, %v3260
    %v3341 = vmul.f32 %v2877, %v3261
    %v3342 = vmul.f32 %v2879, %v3262
    %v3343 = vmul.f32 %v2881, %v3263
    %v3344 = vmul.f32 %v2883, %v3264
    %v3345 = vmul.f32 %v2885, %v3265
    %v3346 = vmul.f32 %v2887, %v3266
    %v3347 = vmul.f32 %v2889, %v3267
    %v3348 = vmul.f32 %v2891, %v3268
    %v3349 = vmul.f32 %v2893, %v3269
    %v3350 = vmul.f32 %v2895, %v3270
    %v3351 = vmul.f32 %v2897, %v3271
    %v3352 = vmul.f32 %v2899, %v3272
    %v3353 = vmul.f32 %v2901, %v3273
    %v3354 = vmul.f32 %v2903, %v3274
    %v3355 = vmul.f32 %v2905, %v3275
    %v3356 = vmul.f32 %v2907, %v3276
    %v3357 = vmul.f32 %v2909, %v3277
    %v3358 = vmul.f32 %v2911, %v3278
    %v3359 = vmul.f32 %v2913, %v3279
    %v3360 = vmul.f32 %v2915, %v3280
    %v3361 = vmul.f32 %v2917, %v3281
    %v3362 = vmul.f32 %v2919, %v3282
    %v3363 = vmul.f32 %v2921, %v3283
    %v3364 = vmul.f32 %v2923, %v3284
    %v3365 = vmul.f32 %v2925, %v3285
    %v3366 = vmul.f32 %v2927, %v3286
    %v3367 = vmul.f32 %v2929, %v3287
    %v3368 = vmul.f32 %v2931, %v3288
    %v3369 = vmul.f32 %v2933, %v3289
    %v3370 = vmul.f32 %v2935, %v3290
    %v3371 = vmul.f32 %v2937, %v3291
    %v3372 = vmul.f32 %v2939, %v3292
    %v3373 = vmul.f32 %v2941, %v3293
    %v3374 = vmul.f32 %v2943, %v3294
    %v3375 = vmul.f32 %v2945, %v3295
    %v3376 = vmul.f32 %v2947, %v3296
    %v3377 = vmul.f32 %v2949, %v3297
    %v3378 = vmul.f32 %v2951, %v3298
    %v3379 = vmul.f32 %v2953, %v3299
    %v3380 = vmul.f32 %v2955, %v3300
    %v3381 = vmul.f32 %v2957, %v3301
    %v3382 = vmul.f32 %v2959, %v3302
    %v3383 = vmul.f32 %v2961, %v3303
    %v3384 = vmul.f32 %v2963, %v3304
    %v3385 = vmul.f32 %v2965, %v3305
    %v3386 = vmul.f32 %v2967, %v3306
    %v3387 = vmul.f32 %v2969, %v3307
    %v3388 = vmul.f32 %v2971, %v3308
    %v3389 = vmul.f32 %v2973, %v3309
    %v3390 = vmul.f32 %v2975, %v3310
    %v3391 = vmul.f32 %v2977, %v3311
    %v3392 = vmul.f32 %v2979, %v3312
    %v3393 = vmul.f32 %v2981, %v3313
    %v3394 = vmul.f32 %v2983, %v3314
    %v3395 = vmul.f32 %v2985, %v3315
    %v3396 = vmul.f32 %v2987, %v3316
    %v3397 = vmul.f32 %v2989, %v3317
    %v3398 = vmul.f32 %v2991, %v3318
    %v3399 = vmul.f32 %v2993, %v3319
    %v3400 = vmul.f32 %v2995, %v3320
    %v3401 = vmul.f32 %v2997, %v3321
    %v3402 = vmul.f32 %v2999, %v3322
    %v3403 = vmul.f32 %v3001, %v3323
    %v3404 = vmul.f32 %v3003, %v3324
    %v3405 = vmul.f32 %v3005, %v3325
    %v3407 = vsel %vm2525, %v3326, 0
    %v3410 = vsel %vm2525, %v3327, 0
    %v3413 = vsel %vm2525, %v3328, 0
    %v3416 = vsel %vm2525, %v3329, 0
    %v3419 = vsel %vm2525, %v3330, 0
    %3421 = vmatprep.subr.mxu0 0.0
    %3422 = vmatpush1.msra.mxu0 %v316
    %3423 = vmatprep.subr.mxu0 0.0
    %3424 = vmatpush1.msra.mxu0 %v317
    %3425 = vmatprep.subr.mxu0 0.0
    %3426 = vmatpush1.msra.mxu0 %v318
    %3427 = vmatprep.subr.mxu0 0.0
    %3428 = vmatpush1.msra.mxu0 %v319
    %3429 = vmatprep.subr.mxu0 0.0
    %3430 = vmatpush1.msra.mxu0 %v320
    %3431 = vmatprep.subr.mxu0 0.0
    %3432 = vmatpush1.msra.mxu0 0.0
    %3433 = vmatprep.subr.mxu0 0.0
    %3434 = vmatpush1.msra.mxu0 0.0
    %3435 = vmatprep.subr.mxu0 0.0
    %3436 = vmatpush1.msra.mxu0 0.0
    %3437 = vmatprep.subr.mxu0 0.0
    %3438 = vmatpush1.msra.mxu0 0.0
    %3439 = vmatprep.subr.mxu0 0.0
    %3440 = vmatpush1.msra.mxu0 0.0
    %3441 = vmatprep.subr.mxu0 0.0
    %3442 = vmatpush1.msra.mxu0 0.0
    %3443 = vmatprep.subr.mxu0 0.0
    %3444 = vmatpush1.msra.mxu0 0.0
    %3445 = vmatprep.subr.mxu0 0.0
    %3446 = vmatpush1.msra.mxu0 0.0
    %3447 = vmatprep.subr.mxu0 0.0
    %3448 = vmatpush1.msra.mxu0 0.0
    %3449 = vmatprep.subr.mxu0 0.0
    %3450 = vmatpush1.msra.mxu0 0.0
    %3451 = vmatprep.subr.mxu0 0.0
    %3452 = vmatpush1.msra.mxu0 0.0
    %3453 = vmatprep.subr.mxu0 0.0
    %3454 = vmatpush1.msra.mxu0 0.0
    %3455 = vmatprep.subr.mxu0 0.0
    %3456 = vmatpush1.msra.mxu0 0.0
    %3457 = vmatprep.subr.mxu0 0.0
    %3458 = vmatpush1.msra.mxu0 0.0
    %3459 = vmatprep.subr.mxu0 0.0
    %3460 = vmatpush1.msra.mxu0 0.0
    %3461 = vmatprep.subr.mxu0 0.0
    %3462 = vmatpush1.msra.mxu0 0.0
    %3463 = vmatprep.subr.mxu0 0.0
    %3464 = vmatpush1.msra.mxu0 0.0
    %3465 = vmatprep.subr.mxu0 0.0
    %3466 = vmatpush1.msra.mxu0 0.0
    %3467 = vmatprep.subr.mxu0 0.0
    %3468 = vmatpush1.msra.mxu0 0.0
    %3469 = vmatprep.subr.mxu0 0.0
    %3470 = vmatpush1.msra.mxu0 0.0
    %3471 = vmatprep.subr.mxu0 0.0
    %3472 = vmatpush1.msra.mxu0 0.0
    %3473 = vmatprep.subr.mxu0 0.0
    %3474 = vmatpush1.msra.mxu0 0.0
    %3475 = vmatprep.subr.mxu0 0.0
    %3476 = vmatpush1.msra.mxu0 0.0
    %3477 = vmatprep.subr.mxu0 0.0
    %3478 = vmatpush1.msra.mxu0 0.0
    %3479 = vmatprep.subr.mxu0 0.0
    %3480 = vmatpush1.msra.mxu0 0.0
    %3481 = vmatprep.subr.mxu0 0.0
    %3482 = vmatpush1.msra.mxu0 0.0
    %3483 = vmatprep.subr.mxu0 0.0
    %3484 = vmatpush1.msra.mxu0 0.0
    %3485 = vmatprep.mubr.f32.mxu0 0.0
    %3486 = vmatmul.mubr.f32.gmra.mrb[0].mxu0 %v3407
    %v3487 = vpop.f32.mrb[0].mxu0
    %v3488 = vadd.f32 0.0, %v3487
    %v3489 = vpop.f32.mrb[0].mxu0
    %3490 = vmatprep.mubr.f32.mxu0 0.0
    %3491 = vmatmul.mubr.f32.gmra.mrb[0].mxu0 %v3410
    %v3492 = vpop.f32.mrb[0].mxu0
    %v3493 = vadd.f32 0.0, %v3492
    %v3494 = vpop.f32.mrb[0].mxu0
    %3495 = vmatprep.mubr.f32.mxu0 0.0
    %3496 = vmatmul.mubr.f32.gmra.mrb[0].mxu0 %v3413
    %v3497 = vpop.f32.mrb[0].mxu0
    %v3498 = vadd.f32 0.0, %v3497
    %v3499 = vpop.f32.mrb[0].mxu0
    %3500 = vmatprep.mubr.f32.mxu0 0.0
    %3501 = vmatmul.mubr.f32.gmra.mrb[0].mxu0 %v3416
    %v3502 = vpop.f32.mrb[0].mxu0
    %v3503 = vadd.f32 0.0, %v3502
    %v3504 = vpop.f32.mrb[0].mxu0
    %3505 = vmatprep.mubr.f32.mxu0 0.0
    %3506 = vmatmul.mubr.f32.gmra.mrb[0].mxu0 %v3419
    %v3507 = vpop.f32.mrb[0].mxu0
    %v3508 = vadd.f32 0.0, %v3507
    %v3509 = vpop.f32.mrb[0].mxu0
    %3510 = vdwg.mxu0
    %v3512 = vsel %vm2525, %v3331, 0
    %v3515 = vsel %vm2525, %v3332, 0
    %v3518 = vsel %vm2525, %v3333, 0
    %v3521 = vsel %vm2525, %v3334, 0
    %v3524 = vsel %vm2525, %v3335, 0
    %3526 = vmatprep.subr.mxu0 0.0
    %3527 = vmatpush1.msra.mxu0 %v321
    %3528 = vmatprep.subr.mxu0 0.0
    %3529 = vmatpush1.msra.mxu0 %v322
    %3530 = vmatprep.subr.mxu0 0.0
    %3531 = vmatpush1.msra.mxu0 %v323
    %3532 = vmatprep.subr.mxu0 0.0
    %3533 = vmatpush1.msra.mxu0 %v324
    %3534 = vmatprep.subr.mxu0 0.0
    %3535 = vmatpush1.msra.mxu0 %v325
    %3536 = vmatprep.subr.mxu0 0.0
    %3537 = vmatpush1.msra.mxu0 0.0
    %3538 = vmatprep.subr.mxu0 0.0
    %3539 = vmatpush1.msra.mxu0 0.0
    %3540 = vmatprep.subr.mxu0 0.0
    %3541 = vmatpush1.msra.mxu0 0.0
    %3542 = vmatprep.subr.mxu0 0.0
    %3543 = vmatpush1.msra.mxu0 0.0
    %3544 = vmatprep.subr.mxu0 0.0
    %3545 = vmatpush1.msra.mxu0 0.0
    %3546 = vmatprep.subr.mxu0 0.0
    %3547 = vmatpush1.msra.mxu0 0.0
    %3548 = vmatprep.subr.mxu0 0.0
    %3549 = vmatpush1.msra.mxu0 0.0
    %3550 = vmatprep.subr.mxu0 0.0
    %3551 = vmatpush1.msra.mxu0 0.0
    %3552 = vmatprep.subr.mxu0 0.0
    %3553 = vmatpush1.msra.mxu0 0.0
    %3554 = vmatprep.subr.mxu0 0.0
    %3555 = vmatpush1.msra.mxu0 0.0
    %3556 = vmatprep.subr.mxu0 0.0
    %3557 = vmatpush1.msra.mxu0 0.0
    %3558 = vmatprep.subr.mxu0 0.0
    %3559 = vmatpush1.msra.mxu0 0.0
    %3560 = vmatprep.subr.mxu0 0.0
    %3561 = vmatpush1.msra.mxu0 0.0
    %3562 = vmatprep.subr.mxu0 0.0
    %3563 = vmatpush1.msra.mxu0 0.0
    %3564 = vmatprep.subr.mxu0 0.0
    %3565 = vmatpush1.msra.mxu0 0.0
    %3566 = vmatprep.subr.mxu0 0.0
    %3567 = vmatpush1.msra.mxu0 0.0
    %3568 = vmatprep.subr.mxu0 0.0
    %3569 = vmatpush1.msra.mxu0 0.0
    %3570 = vmatprep.subr.mxu0 0.0
    %3571 = vmatpush1.msra.mxu0 0.0
    %3572 = vmatprep.subr.mxu0 0.0
    %3573 = vmatpush1.msra.mxu0 0.0
    %3574 = vmatprep.subr.mxu0 0.0
    %3575 = vmatpush1.msra.mxu0 0.0
    %3576 = vmatprep.subr.mxu0 0.0
    %3577 = vmatpush1.msra.mxu0 0.0
    %3578 = vmatprep.subr.mxu0 0.0
    %3579 = vmatpush1.msra.mxu0 0.0
    %3580 = vmatprep.subr.mxu0 0.0
    %3581 = vmatpush1.msra.mxu0 0.0
    %3582 = vmatprep.subr.mxu0 0.0
    %3583 = vmatpush1.msra.mxu0 0.0
    %3584 = vmatprep.subr.mxu0 0.0
    %3585 = vmatpush1.msra.mxu0 0.0
    %3586 = vmatprep.subr.mxu0 0.0
    %3587 = vmatpush1.msra.mxu0 0.0
    %3588 = vmatprep.subr.mxu0 0.0
    %3589 = vmatpush1.msra.mxu0 0.0
    %3590 = vmatprep.mubr.f32.mxu0 0.0
    %3591 = vmatmul.mubr.f32.gmra.mrb[0].mxu0 %v3512
    %v3592 = vpop.f32.mrb[0].mxu0
    %v3593 = vadd.f32 0.0, %v3592
    %v3594 = vpop.f32.mrb[0].mxu0
    %3595 = vmatprep.mubr.f32.mxu0 0.0
    %3596 = vmatmul.mubr.f32.gmra.mrb[0].mxu0 %v3515
    %v3597 = vpop.f32.mrb[0].mxu0
    %v3598 = vadd.f32 0.0, %v3597
    %v3599 = vpop.f32.mrb[0].mxu0
    %3600 = vmatprep.mubr.f32.mxu0 0.0
    %3601 = vmatmul.mubr.f32.gmra.mrb[0].mxu0 %v3518
    %v3602 = vpop.f32.mrb[0].mxu0
    %v3603 = vadd.f32 0.0, %v3602
    %v3604 = vpop.f32.mrb[0].mxu0
    %3605 = vmatprep.mubr.f32.mxu0 0.0
    %3606 = vmatmul.mubr.f32.gmra.mrb[0].mxu0 %v3521
    %v3607 = vpop.f32.mrb[0].mxu0
    %v3608 = vadd.f32 0.0, %v3607
    %v3609 = vpop.f32.mrb[0].mxu0
    %3610 = vmatprep.mubr.f32.mxu0 0.0
    %3611 = vmatmul.mubr.f32.gmra.mrb[0].mxu0 %v3524
    %v3612 = vpop.f32.mrb[0].mxu0
    %v3613 = vadd.f32 0.0, %v3612
    %v3614 = vpop.f32.mrb[0].mxu0
    %3615 = vdwg.mxu0
    %v3617 = vsel %vm2525, %v3336, 0
    %v3620 = vsel %vm2525, %v3337, 0
    %v3623 = vsel %vm2525, %v3338, 0
    %v3626 = vsel %vm2525, %v3339, 0
    %v3629 = vsel %vm2525, %v3340, 0
    %3631 = vmatprep.subr.mxu0 0.0
    %3632 = vmatpush1.msra.mxu0 %v326
    %3633 = vmatprep.subr.mxu0 0.0
    %3634 = vmatpush1.msra.mxu0 %v327
    %3635 = vmatprep.subr.mxu0 0.0
    %3636 = vmatpush1.msra.mxu0 %v328
    %3637 = vmatprep.subr.mxu0 0.0
    %3638 = vmatpush1.msra.mxu0 %v329
    %3639 = vmatprep.subr.mxu0 0.0
    %3640 = vmatpush1.msra.mxu0 %v330
    %3641 = vmatprep.subr.mxu0 0.0
    %3642 = vmatpush1.msra.mxu0 0.0
    %3643 = vmatprep.subr.mxu0 0.0
    %3644 = vmatpush1.msra.mxu0 0.0
    %3645 = vmatprep.subr.mxu0 0.0
    %3646 = vmatpush1.msra.mxu0 0.0
    %3647 = vmatprep.subr.mxu0 0.0
    %3648 = vmatpush1.msra.mxu0 0.0
    %3649 = vmatprep.subr.mxu0 0.0
    %3650 = vmatpush1.msra.mxu0 0.0
    %3651 = vmatprep.subr.mxu0 0.0
    %3652 = vmatpush1.msra.mxu0 0.0
    %3653 = vmatprep.subr.mxu0 0.0
    %3654 = vmatpush1.msra.mxu0 0.0
    %3655 = vmatprep.subr.mxu0 0.0
    %3656 = vmatpush1.msra.mxu0 0.0
    %3657 = vmatprep.subr.mxu0 0.0
    %3658 = vmatpush1.msra.mxu0 0.0
    %3659 = vmatprep.subr.mxu0 0.0
    %3660 = vmatpush1.msra.mxu0 0.0
    %3661 = vmatprep.subr.mxu0 0.0
    %3662 = vmatpush1.msra.mxu0 0.0
    %3663 = vmatprep.subr.mxu0 0.0
    %3664 = vmatpush1.msra.mxu0 0.0
    %3665 = vmatprep.subr.mxu0 0.0
    %3666 = vmatpush1.msra.mxu0 0.0
    %3667 = vmatprep.subr.mxu0 0.0
    %3668 = vmatpush1.msra.mxu0 0.0
    %3669 = vmatprep.subr.mxu0 0.0
    %3670 = vmatpush1.msra.mxu0 0.0
    %3671 = vmatprep.subr.mxu0 0.0
    %3672 = vmatpush1.msra.mxu0 0.0
    %3673 = vmatprep.subr.mxu0 0.0
    %3674 = vmatpush1.msra.mxu0 0.0
    %3675 = vmatprep.subr.mxu0 0.0
    %3676 = vmatpush1.msra.mxu0 0.0
    %3677 = vmatprep.subr.mxu0 0.0
    %3678 = vmatpush1.msra.mxu0 0.0
    %3679 = vmatprep.subr.mxu0 0.0
    %3680 = vmatpush1.msra.mxu0 0.0
    %3681 = vmatprep.subr.mxu0 0.0
    %3682 = vmatpush1.msra.mxu0 0.0
    %3683 = vmatprep.subr.mxu0 0.0
    %3684 = vmatpush1.msra.mxu0 0.0
    %3685 = vmatprep.subr.mxu0 0.0
    %3686 = vmatpush1.msra.mxu0 0.0
    %3687 = vmatprep.subr.mxu0 0.0
    %3688 = vmatpush1.msra.mxu0 0.0
    %3689 = vmatprep.subr.mxu0 0.0
    %3690 = vmatpush1.msra.mxu0 0.0
    %3691 = vmatprep.subr.mxu0 0.0
    %3692 = vmatpush1.msra.mxu0 0.0
    %3693 = vmatprep.subr.mxu0 0.0
    %3694 = vmatpush1.msra.mxu0 0.0
    %3695 = vmatprep.mubr.f32.mxu0 0.0
    %3696 = vmatmul.mubr.f32.gmra.mrb[0].mxu0 %v3617
    %v3697 = vpop.f32.mrb[0].mxu0
    %v3698 = vadd.f32 0.0, %v3697
    %v3699 = vpop.f32.mrb[0].mxu0
    %3700 = vmatprep.mubr.f32.mxu0 0.0
    %3701 = vmatmul.mubr.f32.gmra.mrb[0].mxu0 %v3620
    %v3702 = vpop.f32.mrb[0].mxu0
    %v3703 = vadd.f32 0.0, %v3702
    %v3704 = vpop.f32.mrb[0].mxu0
    %3705 = vmatprep.mubr.f32.mxu0 0.0
    %3706 = vmatmul.mubr.f32.gmra.mrb[0].mxu0 %v3623
    %v3707 = vpop.f32.mrb[0].mxu0
    %v3708 = vadd.f32 0.0, %v3707
    %v3709 = vpop.f32.mrb[0].mxu0
    %3710 = vmatprep.mubr.f32.mxu0 0.0
    %3711 = vmatmul.mubr.f32.gmra.mrb[0].mxu0 %v3626
    %v3712 = vpop.f32.mrb[0].mxu0
    %v3713 = vadd.f32 0.0, %v3712
    %v3714 = vpop.f32.mrb[0].mxu0
    %3715 = vmatprep.mubr.f32.mxu0 0.0
    %3716 = vmatmul.mubr.f32.gmra.mrb[0].mxu0 %v3629
    %v3717 = vpop.f32.mrb[0].mxu0
    %v3718 = vadd.f32 0.0, %v3717
    %v3719 = vpop.f32.mrb[0].mxu0
    %3720 = vdwg.mxu0
    %v3722 = vsel %vm2525, %v3341, 0
    %v3725 = vsel %vm2525, %v3342, 0
    %v3728 = vsel %vm2525, %v3343, 0
    %v3731 = vsel %vm2525, %v3344, 0
    %v3734 = vsel %vm2525, %v3345, 0
    %3736 = vmatprep.subr.mxu0 0.0
    %3737 = vmatpush1.msra.mxu0 %v331
    %3738 = vmatprep.subr.mxu0 0.0
    %3739 = vmatpush1.msra.mxu0 %v332
    %3740 = vmatprep.subr.mxu0 0.0
    %3741 = vmatpush1.msra.mxu0 %v333
    %3742 = vmatprep.subr.mxu0 0.0
    %3743 = vmatpush1.msra.mxu0 %v334
    %3744 = vmatprep.subr.mxu0 0.0
    %3745 = vmatpush1.msra.mxu0 %v335
    %3746 = vmatprep.subr.mxu0 0.0
    %3747 = vmatpush1.msra.mxu0 0.0
    %3748 = vmatprep.subr.mxu0 0.0
    %3749 = vmatpush1.msra.mxu0 0.0
    %3750 = vmatprep.subr.mxu0 0.0
    %3751 = vmatpush1.msra.mxu0 0.0
    %3752 = vmatprep.subr.mxu0 0.0
    %3753 = vmatpush1.msra.mxu0 0.0
    %3754 = vmatprep.subr.mxu0 0.0
    %3755 = vmatpush1.msra.mxu0 0.0
    %3756 = vmatprep.subr.mxu0 0.0
    %3757 = vmatpush1.msra.mxu0 0.0
    %3758 = vmatprep.subr.mxu0 0.0
    %3759 = vmatpush1.msra.mxu0 0.0
    %3760 = vmatprep.subr.mxu0 0.0
    %3761 = vmatpush1.msra.mxu0 0.0
    %3762 = vmatprep.subr.mxu0 0.0
    %3763 = vmatpush1.msra.mxu0 0.0
    %3764 = vmatprep.subr.mxu0 0.0
    %3765 = vmatpush1.msra.mxu0 0.0
    %3766 = vmatprep.subr.mxu0 0.0
    %3767 = vmatpush1.msra.mxu0 0.0
    %3768 = vmatprep.subr.mxu0 0.0
    %3769 = vmatpush1.msra.mxu0 0.0
    %3770 = vmatprep.subr.mxu0 0.0
    %3771 = vmatpush1.msra.mxu0 0.0
    %3772 = vmatprep.subr.mxu0 0.0
    %3773 = vmatpush1.msra.mxu0 0.0
    %3774 = vmatprep.subr.mxu0 0.0
    %3775 = vmatpush1.msra.mxu0 0.0
    %3776 = vmatprep.subr.mxu0 0.0
    %3777 = vmatpush1.msra.mxu0 0.0
    %3778 = vmatprep.subr.mxu0 0.0
    %3779 = vmatpush1.msra.mxu0 0.0
    %3780 = vmatprep.subr.mxu0 0.0
    %3781 = vmatpush1.msra.mxu0 0.0
    %3782 = vmatprep.subr.mxu0 0.0
    %3783 = vmatpush1.msra.mxu0 0.0
    %3784 = vmatprep.subr.mxu0 0.0
    %3785 = vmatpush1.msra.mxu0 0.0
    %3786 = vmatprep.subr.mxu0 0.0
    %3787 = vmatpush1.msra.mxu0 0.0
    %3788 = vmatprep.subr.mxu0 0.0
    %3789 = vmatpush1.msra.mxu0 0.0
    %3790 = vmatprep.subr.mxu0 0.0
    %3791 = vmatpush1.msra.mxu0 0.0
    %3792 = vmatprep.subr.mxu0 0.0
    %3793 = vmatpush1.msra.mxu0 0.0
    %3794 = vmatprep.subr.mxu0 0.0
    %3795 = vmatpush1.msra.mxu0 0.0
    %3796 = vmatprep.subr.mxu0 0.0
    %3797 = vmatpush1.msra.mxu0 0.0
    %3798 = vmatprep.subr.mxu0 0.0
    %3799 = vmatpush1.msra.mxu0 0.0
    %3800 = vmatprep.mubr.f32.mxu0 0.0
    %3801 = vmatmul.mubr.f32.gmra.mrb[0].mxu0 %v3722
    %v3802 = vpop.f32.mrb[0].mxu0
    %v3803 = vadd.f32 0.0, %v3802
    %v3804 = vpop.f32.mrb[0].mxu0
    %3805 = vmatprep.mubr.f32.mxu0 0.0
    %3806 = vmatmul.mubr.f32.gmra.mrb[0].mxu0 %v3725
    %v3807 = vpop.f32.mrb[0].mxu0
    %v3808 = vadd.f32 0.0, %v3807
    %v3809 = vpop.f32.mrb[0].mxu0
    %3810 = vmatprep.mubr.f32.mxu0 0.0
    %3811 = vmatmul.mubr.f32.gmra.mrb[0].mxu0 %v3728
    %v3812 = vpop.f32.mrb[0].mxu0
    %v3813 = vadd.f32 0.0, %v3812
    %v3814 = vpop.f32.mrb[0].mxu0
    %3815 = vmatprep.mubr.f32.mxu0 0.0
    %3816 = vmatmul.mubr.f32.gmra.mrb[0].mxu0 %v3731
    %v3817 = vpop.f32.mrb[0].mxu0
    %v3818 = vadd.f32 0.0, %v3817
    %v3819 = vpop.f32.mrb[0].mxu0
    %3820 = vmatprep.mubr.f32.mxu0 0.0
    %3821 = vmatmul.mubr.f32.gmra.mrb[0].mxu0 %v3734
    %v3822 = vpop.f32.mrb[0].mxu0
    %v3823 = vadd.f32 0.0, %v3822
    %v3824 = vpop.f32.mrb[0].mxu0
    %3825 = vdwg.mxu0
    %v3827 = vsel %vm2525, %v3346, 0
    %v3830 = vsel %vm2525, %v3347, 0
    %v3833 = vsel %vm2525, %v3348, 0
    %v3836 = vsel %vm2525, %v3349, 0
    %v3839 = vsel %vm2525, %v3350, 0
    %3841 = vmatprep.subr.mxu0 0.0
    %3842 = vmatpush1.msra.mxu0 %v336
    %3843 = vmatprep.subr.mxu0 0.0
    %3844 = vmatpush1.msra.mxu0 %v337
    %3845 = vmatprep.subr.mxu0 0.0
    %3846 = vmatpush1.msra.mxu0 %v338
    %3847 = vmatprep.subr.mxu0 0.0
    %3848 = vmatpush1.msra.mxu0 %v339
    %3849 = vmatprep.subr.mxu0 0.0
    %3850 = vmatpush1.msra.mxu0 %v340
    %3851 = vmatprep.subr.mxu0 0.0
    %3852 = vmatpush1.msra.mxu0 0.0
    %3853 = vmatprep.subr.mxu0 0.0
    %3854 = vmatpush1.msra.mxu0 0.0
    %3855 = vmatprep.subr.mxu0 0.0
    %3856 = vmatpush1.msra.mxu0 0.0
    %3857 = vmatprep.subr.mxu0 0.0
    %3858 = vmatpush1.msra.mxu0 0.0
    %3859 = vmatprep.subr.mxu0 0.0
    %3860 = vmatpush1.msra.mxu0 0.0
    %3861 = vmatprep.subr.mxu0 0.0
    %3862 = vmatpush1.msra.mxu0 0.0
    %3863 = vmatprep.subr.mxu0 0.0
    %3864 = vmatpush1.msra.mxu0 0.0
    %3865 = vmatprep.subr.mxu0 0.0
    %3866 = vmatpush1.msra.mxu0 0.0
    %3867 = vmatprep.subr.mxu0 0.0
    %3868 = vmatpush1.msra.mxu0 0.0
    %3869 = vmatprep.subr.mxu0 0.0
    %3870 = vmatpush1.msra.mxu0 0.0
    %3871 = vmatprep.subr.mxu0 0.0
    %3872 = vmatpush1.msra.mxu0 0.0
    %3873 = vmatprep.subr.mxu0 0.0
    %3874 = vmatpush1.msra.mxu0 0.0
    %3875 = vmatprep.subr.mxu0 0.0
    %3876 = vmatpush1.msra.mxu0 0.0
    %3877 = vmatprep.subr.mxu0 0.0
    %3878 = vmatpush1.msra.mxu0 0.0
    %3879 = vmatprep.subr.mxu0 0.0
    %3880 = vmatpush1.msra.mxu0 0.0
    %3881 = vmatprep.subr.mxu0 0.0
    %3882 = vmatpush1.msra.mxu0 0.0
    %3883 = vmatprep.subr.mxu0 0.0
    %3884 = vmatpush1.msra.mxu0 0.0
    %3885 = vmatprep.subr.mxu0 0.0
    %3886 = vmatpush1.msra.mxu0 0.0
    %3887 = vmatprep.subr.mxu0 0.0
    %3888 = vmatpush1.msra.mxu0 0.0
    %3889 = vmatprep.subr.mxu0 0.0
    %3890 = vmatpush1.msra.mxu0 0.0
    %3891 = vmatprep.subr.mxu0 0.0
    %3892 = vmatpush1.msra.mxu0 0.0
    %3893 = vmatprep.subr.mxu0 0.0
    %3894 = vmatpush1.msra.mxu0 0.0
    %3895 = vmatprep.subr.mxu0 0.0
    %3896 = vmatpush1.msra.mxu0 0.0
    %3897 = vmatprep.subr.mxu0 0.0
    %3898 = vmatpush1.msra.mxu0 0.0
    %3899 = vmatprep.subr.mxu0 0.0
    %3900 = vmatpush1.msra.mxu0 0.0
    %3901 = vmatprep.subr.mxu0 0.0
    %3902 = vmatpush1.msra.mxu0 0.0
    %3903 = vmatprep.subr.mxu0 0.0
    %3904 = vmatpush1.msra.mxu0 0.0
    %3905 = vmatprep.mubr.f32.mxu0 0.0
    %3906 = vmatmul.mubr.f32.gmra.mrb[0].mxu0 %v3827
    %v3907 = vpop.f32.mrb[0].mxu0
    %v3908 = vadd.f32 0.0, %v3907
    %v3909 = vpop.f32.mrb[0].mxu0
    %3910 = vmatprep.mubr.f32.mxu0 0.0
    %3911 = vmatmul.mubr.f32.gmra.mrb[0].mxu0 %v3830
    %v3912 = vpop.f32.mrb[0].mxu0
    %v3913 = vadd.f32 0.0, %v3912
    %v3914 = vpop.f32.mrb[0].mxu0
    %3915 = vmatprep.mubr.f32.mxu0 0.0
    %3916 = vmatmul.mubr.f32.gmra.mrb[0].mxu0 %v3833
    %v3917 = vpop.f32.mrb[0].mxu0
    %v3918 = vadd.f32 0.0, %v3917
    %v3919 = vpop.f32.mrb[0].mxu0
    %3920 = vmatprep.mubr.f32.mxu0 0.0
    %3921 = vmatmul.mubr.f32.gmra.mrb[0].mxu0 %v3836
    %v3922 = vpop.f32.mrb[0].mxu0
    %v3923 = vadd.f32 0.0, %v3922
    %v3924 = vpop.f32.mrb[0].mxu0
    %3925 = vmatprep.mubr.f32.mxu0 0.0
    %3926 = vmatmul.mubr.f32.gmra.mrb[0].mxu0 %v3839
    %v3927 = vpop.f32.mrb[0].mxu0
    %v3928 = vadd.f32 0.0, %v3927
    %v3929 = vpop.f32.mrb[0].mxu0
    %3930 = vdwg.mxu0
    %v3932 = vsel %vm2525, %v3351, 0
    %v3935 = vsel %vm2525, %v3352, 0
    %v3938 = vsel %vm2525, %v3353, 0
    %v3941 = vsel %vm2525, %v3354, 0
    %v3944 = vsel %vm2525, %v3355, 0
    %3946 = vmatprep.subr.mxu0 0.0
    %3947 = vmatpush1.msra.mxu0 %v341
    %3948 = vmatprep.subr.mxu0 0.0
    %3949 = vmatpush1.msra.mxu0 %v342
    %3950 = vmatprep.subr.mxu0 0.0
    %3951 = vmatpush1.msra.mxu0 %v343
    %3952 = vmatprep.subr.mxu0 0.0
    %3953 = vmatpush1.msra.mxu0 %v344
    %3954 = vmatprep.subr.mxu0 0.0
    %3955 = vmatpush1.msra.mxu0 %v345
    %3956 = vmatprep.subr.mxu0 0.0
    %3957 = vmatpush1.msra.mxu0 0.0
    %3958 = vmatprep.subr.mxu0 0.0
    %3959 = vmatpush1.msra.mxu0 0.0
    %3960 = vmatprep.subr.mxu0 0.0
    %3961 = vmatpush1.msra.mxu0 0.0
    %3962 = vmatprep.subr.mxu0 0.0
    %3963 = vmatpush1.msra.mxu0 0.0
    %3964 = vmatprep.subr.mxu0 0.0
    %3965 = vmatpush1.msra.mxu0 0.0
    %3966 = vmatprep.subr.mxu0 0.0
    %3967 = vmatpush1.msra.mxu0 0.0
    %3968 = vmatprep.subr.mxu0 0.0
    %3969 = vmatpush1.msra.mxu0 0.0
    %3970 = vmatprep.subr.mxu0 0.0
    %3971 = vmatpush1.msra.mxu0 0.0
    %3972 = vmatprep.subr.mxu0 0.0
    %3973 = vmatpush1.msra.mxu0 0.0
    %3974 = vmatprep.subr.mxu0 0.0
    %3975 = vmatpush1.msra.mxu0 0.0
    %3976 = vmatprep.subr.mxu0 0.0
    %3977 = vmatpush1.msra.mxu0 0.0
    %3978 = vmatprep.subr.mxu0 0.0
    %3979 = vmatpush1.msra.mxu0 0.0
    %3980 = vmatprep.subr.mxu0 0.0
    %3981 = vmatpush1.msra.mxu0 0.0
    %3982 = vmatprep.subr.mxu0 0.0
    %3983 = vmatpush1.msra.mxu0 0.0
    %3984 = vmatprep.subr.mxu0 0.0
    %3985 = vmatpush1.msra.mxu0 0.0
    %3986 = vmatprep.subr.mxu0 0.0
    %3987 = vmatpush1.msra.mxu0 0.0
    %3988 = vmatprep.subr.mxu0 0.0
    %3989 = vmatpush1.msra.mxu0 0.0
    %3990 = vmatprep.subr.mxu0 0.0
    %3991 = vmatpush1.msra.mxu0 0.0
    %3992 = vmatprep.subr.mxu0 0.0
    %3993 = vmatpush1.msra.mxu0 0.0
    %3994 = vmatprep.subr.mxu0 0.0
    %3995 = vmatpush1.msra.mxu0 0.0
    %3996 = vmatprep.subr.mxu0 0.0
    %3997 = vmatpush1.msra.mxu0 0.0
    %3998 = vmatprep.subr.mxu0 0.0
    %3999 = vmatpush1.msra.mxu0 0.0
    %4000 = vmatprep.subr.mxu0 0.0
    %4001 = vmatpush1.msra.mxu0 0.0
    %4002 = vmatprep.subr.mxu0 0.0
    %4003 = vmatpush1.msra.mxu0 0.0
    %4004 = vmatprep.subr.mxu0 0.0
    %4005 = vmatpush1.msra.mxu0 0.0
    %4006 = vmatprep.subr.mxu0 0.0
    %4007 = vmatpush1.msra.mxu0 0.0
    %4008 = vmatprep.subr.mxu0 0.0
    %4009 = vmatpush1.msra.mxu0 0.0
    %4010 = vmatprep.mubr.f32.mxu0 0.0
    %4011 = vmatmul.mubr.f32.gmra.mrb[0].mxu0 %v3932
    %v4012 = vpop.f32.mrb[0].mxu0
    %v4013 = vadd.f32 0.0, %v4012
    %v4014 = vpop.f32.mrb[0].mxu0
    %4015 = vmatprep.mubr.f32.mxu0 0.0
    %4016 = vmatmul.mubr.f32.gmra.mrb[0].mxu0 %v3935
    %v4017 = vpop.f32.mrb[0].mxu0
    %v4018 = vadd.f32 0.0, %v4017
    %v4019 = vpop.f32.mrb[0].mxu0
    %4020 = vmatprep.mubr.f32.mxu0 0.0
    %4021 = vmatmul.mubr.f32.gmra.mrb[0].mxu0 %v3938
    %v4022 = vpop.f32.mrb[0].mxu0
    %v4023 = vadd.f32 0.0, %v4022
    %v4024 = vpop.f32.mrb[0].mxu0
    %4025 = vmatprep.mubr.f32.mxu0 0.0
    %4026 = vmatmul.mubr.f32.gmra.mrb[0].mxu0 %v3941
    %v4027 = vpop.f32.mrb[0].mxu0
    %v4028 = vadd.f32 0.0, %v4027
    %v4029 = vpop.f32.mrb[0].mxu0
    %4030 = vmatprep.mubr.f32.mxu0 0.0
    %4031 = vmatmul.mubr.f32.gmra.mrb[0].mxu0 %v3944
    %v4032 = vpop.f32.mrb[0].mxu0
    %v4033 = vadd.f32 0.0, %v4032
    %v4034 = vpop.f32.mrb[0].mxu0
    %4035 = vdwg.mxu0
    %v4037 = vsel %vm2525, %v3356, 0
    %v4040 = vsel %vm2525, %v3357, 0
    %v4043 = vsel %vm2525, %v3358, 0
    %v4046 = vsel %vm2525, %v3359, 0
    %v4049 = vsel %vm2525, %v3360, 0
    %4051 = vmatprep.subr.mxu0 0.0
    %4052 = vmatpush1.msra.mxu0 %v346
    %4053 = vmatprep.subr.mxu0 0.0
    %4054 = vmatpush1.msra.mxu0 %v347
    %4055 = vmatprep.subr.mxu0 0.0
    %4056 = vmatpush1.msra.mxu0 %v348
    %4057 = vmatprep.subr.mxu0 0.0
    %4058 = vmatpush1.msra.mxu0 %v349
    %4059 = vmatprep.subr.mxu0 0.0
    %4060 = vmatpush1.msra.mxu0 %v350
    %4061 = vmatprep.subr.mxu0 0.0
    %4062 = vmatpush1.msra.mxu0 0.0
    %4063 = vmatprep.subr.mxu0 0.0
    %4064 = vmatpush1.msra.mxu0 0.0
    %4065 = vmatprep.subr.mxu0 0.0
    %4066 = vmatpush1.msra.mxu0 0.0
    %4067 = vmatprep.subr.mxu0 0.0
    %4068 = vmatpush1.msra.mxu0 0.0
    %4069 = vmatprep.subr.mxu0 0.0
    %4070 = vmatpush1.msra.mxu0 0.0
    %4071 = vmatprep.subr.mxu0 0.0
    %4072 = vmatpush1.msra.mxu0 0.0
    %4073 = vmatprep.subr.mxu0 0.0
    %4074 = vmatpush1.msra.mxu0 0.0
    %4075 = vmatprep.subr.mxu0 0.0
    %4076 = vmatpush1.msra.mxu0 0.0
    %4077 = vmatprep.subr.mxu0 0.0
    %4078 = vmatpush1.msra.mxu0 0.0
    %4079 = vmatprep.subr.mxu0 0.0
    %4080 = vmatpush1.msra.mxu0 0.0
    %4081 = vmatprep.subr.mxu0 0.0
    %4082 = vmatpush1.msra.mxu0 0.0
    %4083 = vmatprep.subr.mxu0 0.0
    %4084 = vmatpush1.msra.mxu0 0.0
    %4085 = vmatprep.subr.mxu0 0.0
    %4086 = vmatpush1.msra.mxu0 0.0
    %4087 = vmatprep.subr.mxu0 0.0
    %4088 = vmatpush1.msra.mxu0 0.0
    %4089 = vmatprep.subr.mxu0 0.0
    %4090 = vmatpush1.msra.mxu0 0.0
    %4091 = vmatprep.subr.mxu0 0.0
    %4092 = vmatpush1.msra.mxu0 0.0
    %4093 = vmatprep.subr.mxu0 0.0
    %4094 = vmatpush1.msra.mxu0 0.0
    %4095 = vmatprep.subr.mxu0 0.0
    %4096 = vmatpush1.msra.mxu0 0.0
    %4097 = vmatprep.subr.mxu0 0.0
    %4098 = vmatpush1.msra.mxu0 0.0
    %4099 = vmatprep.subr.mxu0 0.0
    %4100 = vmatpush1.msra.mxu0 0.0
    %4101 = vmatprep.subr.mxu0 0.0
    %4102 = vmatpush1.msra.mxu0 0.0
    %4103 = vmatprep.subr.mxu0 0.0
    %4104 = vmatpush1.msra.mxu0 0.0
    %4105 = vmatprep.subr.mxu0 0.0
    %4106 = vmatpush1.msra.mxu0 0.0
    %4107 = vmatprep.subr.mxu0 0.0
    %4108 = vmatpush1.msra.mxu0 0.0
    %4109 = vmatprep.subr.mxu0 0.0
    %4110 = vmatpush1.msra.mxu0 0.0
    %4111 = vmatprep.subr.mxu0 0.0
    %4112 = vmatpush1.msra.mxu0 0.0
    %4113 = vmatprep.subr.mxu0 0.0
    %4114 = vmatpush1.msra.mxu0 0.0
    %4115 = vmatprep.mubr.f32.mxu0 0.0
    %4116 = vmatmul.mubr.f32.gmra.mrb[0].mxu0 %v4037
    %v4117 = vpop.f32.mrb[0].mxu0
    %v4118 = vadd.f32 0.0, %v4117
    %v4119 = vpop.f32.mrb[0].mxu0
    %4120 = vmatprep.mubr.f32.mxu0 0.0
    %4121 = vmatmul.mubr.f32.gmra.mrb[0].mxu0 %v4040
    %v4122 = vpop.f32.mrb[0].mxu0
    %v4123 = vadd.f32 0.0, %v4122
    %v4124 = vpop.f32.mrb[0].mxu0
    %4125 = vmatprep.mubr.f32.mxu0 0.0
    %4126 = vmatmul.mubr.f32.gmra.mrb[0].mxu0 %v4043
    %v4127 = vpop.f32.mrb[0].mxu0
    %v4128 = vadd.f32 0.0, %v4127
    %v4129 = vpop.f32.mrb[0].mxu0
    %4130 = vmatprep.mubr.f32.mxu0 0.0
    %4131 = vmatmul.mubr.f32.gmra.mrb[0].mxu0 %v4046
    %v4132 = vpop.f32.mrb[0].mxu0
    %v4133 = vadd.f32 0.0, %v4132
    %v4134 = vpop.f32.mrb[0].mxu0
    %4135 = vmatprep.mubr.f32.mxu0 0.0
    %4136 = vmatmul.mubr.f32.gmra.mrb[0].mxu0 %v4049
    %v4137 = vpop.f32.mrb[0].mxu0
    %v4138 = vadd.f32 0.0, %v4137
    %v4139 = vpop.f32.mrb[0].mxu0
    %4140 = vdwg.mxu0
    %v4142 = vsel %vm2525, %v3361, 0
    %v4145 = vsel %vm2525, %v3362, 0
    %v4148 = vsel %vm2525, %v3363, 0
    %v4151 = vsel %vm2525, %v3364, 0
    %v4154 = vsel %vm2525, %v3365, 0
    %4156 = vmatprep.subr.mxu0 0.0
    %4157 = vmatpush1.msra.mxu0 %v351
    %4158 = vmatprep.subr.mxu0 0.0
    %4159 = vmatpush1.msra.mxu0 %v352
    %4160 = vmatprep.subr.mxu0 0.0
    %4161 = vmatpush1.msra.mxu0 %v353
    %4162 = vmatprep.subr.mxu0 0.0
    %4163 = vmatpush1.msra.mxu0 %v354
    %4164 = vmatprep.subr.mxu0 0.0
    %4165 = vmatpush1.msra.mxu0 %v355
    %4166 = vmatprep.subr.mxu0 0.0
    %4167 = vmatpush1.msra.mxu0 0.0
    %4168 = vmatprep.subr.mxu0 0.0
    %4169 = vmatpush1.msra.mxu0 0.0
    %4170 = vmatprep.subr.mxu0 0.0
    %4171 = vmatpush1.msra.mxu0 0.0
    %4172 = vmatprep.subr.mxu0 0.0
    %4173 = vmatpush1.msra.mxu0 0.0
    %4174 = vmatprep.subr.mxu0 0.0
    %4175 = vmatpush1.msra.mxu0 0.0
    %4176 = vmatprep.subr.mxu0 0.0
    %4177 = vmatpush1.msra.mxu0 0.0
    %4178 = vmatprep.subr.mxu0 0.0
    %4179 = vmatpush1.msra.mxu0 0.0
    %4180 = vmatprep.subr.mxu0 0.0
    %4181 = vmatpush1.msra.mxu0 0.0
    %4182 = vmatprep.subr.mxu0 0.0
    %4183 = vmatpush1.msra.mxu0 0.0
    %4184 = vmatprep.subr.mxu0 0.0
    %4185 = vmatpush1.msra.mxu0 0.0
    %4186 = vmatprep.subr.mxu0 0.0
    %4187 = vmatpush1.msra.mxu0 0.0
    %4188 = vmatprep.subr.mxu0 0.0
    %4189 = vmatpush1.msra.mxu0 0.0
    %4190 = vmatprep.subr.mxu0 0.0
    %4191 = vmatpush1.msra.mxu0 0.0
    %4192 = vmatprep.subr.mxu0 0.0
    %4193 = vmatpush1.msra.mxu0 0.0
    %4194 = vmatprep.subr.mxu0 0.0
    %4195 = vmatpush1.msra.mxu0 0.0
    %4196 = vmatprep.subr.mxu0 0.0
    %4197 = vmatpush1.msra.mxu0 0.0
    %4198 = vmatprep.subr.mxu0 0.0
    %4199 = vmatpush1.msra.mxu0 0.0
    %4200 = vmatprep.subr.mxu0 0.0
    %4201 = vmatpush1.msra.mxu0 0.0
    %4202 = vmatprep.subr.mxu0 0.0
    %4203 = vmatpush1.msra.mxu0 0.0
    %4204 = vmatprep.subr.mxu0 0.0
    %4205 = vmatpush1.msra.mxu0 0.0
    %4206 = vmatprep.subr.mxu0 0.0
    %4207 = vmatpush1.msra.mxu0 0.0
    %4208 = vmatprep.subr.mxu0 0.0
    %4209 = vmatpush1.msra.mxu0 0.0
    %4210 = vmatprep.subr.mxu0 0.0
    %4211 = vmatpush1.msra.mxu0 0.0
    %4212 = vmatprep.subr.mxu0 0.0
    %4213 = vmatpush1.msra.mxu0 0.0
    %4214 = vmatprep.subr.mxu0 0.0
    %4215 = vmatpush1.msra.mxu0 0.0
    %4216 = vmatprep.subr.mxu0 0.0
    %4217 = vmatpush1.msra.mxu0 0.0
    %4218 = vmatprep.subr.mxu0 0.0
    %4219 = vmatpush1.msra.mxu0 0.0
    %4220 = vmatprep.mubr.f32.mxu0 0.0
    %4221 = vmatmul.mubr.f32.gmra.mrb[0].mxu0 %v4142
    %v4222 = vpop.f32.mrb[0].mxu0
    %v4223 = vadd.f32 0.0, %v4222
    %v4224 = vpop.f32.mrb[0].mxu0
    %4225 = vmatprep.mubr.f32.mxu0 0.0
    %4226 = vmatmul.mubr.f32.gmra.mrb[0].mxu0 %v4145
    %v4227 = vpop.f32.mrb[0].mxu0
    %v4228 = vadd.f32 0.0, %v4227
    %v4229 = vpop.f32.mrb[0].mxu0
    %4230 = vmatprep.mubr.f32.mxu0 0.0
    %4231 = vmatmul.mubr.f32.gmra.mrb[0].mxu0 %v4148
    %v4232 = vpop.f32.mrb[0].mxu0
    %v4233 = vadd.f32 0.0, %v4232
    %v4234 = vpop.f32.mrb[0].mxu0
    %4235 = vmatprep.mubr.f32.mxu0 0.0
    %4236 = vmatmul.mubr.f32.gmra.mrb[0].mxu0 %v4151
    %v4237 = vpop.f32.mrb[0].mxu0
    %v4238 = vadd.f32 0.0, %v4237
    %v4239 = vpop.f32.mrb[0].mxu0
    %4240 = vmatprep.mubr.f32.mxu0 0.0
    %4241 = vmatmul.mubr.f32.gmra.mrb[0].mxu0 %v4154
    %v4242 = vpop.f32.mrb[0].mxu0
    %v4243 = vadd.f32 0.0, %v4242
    %v4244 = vpop.f32.mrb[0].mxu0
    %4245 = vdwg.mxu0
    %v4247 = vsel %vm2525, %v3366, 0
    %v4250 = vsel %vm2525, %v3367, 0
    %v4253 = vsel %vm2525, %v3368, 0
    %v4256 = vsel %vm2525, %v3369, 0
    %v4259 = vsel %vm2525, %v3370, 0
    %4261 = vmatprep.subr.mxu0 0.0
    %4262 = vmatpush1.msra.mxu0 %v356
    %4263 = vmatprep.subr.mxu0 0.0
    %4264 = vmatpush1.msra.mxu0 %v357
    %4265 = vmatprep.subr.mxu0 0.0
    %4266 = vmatpush1.msra.mxu0 %v358
    %4267 = vmatprep.subr.mxu0 0.0
    %4268 = vmatpush1.msra.mxu0 %v359
    %4269 = vmatprep.subr.mxu0 0.0
    %4270 = vmatpush1.msra.mxu0 %v360
    %4271 = vmatprep.subr.mxu0 0.0
    %4272 = vmatpush1.msra.mxu0 0.0
    %4273 = vmatprep.subr.mxu0 0.0
    %4274 = vmatpush1.msra.mxu0 0.0
    %4275 = vmatprep.subr.mxu0 0.0
    %4276 = vmatpush1.msra.mxu0 0.0
    %4277 = vmatprep.subr.mxu0 0.0
    %4278 = vmatpush1.msra.mxu0 0.0
    %4279 = vmatprep.subr.mxu0 0.0
    %4280 = vmatpush1.msra.mxu0 0.0
    %4281 = vmatprep.subr.mxu0 0.0
    %4282 = vmatpush1.msra.mxu0 0.0
    %4283 = vmatprep.subr.mxu0 0.0
    %4284 = vmatpush1.msra.mxu0 0.0
    %4285 = vmatprep.subr.mxu0 0.0
    %4286 = vmatpush1.msra.mxu0 0.0
    %4287 = vmatprep.subr.mxu0 0.0
    %4288 = vmatpush1.msra.mxu0 0.0
    %4289 = vmatprep.subr.mxu0 0.0
    %4290 = vmatpush1.msra.mxu0 0.0
    %4291 = vmatprep.subr.mxu0 0.0
    %4292 = vmatpush1.msra.mxu0 0.0
    %4293 = vmatprep.subr.mxu0 0.0
    %4294 = vmatpush1.msra.mxu0 0.0
    %4295 = vmatprep.subr.mxu0 0.0
    %4296 = vmatpush1.msra.mxu0 0.0
    %4297 = vmatprep.subr.mxu0 0.0
    %4298 = vmatpush1.msra.mxu0 0.0
    %4299 = vmatprep.subr.mxu0 0.0
    %4300 = vmatpush1.msra.mxu0 0.0
    %4301 = vmatprep.subr.mxu0 0.0
    %4302 = vmatpush1.msra.mxu0 0.0
    %4303 = vmatprep.subr.mxu0 0.0
    %4304 = vmatpush1.msra.mxu0 0.0
    %4305 = vmatprep.subr.mxu0 0.0
    %4306 = vmatpush1.msra.mxu0 0.0
    %4307 = vmatprep.subr.mxu0 0.0
    %4308 = vmatpush1.msra.mxu0 0.0
    %4309 = vmatprep.subr.mxu0 0.0
    %4310 = vmatpush1.msra.mxu0 0.0
    %4311 = vmatprep.subr.mxu0 0.0
    %4312 = vmatpush1.msra.mxu0 0.0
    %4313 = vmatprep.subr.mxu0 0.0
    %4314 = vmatpush1.msra.mxu0 0.0
    %4315 = vmatprep.subr.mxu0 0.0
    %4316 = vmatpush1.msra.mxu0 0.0
    %4317 = vmatprep.subr.mxu0 0.0
    %4318 = vmatpush1.msra.mxu0 0.0
    %4319 = vmatprep.subr.mxu0 0.0
    %4320 = vmatpush1.msra.mxu0 0.0
    %4321 = vmatprep.subr.mxu0 0.0
    %4322 = vmatpush1.msra.mxu0 0.0
    %4323 = vmatprep.subr.mxu0 0.0
    %4324 = vmatpush1.msra.mxu0 0.0
    %4325 = vmatprep.mubr.f32.mxu0 0.0
    %4326 = vmatmul.mubr.f32.gmra.mrb[0].mxu0 %v4247
    %v4327 = vpop.f32.mrb[0].mxu0
    %v4328 = vadd.f32 0.0, %v4327
    %v4329 = vpop.f32.mrb[0].mxu0
    %4330 = vmatprep.mubr.f32.mxu0 0.0
    %4331 = vmatmul.mubr.f32.gmra.mrb[0].mxu0 %v4250
    %v4332 = vpop.f32.mrb[0].mxu0
    %v4333 = vadd.f32 0.0, %v4332
    %v4334 = vpop.f32.mrb[0].mxu0
    %4335 = vmatprep.mubr.f32.mxu0 0.0
    %4336 = vmatmul.mubr.f32.gmra.mrb[0].mxu0 %v4253
    %v4337 = vpop.f32.mrb[0].mxu0
    %v4338 = vadd.f32 0.0, %v4337
    %v4339 = vpop.f32.mrb[0].mxu0
    %4340 = vmatprep.mubr.f32.mxu0 0.0
    %4341 = vmatmul.mubr.f32.gmra.mrb[0].mxu0 %v4256
    %v4342 = vpop.f32.mrb[0].mxu0
    %v4343 = vadd.f32 0.0, %v4342
    %v4344 = vpop.f32.mrb[0].mxu0
    %4345 = vmatprep.mubr.f32.mxu0 0.0
    %4346 = vmatmul.mubr.f32.gmra.mrb[0].mxu0 %v4259
    %v4347 = vpop.f32.mrb[0].mxu0
    %v4348 = vadd.f32 0.0, %v4347
    %v4349 = vpop.f32.mrb[0].mxu0
    %4350 = vdwg.mxu0
    %v4352 = vsel %vm2525, %v3371, 0
    %v4355 = vsel %vm2525, %v3372, 0
    %v4358 = vsel %vm2525, %v3373, 0
    %v4361 = vsel %vm2525, %v3374, 0
    %v4364 = vsel %vm2525, %v3375, 0
    %4366 = vmatprep.subr.mxu0 0.0
    %4367 = vmatpush1.msra.mxu0 %v361
    %4368 = vmatprep.subr.mxu0 0.0
    %4369 = vmatpush1.msra.mxu0 %v362
    %4370 = vmatprep.subr.mxu0 0.0
    %4371 = vmatpush1.msra.mxu0 %v363
    %4372 = vmatprep.subr.mxu0 0.0
    %4373 = vmatpush1.msra.mxu0 %v364
    %4374 = vmatprep.subr.mxu0 0.0
    %4375 = vmatpush1.msra.mxu0 %v365
    %4376 = vmatprep.subr.mxu0 0.0
    %4377 = vmatpush1.msra.mxu0 0.0
    %4378 = vmatprep.subr.mxu0 0.0
    %4379 = vmatpush1.msra.mxu0 0.0
    %4380 = vmatprep.subr.mxu0 0.0
    %4381 = vmatpush1.msra.mxu0 0.0
    %4382 = vmatprep.subr.mxu0 0.0
    %4383 = vmatpush1.msra.mxu0 0.0
    %4384 = vmatprep.subr.mxu0 0.0
    %4385 = vmatpush1.msra.mxu0 0.0
    %4386 = vmatprep.subr.mxu0 0.0
    %4387 = vmatpush1.msra.mxu0 0.0
    %4388 = vmatprep.subr.mxu0 0.0
    %4389 = vmatpush1.msra.mxu0 0.0
    %4390 = vmatprep.subr.mxu0 0.0
    %4391 = vmatpush1.msra.mxu0 0.0
    %4392 = vmatprep.subr.mxu0 0.0
    %4393 = vmatpush1.msra.mxu0 0.0
    %4394 = vmatprep.subr.mxu0 0.0
    %4395 = vmatpush1.msra.mxu0 0.0
    %4396 = vmatprep.subr.mxu0 0.0
    %4397 = vmatpush1.msra.mxu0 0.0
    %4398 = vmatprep.subr.mxu0 0.0
    %4399 = vmatpush1.msra.mxu0 0.0
    %4400 = vmatprep.subr.mxu0 0.0
    %4401 = vmatpush1.msra.mxu0 0.0
    %4402 = vmatprep.subr.mxu0 0.0
    %4403 = vmatpush1.msra.mxu0 0.0
    %4404 = vmatprep.subr.mxu0 0.0
    %4405 = vmatpush1.msra.mxu0 0.0
    %4406 = vmatprep.subr.mxu0 0.0
    %4407 = vmatpush1.msra.mxu0 0.0
    %4408 = vmatprep.subr.mxu0 0.0
    %4409 = vmatpush1.msra.mxu0 0.0
    %4410 = vmatprep.subr.mxu0 0.0
    %4411 = vmatpush1.msra.mxu0 0.0
    %4412 = vmatprep.subr.mxu0 0.0
    %4413 = vmatpush1.msra.mxu0 0.0
    %4414 = vmatprep.subr.mxu0 0.0
    %4415 = vmatpush1.msra.mxu0 0.0
    %4416 = vmatprep.subr.mxu0 0.0
    %4417 = vmatpush1.msra.mxu0 0.0
    %4418 = vmatprep.subr.mxu0 0.0
    %4419 = vmatpush1.msra.mxu0 0.0
    %4420 = vmatprep.subr.mxu0 0.0
    %4421 = vmatpush1.msra.mxu0 0.0
    %4422 = vmatprep.subr.mxu0 0.0
    %4423 = vmatpush1.msra.mxu0 0.0
    %4424 = vmatprep.subr.mxu0 0.0
    %4425 = vmatpush1.msra.mxu0 0.0
    %4426 = vmatprep.subr.mxu0 0.0
    %4427 = vmatpush1.msra.mxu0 0.0
    %4428 = vmatprep.subr.mxu0 0.0
    %4429 = vmatpush1.msra.mxu0 0.0
    %4430 = vmatprep.mubr.f32.mxu0 0.0
    %4431 = vmatmul.mubr.f32.gmra.mrb[0].mxu0 %v4352
    %v4432 = vpop.f32.mrb[0].mxu0
    %v4433 = vadd.f32 0.0, %v4432
    %v4434 = vpop.f32.mrb[0].mxu0
    %4435 = vmatprep.mubr.f32.mxu0 0.0
    %4436 = vmatmul.mubr.f32.gmra.mrb[0].mxu0 %v4355
    %v4437 = vpop.f32.mrb[0].mxu0
    %v4438 = vadd.f32 0.0, %v4437
    %v4439 = vpop.f32.mrb[0].mxu0
    %4440 = vmatprep.mubr.f32.mxu0 0.0
    %4441 = vmatmul.mubr.f32.gmra.mrb[0].mxu0 %v4358
    %v4442 = vpop.f32.mrb[0].mxu0
    %v4443 = vadd.f32 0.0, %v4442
    %v4444 = vpop.f32.mrb[0].mxu0
    %4445 = vmatprep.mubr.f32.mxu0 0.0
    %4446 = vmatmul.mubr.f32.gmra.mrb[0].mxu0 %v4361
    %v4447 = vpop.f32.mrb[0].mxu0
    %v4448 = vadd.f32 0.0, %v4447
    %v4449 = vpop.f32.mrb[0].mxu0
    %4450 = vmatprep.mubr.f32.mxu0 0.0
    %4451 = vmatmul.mubr.f32.gmra.mrb[0].mxu0 %v4364
    %v4452 = vpop.f32.mrb[0].mxu0
    %v4453 = vadd.f32 0.0, %v4452
    %v4454 = vpop.f32.mrb[0].mxu0
    %4455 = vdwg.mxu0
    %v4457 = vsel %vm2525, %v3376, 0
    %v4460 = vsel %vm2525, %v3377, 0
    %v4463 = vsel %vm2525, %v3378, 0
    %v4466 = vsel %vm2525, %v3379, 0
    %v4469 = vsel %vm2525, %v3380, 0
    %4471 = vmatprep.subr.mxu0 0.0
    %4472 = vmatpush1.msra.mxu0 %v366
    %4473 = vmatprep.subr.mxu0 0.0
    %4474 = vmatpush1.msra.mxu0 %v367
    %4475 = vmatprep.subr.mxu0 0.0
    %4476 = vmatpush1.msra.mxu0 %v368
    %4477 = vmatprep.subr.mxu0 0.0
    %4478 = vmatpush1.msra.mxu0 %v369
    %4479 = vmatprep.subr.mxu0 0.0
    %4480 = vmatpush1.msra.mxu0 %v370
    %4481 = vmatprep.subr.mxu0 0.0
    %4482 = vmatpush1.msra.mxu0 0.0
    %4483 = vmatprep.subr.mxu0 0.0
    %4484 = vmatpush1.msra.mxu0 0.0
    %4485 = vmatprep.subr.mxu0 0.0
    %4486 = vmatpush1.msra.mxu0 0.0
    %4487 = vmatprep.subr.mxu0 0.0
    %4488 = vmatpush1.msra.mxu0 0.0
    %4489 = vmatprep.subr.mxu0 0.0
    %4490 = vmatpush1.msra.mxu0 0.0
    %4491 = vmatprep.subr.mxu0 0.0
    %4492 = vmatpush1.msra.mxu0 0.0
    %4493 = vmatprep.subr.mxu0 0.0
    %4494 = vmatpush1.msra.mxu0 0.0
    %4495 = vmatprep.subr.mxu0 0.0
    %4496 = vmatpush1.msra.mxu0 0.0
    %4497 = vmatprep.subr.mxu0 0.0
    %4498 = vmatpush1.msra.mxu0 0.0
    %4499 = vmatprep.subr.mxu0 0.0
    %4500 = vmatpush1.msra.mxu0 0.0
    %4501 = vmatprep.subr.mxu0 0.0
    %4502 = vmatpush1.msra.mxu0 0.0
    %4503 = vmatprep.subr.mxu0 0.0
    %4504 = vmatpush1.msra.mxu0 0.0
    %4505 = vmatprep.subr.mxu0 0.0
    %4506 = vmatpush1.msra.mxu0 0.0
    %4507 = vmatprep.subr.mxu0 0.0
    %4508 = vmatpush1.msra.mxu0 0.0
    %4509 = vmatprep.subr.mxu0 0.0
    %4510 = vmatpush1.msra.mxu0 0.0
    %4511 = vmatprep.subr.mxu0 0.0
    %4512 = vmatpush1.msra.mxu0 0.0
    %4513 = vmatprep.subr.mxu0 0.0
    %4514 = vmatpush1.msra.mxu0 0.0
    %4515 = vmatprep.subr.mxu0 0.0
    %4516 = vmatpush1.msra.mxu0 0.0
    %4517 = vmatprep.subr.mxu0 0.0
    %4518 = vmatpush1.msra.mxu0 0.0
    %4519 = vmatprep.subr.mxu0 0.0
    %4520 = vmatpush1.msra.mxu0 0.0
    %4521 = vmatprep.subr.mxu0 0.0
    %4522 = vmatpush1.msra.mxu0 0.0
    %4523 = vmatprep.subr.mxu0 0.0
    %4524 = vmatpush1.msra.mxu0 0.0
    %4525 = vmatprep.subr.mxu0 0.0
    %4526 = vmatpush1.msra.mxu0 0.0
    %4527 = vmatprep.subr.mxu0 0.0
    %4528 = vmatpush1.msra.mxu0 0.0
    %4529 = vmatprep.subr.mxu0 0.0
    %4530 = vmatpush1.msra.mxu0 0.0
    %4531 = vmatprep.subr.mxu0 0.0
    %4532 = vmatpush1.msra.mxu0 0.0
    %4533 = vmatprep.subr.mxu0 0.0
    %4534 = vmatpush1.msra.mxu0 0.0
    %4535 = vmatprep.mubr.f32.mxu0 0.0
    %4536 = vmatmul.mubr.f32.gmra.mrb[0].mxu0 %v4457
    %v4537 = vpop.f32.mrb[0].mxu0
    %v4538 = vadd.f32 0.0, %v4537
    %v4539 = vpop.f32.mrb[0].mxu0
    %4540 = vmatprep.mubr.f32.mxu0 0.0
    %4541 = vmatmul.mubr.f32.gmra.mrb[0].mxu0 %v4460
    %v4542 = vpop.f32.mrb[0].mxu0
    %v4543 = vadd.f32 0.0, %v4542
    %v4544 = vpop.f32.mrb[0].mxu0
    %4545 = vmatprep.mubr.f32.mxu0 0.0
    %4546 = vmatmul.mubr.f32.gmra.mrb[0].mxu0 %v4463
    %v4547 = vpop.f32.mrb[0].mxu0
    %v4548 = vadd.f32 0.0, %v4547
    %v4549 = vpop.f32.mrb[0].mxu0
    %4550 = vmatprep.mubr.f32.mxu0 0.0
    %4551 = vmatmul.mubr.f32.gmra.mrb[0].mxu0 %v4466
    %v4552 = vpop.f32.mrb[0].mxu0
    %v4553 = vadd.f32 0.0, %v4552
    %v4554 = vpop.f32.mrb[0].mxu0
    %4555 = vmatprep.mubr.f32.mxu0 0.0
    %4556 = vmatmul.mubr.f32.gmra.mrb[0].mxu0 %v4469
    %v4557 = vpop.f32.mrb[0].mxu0
    %v4558 = vadd.f32 0.0, %v4557
    %v4559 = vpop.f32.mrb[0].mxu0
    %4560 = vdwg.mxu0
    %v4562 = vsel %vm2525, %v3381, 0
    %v4565 = vsel %vm2525, %v3382, 0
    %v4568 = vsel %vm2525, %v3383, 0
    %v4571 = vsel %vm2525, %v3384, 0
    %v4574 = vsel %vm2525, %v3385, 0
    %4576 = vmatprep.subr.mxu0 0.0
    %4577 = vmatpush1.msra.mxu0 %v371
    %4578 = vmatprep.subr.mxu0 0.0
    %4579 = vmatpush1.msra.mxu0 %v372
    %4580 = vmatprep.subr.mxu0 0.0
    %4581 = vmatpush1.msra.mxu0 %v373
    %4582 = vmatprep.subr.mxu0 0.0
    %4583 = vmatpush1.msra.mxu0 %v374
    %4584 = vmatprep.subr.mxu0 0.0
    %4585 = vmatpush1.msra.mxu0 %v375
    %4586 = vmatprep.subr.mxu0 0.0
    %4587 = vmatpush1.msra.mxu0 0.0
    %4588 = vmatprep.subr.mxu0 0.0
    %4589 = vmatpush1.msra.mxu0 0.0
    %4590 = vmatprep.subr.mxu0 0.0
    %4591 = vmatpush1.msra.mxu0 0.0
    %4592 = vmatprep.subr.mxu0 0.0
    %4593 = vmatpush1.msra.mxu0 0.0
    %4594 = vmatprep.subr.mxu0 0.0
    %4595 = vmatpush1.msra.mxu0 0.0
    %4596 = vmatprep.subr.mxu0 0.0
    %4597 = vmatpush1.msra.mxu0 0.0
    %4598 = vmatprep.subr.mxu0 0.0
    %4599 = vmatpush1.msra.mxu0 0.0
    %4600 = vmatprep.subr.mxu0 0.0
    %4601 = vmatpush1.msra.mxu0 0.0
    %4602 = vmatprep.subr.mxu0 0.0
    %4603 = vmatpush1.msra.mxu0 0.0
    %4604 = vmatprep.subr.mxu0 0.0
    %4605 = vmatpush1.msra.mxu0 0.0
    %4606 = vmatprep.subr.mxu0 0.0
    %4607 = vmatpush1.msra.mxu0 0.0
    %4608 = vmatprep.subr.mxu0 0.0
    %4609 = vmatpush1.msra.mxu0 0.0
    %4610 = vmatprep.subr.mxu0 0.0
    %4611 = vmatpush1.msra.mxu0 0.0
    %4612 = vmatprep.subr.mxu0 0.0
    %4613 = vmatpush1.msra.mxu0 0.0
    %4614 = vmatprep.subr.mxu0 0.0
    %4615 = vmatpush1.msra.mxu0 0.0
    %4616 = vmatprep.subr.mxu0 0.0
    %4617 = vmatpush1.msra.mxu0 0.0
    %4618 = vmatprep.subr.mxu0 0.0
    %4619 = vmatpush1.msra.mxu0 0.0
    %4620 = vmatprep.subr.mxu0 0.0
    %4621 = vmatpush1.msra.mxu0 0.0
    %4622 = vmatprep.subr.mxu0 0.0
    %4623 = vmatpush1.msra.mxu0 0.0
    %4624 = vmatprep.subr.mxu0 0.0
    %4625 = vmatpush1.msra.mxu0 0.0
    %4626 = vmatprep.subr.mxu0 0.0
    %4627 = vmatpush1.msra.mxu0 0.0
    %4628 = vmatprep.subr.mxu0 0.0
    %4629 = vmatpush1.msra.mxu0 0.0
    %4630 = vmatprep.subr.mxu0 0.0
    %4631 = vmatpush1.msra.mxu0 0.0
    %4632 = vmatprep.subr.mxu0 0.0
    %4633 = vmatpush1.msra.mxu0 0.0
    %4634 = vmatprep.subr.mxu0 0.0
    %4635 = vmatpush1.msra.mxu0 0.0
    %4636 = vmatprep.subr.mxu0 0.0
    %4637 = vmatpush1.msra.mxu0 0.0
    %4638 = vmatprep.subr.mxu0 0.0
    %4639 = vmatpush1.msra.mxu0 0.0
    %4640 = vmatprep.mubr.f32.mxu0 0.0
    %4641 = vmatmul.mubr.f32.gmra.mrb[0].mxu0 %v4562
    %v4642 = vpop.f32.mrb[0].mxu0
    %v4643 = vadd.f32 0.0, %v4642
    %v4644 = vpop.f32.mrb[0].mxu0
    %4645 = vmatprep.mubr.f32.mxu0 0.0
    %4646 = vmatmul.mubr.f32.gmra.mrb[0].mxu0 %v4565
    %v4647 = vpop.f32.mrb[0].mxu0
    %v4648 = vadd.f32 0.0, %v4647
    %v4649 = vpop.f32.mrb[0].mxu0
    %4650 = vmatprep.mubr.f32.mxu0 0.0
    %4651 = vmatmul.mubr.f32.gmra.mrb[0].mxu0 %v4568
    %v4652 = vpop.f32.mrb[0].mxu0
    %v4653 = vadd.f32 0.0, %v4652
    %v4654 = vpop.f32.mrb[0].mxu0
    %4655 = vmatprep.mubr.f32.mxu0 0.0
    %4656 = vmatmul.mubr.f32.gmra.mrb[0].mxu0 %v4571
    %v4657 = vpop.f32.mrb[0].mxu0
    %v4658 = vadd.f32 0.0, %v4657
    %v4659 = vpop.f32.mrb[0].mxu0
    %4660 = vmatprep.mubr.f32.mxu0 0.0
    %4661 = vmatmul.mubr.f32.gmra.mrb[0].mxu0 %v4574
    %v4662 = vpop.f32.mrb[0].mxu0
    %v4663 = vadd.f32 0.0, %v4662
    %v4664 = vpop.f32.mrb[0].mxu0
    %4665 = vdwg.mxu0
    %v4667 = vsel %vm2525, %v3386, 0
    %v4670 = vsel %vm2525, %v3387, 0
    %v4673 = vsel %vm2525, %v3388, 0
    %v4676 = vsel %vm2525, %v3389, 0
    %v4679 = vsel %vm2525, %v3390, 0
    %4681 = vmatprep.subr.mxu0 0.0
    %4682 = vmatpush1.msra.mxu0 %v376
    %4683 = vmatprep.subr.mxu0 0.0
    %4684 = vmatpush1.msra.mxu0 %v377
    %4685 = vmatprep.subr.mxu0 0.0
    %4686 = vmatpush1.msra.mxu0 %v378
    %4687 = vmatprep.subr.mxu0 0.0
    %4688 = vmatpush1.msra.mxu0 %v379
    %4689 = vmatprep.subr.mxu0 0.0
    %4690 = vmatpush1.msra.mxu0 %v380
    %4691 = vmatprep.subr.mxu0 0.0
    %4692 = vmatpush1.msra.mxu0 0.0
    %4693 = vmatprep.subr.mxu0 0.0
    %4694 = vmatpush1.msra.mxu0 0.0
    %4695 = vmatprep.subr.mxu0 0.0
    %4696 = vmatpush1.msra.mxu0 0.0
    %4697 = vmatprep.subr.mxu0 0.0
    %4698 = vmatpush1.msra.mxu0 0.0
    %4699 = vmatprep.subr.mxu0 0.0
    %4700 = vmatpush1.msra.mxu0 0.0
    %4701 = vmatprep.subr.mxu0 0.0
    %4702 = vmatpush1.msra.mxu0 0.0
    %4703 = vmatprep.subr.mxu0 0.0
    %4704 = vmatpush1.msra.mxu0 0.0
    %4705 = vmatprep.subr.mxu0 0.0
    %4706 = vmatpush1.msra.mxu0 0.0
    %4707 = vmatprep.subr.mxu0 0.0
    %4708 = vmatpush1.msra.mxu0 0.0
    %4709 = vmatprep.subr.mxu0 0.0
    %4710 = vmatpush1.msra.mxu0 0.0
    %4711 = vmatprep.subr.mxu0 0.0
    %4712 = vmatpush1.msra.mxu0 0.0
    %4713 = vmatprep.subr.mxu0 0.0
    %4714 = vmatpush1.msra.mxu0 0.0
    %4715 = vmatprep.subr.mxu0 0.0
    %4716 = vmatpush1.msra.mxu0 0.0
    %4717 = vmatprep.subr.mxu0 0.0
    %4718 = vmatpush1.msra.mxu0 0.0
    %4719 = vmatprep.subr.mxu0 0.0
    %4720 = vmatpush1.msra.mxu0 0.0
    %4721 = vmatprep.subr.mxu0 0.0
    %4722 = vmatpush1.msra.mxu0 0.0
    %4723 = vmatprep.subr.mxu0 0.0
    %4724 = vmatpush1.msra.mxu0 0.0
    %4725 = vmatprep.subr.mxu0 0.0
    %4726 = vmatpush1.msra.mxu0 0.0
    %4727 = vmatprep.subr.mxu0 0.0
    %4728 = vmatpush1.msra.mxu0 0.0
    %4729 = vmatprep.subr.mxu0 0.0
    %4730 = vmatpush1.msra.mxu0 0.0
    %4731 = vmatprep.subr.mxu0 0.0
    %4732 = vmatpush1.msra.mxu0 0.0
    %4733 = vmatprep.subr.mxu0 0.0
    %4734 = vmatpush1.msra.mxu0 0.0
    %4735 = vmatprep.subr.mxu0 0.0
    %4736 = vmatpush1.msra.mxu0 0.0
    %4737 = vmatprep.subr.mxu0 0.0
    %4738 = vmatpush1.msra.mxu0 0.0
    %4739 = vmatprep.subr.mxu0 0.0
    %4740 = vmatpush1.msra.mxu0 0.0
    %4741 = vmatprep.subr.mxu0 0.0
    %4742 = vmatpush1.msra.mxu0 0.0
    %4743 = vmatprep.subr.mxu0 0.0
    %4744 = vmatpush1.msra.mxu0 0.0
    %4745 = vmatprep.mubr.f32.mxu0 0.0
    %4746 = vmatmul.mubr.f32.gmra.mrb[0].mxu0 %v4667
    %v4747 = vpop.f32.mrb[0].mxu0
    %v4748 = vadd.f32 0.0, %v4747
    %v4749 = vpop.f32.mrb[0].mxu0
    %4750 = vmatprep.mubr.f32.mxu0 0.0
    %4751 = vmatmul.mubr.f32.gmra.mrb[0].mxu0 %v4670
    %v4752 = vpop.f32.mrb[0].mxu0
    %v4753 = vadd.f32 0.0, %v4752
    %v4754 = vpop.f32.mrb[0].mxu0
    %4755 = vmatprep.mubr.f32.mxu0 0.0
    %4756 = vmatmul.mubr.f32.gmra.mrb[0].mxu0 %v4673
    %v4757 = vpop.f32.mrb[0].mxu0
    %v4758 = vadd.f32 0.0, %v4757
    %v4759 = vpop.f32.mrb[0].mxu0
    %4760 = vmatprep.mubr.f32.mxu0 0.0
    %4761 = vmatmul.mubr.f32.gmra.mrb[0].mxu0 %v4676
    %v4762 = vpop.f32.mrb[0].mxu0
    %v4763 = vadd.f32 0.0, %v4762
    %v4764 = vpop.f32.mrb[0].mxu0
    %4765 = vmatprep.mubr.f32.mxu0 0.0
    %4766 = vmatmul.mubr.f32.gmra.mrb[0].mxu0 %v4679
    %v4767 = vpop.f32.mrb[0].mxu0
    %v4768 = vadd.f32 0.0, %v4767
    %v4769 = vpop.f32.mrb[0].mxu0
    %4770 = vdwg.mxu0
    %v4772 = vsel %vm2525, %v3391, 0
    %v4775 = vsel %vm2525, %v3392, 0
    %v4778 = vsel %vm2525, %v3393, 0
    %v4781 = vsel %vm2525, %v3394, 0
    %v4784 = vsel %vm2525, %v3395, 0
    %4786 = vmatprep.subr.mxu0 0.0
    %4787 = vmatpush1.msra.mxu0 %v381
    %4788 = vmatprep.subr.mxu0 0.0
    %4789 = vmatpush1.msra.mxu0 %v382
    %4790 = vmatprep.subr.mxu0 0.0
    %4791 = vmatpush1.msra.mxu0 %v383
    %4792 = vmatprep.subr.mxu0 0.0
    %4793 = vmatpush1.msra.mxu0 %v384
    %4794 = vmatprep.subr.mxu0 0.0
    %4795 = vmatpush1.msra.mxu0 %v385
    %4796 = vmatprep.subr.mxu0 0.0
    %4797 = vmatpush1.msra.mxu0 0.0
    %4798 = vmatprep.subr.mxu0 0.0
    %4799 = vmatpush1.msra.mxu0 0.0
    %4800 = vmatprep.subr.mxu0 0.0
    %4801 = vmatpush1.msra.mxu0 0.0
    %4802 = vmatprep.subr.mxu0 0.0
    %4803 = vmatpush1.msra.mxu0 0.0
    %4804 = vmatprep.subr.mxu0 0.0
    %4805 = vmatpush1.msra.mxu0 0.0
    %4806 = vmatprep.subr.mxu0 0.0
    %4807 = vmatpush1.msra.mxu0 0.0
    %4808 = vmatprep.subr.mxu0 0.0
    %4809 = vmatpush1.msra.mxu0 0.0
    %4810 = vmatprep.subr.mxu0 0.0
    %4811 = vmatpush1.msra.mxu0 0.0
    %4812 = vmatprep.subr.mxu0 0.0
    %4813 = vmatpush1.msra.mxu0 0.0
    %4814 = vmatprep.subr.mxu0 0.0
    %4815 = vmatpush1.msra.mxu0 0.0
    %4816 = vmatprep.subr.mxu0 0.0
    %4817 = vmatpush1.msra.mxu0 0.0
    %4818 = vmatprep.subr.mxu0 0.0
    %4819 = vmatpush1.msra.mxu0 0.0
    %4820 = vmatprep.subr.mxu0 0.0
    %4821 = vmatpush1.msra.mxu0 0.0
    %4822 = vmatprep.subr.mxu0 0.0
    %4823 = vmatpush1.msra.mxu0 0.0
    %4824 = vmatprep.subr.mxu0 0.0
    %4825 = vmatpush1.msra.mxu0 0.0
    %4826 = vmatprep.subr.mxu0 0.0
    %4827 = vmatpush1.msra.mxu0 0.0
    %4828 = vmatprep.subr.mxu0 0.0
    %4829 = vmatpush1.msra.mxu0 0.0
    %4830 = vmatprep.subr.mxu0 0.0
    %4831 = vmatpush1.msra.mxu0 0.0
    %4832 = vmatprep.subr.mxu0 0.0
    %4833 = vmatpush1.msra.mxu0 0.0
    %4834 = vmatprep.subr.mxu0 0.0
    %4835 = vmatpush1.msra.mxu0 0.0
    %4836 = vmatprep.subr.mxu0 0.0
    %4837 = vmatpush1.msra.mxu0 0.0
    %4838 = vmatprep.subr.mxu0 0.0
    %4839 = vmatpush1.msra.mxu0 0.0
    %4840 = vmatprep.subr.mxu0 0.0
    %4841 = vmatpush1.msra.mxu0 0.0
    %4842 = vmatprep.subr.mxu0 0.0
    %4843 = vmatpush1.msra.mxu0 0.0
    %4844 = vmatprep.subr.mxu0 0.0
    %4845 = vmatpush1.msra.mxu0 0.0
    %4846 = vmatprep.subr.mxu0 0.0
    %4847 = vmatpush1.msra.mxu0 0.0
    %4848 = vmatprep.subr.mxu0 0.0
    %4849 = vmatpush1.msra.mxu0 0.0
    %4850 = vmatprep.mubr.f32.mxu0 0.0
    %4851 = vmatmul.mubr.f32.gmra.mrb[0].mxu0 %v4772
    %v4852 = vpop.f32.mrb[0].mxu0
    %v4853 = vadd.f32 0.0, %v4852
    %v4854 = vpop.f32.mrb[0].mxu0
    %4855 = vmatprep.mubr.f32.mxu0 0.0
    %4856 = vmatmul.mubr.f32.gmra.mrb[0].mxu0 %v4775
    %v4857 = vpop.f32.mrb[0].mxu0
    %v4858 = vadd.f32 0.0, %v4857
    %v4859 = vpop.f32.mrb[0].mxu0
    %4860 = vmatprep.mubr.f32.mxu0 0.0
    %4861 = vmatmul.mubr.f32.gmra.mrb[0].mxu0 %v4778
    %v4862 = vpop.f32.mrb[0].mxu0
    %v4863 = vadd.f32 0.0, %v4862
    %v4864 = vpop.f32.mrb[0].mxu0
    %4865 = vmatprep.mubr.f32.mxu0 0.0
    %4866 = vmatmul.mubr.f32.gmra.mrb[0].mxu0 %v4781
    %v4867 = vpop.f32.mrb[0].mxu0
    %v4868 = vadd.f32 0.0, %v4867
    %v4869 = vpop.f32.mrb[0].mxu0
    %4870 = vmatprep.mubr.f32.mxu0 0.0
    %4871 = vmatmul.mubr.f32.gmra.mrb[0].mxu0 %v4784
    %v4872 = vpop.f32.mrb[0].mxu0
    %v4873 = vadd.f32 0.0, %v4872
    %v4874 = vpop.f32.mrb[0].mxu0
    %4875 = vdwg.mxu0
    %v4877 = vsel %vm2525, %v3396, 0
    %v4880 = vsel %vm2525, %v3397, 0
    %v4883 = vsel %vm2525, %v3398, 0
    %v4886 = vsel %vm2525, %v3399, 0
    %v4889 = vsel %vm2525, %v3400, 0
    %4891 = vmatprep.subr.mxu0 0.0
    %4892 = vmatpush1.msra.mxu0 %v386
    %4893 = vmatprep.subr.mxu0 0.0
    %4894 = vmatpush1.msra.mxu0 %v387
    %4895 = vmatprep.subr.mxu0 0.0
    %4896 = vmatpush1.msra.mxu0 %v388
    %4897 = vmatprep.subr.mxu0 0.0
    %4898 = vmatpush1.msra.mxu0 %v389
    %4899 = vmatprep.subr.mxu0 0.0
    %4900 = vmatpush1.msra.mxu0 %v390
    %4901 = vmatprep.subr.mxu0 0.0
    %4902 = vmatpush1.msra.mxu0 0.0
    %4903 = vmatprep.subr.mxu0 0.0
    %4904 = vmatpush1.msra.mxu0 0.0
    %4905 = vmatprep.subr.mxu0 0.0
    %4906 = vmatpush1.msra.mxu0 0.0
    %4907 = vmatprep.subr.mxu0 0.0
    %4908 = vmatpush1.msra.mxu0 0.0
    %4909 = vmatprep.subr.mxu0 0.0
    %4910 = vmatpush1.msra.mxu0 0.0
    %4911 = vmatprep.subr.mxu0 0.0
    %4912 = vmatpush1.msra.mxu0 0.0
    %4913 = vmatprep.subr.mxu0 0.0
    %4914 = vmatpush1.msra.mxu0 0.0
    %4915 = vmatprep.subr.mxu0 0.0
    %4916 = vmatpush1.msra.mxu0 0.0
    %4917 = vmatprep.subr.mxu0 0.0
    %4918 = vmatpush1.msra.mxu0 0.0
    %4919 = vmatprep.subr.mxu0 0.0
    %4920 = vmatpush1.msra.mxu0 0.0
    %4921 = vmatprep.subr.mxu0 0.0
    %4922 = vmatpush1.msra.mxu0 0.0
    %4923 = vmatprep.subr.mxu0 0.0
    %4924 = vmatpush1.msra.mxu0 0.0
    %4925 = vmatprep.subr.mxu0 0.0
    %4926 = vmatpush1.msra.mxu0 0.0
    %4927 = vmatprep.subr.mxu0 0.0
    %4928 = vmatpush1.msra.mxu0 0.0
    %4929 = vmatprep.subr.mxu0 0.0
    %4930 = vmatpush1.msra.mxu0 0.0
    %4931 = vmatprep.subr.mxu0 0.0
    %4932 = vmatpush1.msra.mxu0 0.0
    %4933 = vmatprep.subr.mxu0 0.0
    %4934 = vmatpush1.msra.mxu0 0.0
    %4935 = vmatprep.subr.mxu0 0.0
    %4936 = vmatpush1.msra.mxu0 0.0
    %4937 = vmatprep.subr.mxu0 0.0
    %4938 = vmatpush1.msra.mxu0 0.0
    %4939 = vmatprep.subr.mxu0 0.0
    %4940 = vmatpush1.msra.mxu0 0.0
    %4941 = vmatprep.subr.mxu0 0.0
    %4942 = vmatpush1.msra.mxu0 0.0
    %4943 = vmatprep.subr.mxu0 0.0
    %4944 = vmatpush1.msra.mxu0 0.0
    %4945 = vmatprep.subr.mxu0 0.0
    %4946 = vmatpush1.msra.mxu0 0.0
    %4947 = vmatprep.subr.mxu0 0.0
    %4948 = vmatpush1.msra.mxu0 0.0
    %4949 = vmatprep.subr.mxu0 0.0
    %4950 = vmatpush1.msra.mxu0 0.0
    %4951 = vmatprep.subr.mxu0 0.0
    %4952 = vmatpush1.msra.mxu0 0.0
    %4953 = vmatprep.subr.mxu0 0.0
    %4954 = vmatpush1.msra.mxu0 0.0
    %4955 = vmatprep.mubr.f32.mxu0 0.0
    %4956 = vmatmul.mubr.f32.gmra.mrb[0].mxu0 %v4877
    %v4957 = vpop.f32.mrb[0].mxu0
    %v4958 = vadd.f32 0.0, %v4957
    %v4959 = vpop.f32.mrb[0].mxu0
    %4960 = vmatprep.mubr.f32.mxu0 0.0
    %4961 = vmatmul.mubr.f32.gmra.mrb[0].mxu0 %v4880
    %v4962 = vpop.f32.mrb[0].mxu0
    %v4963 = vadd.f32 0.0, %v4962
    %v4964 = vpop.f32.mrb[0].mxu0
    %4965 = vmatprep.mubr.f32.mxu0 0.0
    %4966 = vmatmul.mubr.f32.gmra.mrb[0].mxu0 %v4883
    %v4967 = vpop.f32.mrb[0].mxu0
    %v4968 = vadd.f32 0.0, %v4967
    %v4969 = vpop.f32.mrb[0].mxu0
    %4970 = vmatprep.mubr.f32.mxu0 0.0
    %4971 = vmatmul.mubr.f32.gmra.mrb[0].mxu0 %v4886
    %v4972 = vpop.f32.mrb[0].mxu0
    %v4973 = vadd.f32 0.0, %v4972
    %v4974 = vpop.f32.mrb[0].mxu0
    %4975 = vmatprep.mubr.f32.mxu0 0.0
    %4976 = vmatmul.mubr.f32.gmra.mrb[0].mxu0 %v4889
    %v4977 = vpop.f32.mrb[0].mxu0
    %v4978 = vadd.f32 0.0, %v4977
    %v4979 = vpop.f32.mrb[0].mxu0
    %4980 = vdwg.mxu0
    %v4982 = vsel %vm2525, %v3401, 0
    %v4985 = vsel %vm2525, %v3402, 0
    %v4988 = vsel %vm2525, %v3403, 0
    %v4991 = vsel %vm2525, %v3404, 0
    %v4994 = vsel %vm2525, %v3405, 0
    %4996 = vmatprep.subr.mxu0 0.0
    %4997 = vmatpush1.msra.mxu0 %v391
    %4998 = vmatprep.subr.mxu0 0.0
    %4999 = vmatpush1.msra.mxu0 %v392
    %5000 = vmatprep.subr.mxu0 0.0
    %5001 = vmatpush1.msra.mxu0 %v393
    %5002 = vmatprep.subr.mxu0 0.0
    %5003 = vmatpush1.msra.mxu0 %v394
    %5004 = vmatprep.subr.mxu0 0.0
    %5005 = vmatpush1.msra.mxu0 %v395
    %5006 = vmatprep.subr.mxu0 0.0
    %5007 = vmatpush1.msra.mxu0 0.0
    %5008 = vmatprep.subr.mxu0 0.0
    %5009 = vmatpush1.msra.mxu0 0.0
    %5010 = vmatprep.subr.mxu0 0.0
    %5011 = vmatpush1.msra.mxu0 0.0
    %5012 = vmatprep.subr.mxu0 0.0
    %5013 = vmatpush1.msra.mxu0 0.0
    %5014 = vmatprep.subr.mxu0 0.0
    %5015 = vmatpush1.msra.mxu0 0.0
    %5016 = vmatprep.subr.mxu0 0.0
    %5017 = vmatpush1.msra.mxu0 0.0
    %5018 = vmatprep.subr.mxu0 0.0
    %5019 = vmatpush1.msra.mxu0 0.0
    %5020 = vmatprep.subr.mxu0 0.0
    %5021 = vmatpush1.msra.mxu0 0.0
    %5022 = vmatprep.subr.mxu0 0.0
    %5023 = vmatpush1.msra.mxu0 0.0
    %5024 = vmatprep.subr.mxu0 0.0
    %5025 = vmatpush1.msra.mxu0 0.0
    %5026 = vmatprep.subr.mxu0 0.0
    %5027 = vmatpush1.msra.mxu0 0.0
    %5028 = vmatprep.subr.mxu0 0.0
    %5029 = vmatpush1.msra.mxu0 0.0
    %5030 = vmatprep.subr.mxu0 0.0
    %5031 = vmatpush1.msra.mxu0 0.0
    %5032 = vmatprep.subr.mxu0 0.0
    %5033 = vmatpush1.msra.mxu0 0.0
    %5034 = vmatprep.subr.mxu0 0.0
    %5035 = vmatpush1.msra.mxu0 0.0
    %5036 = vmatprep.subr.mxu0 0.0
    %5037 = vmatpush1.msra.mxu0 0.0
    %5038 = vmatprep.subr.mxu0 0.0
    %5039 = vmatpush1.msra.mxu0 0.0
    %5040 = vmatprep.subr.mxu0 0.0
    %5041 = vmatpush1.msra.mxu0 0.0
    %5042 = vmatprep.subr.mxu0 0.0
    %5043 = vmatpush1.msra.mxu0 0.0
    %5044 = vmatprep.subr.mxu0 0.0
    %5045 = vmatpush1.msra.mxu0 0.0
    %5046 = vmatprep.subr.mxu0 0.0
    %5047 = vmatpush1.msra.mxu0 0.0
    %5048 = vmatprep.subr.mxu0 0.0
    %5049 = vmatpush1.msra.mxu0 0.0
    %5050 = vmatprep.subr.mxu0 0.0
    %5051 = vmatpush1.msra.mxu0 0.0
    %5052 = vmatprep.subr.mxu0 0.0
    %5053 = vmatpush1.msra.mxu0 0.0
    %5054 = vmatprep.subr.mxu0 0.0
    %5055 = vmatpush1.msra.mxu0 0.0
    %5056 = vmatprep.subr.mxu0 0.0
    %5057 = vmatpush1.msra.mxu0 0.0
    %5058 = vmatprep.subr.mxu0 0.0
    %5059 = vmatpush1.msra.mxu0 0.0
    %5060 = vmatprep.mubr.f32.mxu0 0.0
    %5061 = vmatmul.mubr.f32.gmra.mrb[0].mxu0 %v4982
    %v5062 = vpop.f32.mrb[0].mxu0
    %v5063 = vadd.f32 0.0, %v5062
    %v5064 = vpop.f32.mrb[0].mxu0
    %5065 = vmatprep.mubr.f32.mxu0 0.0
    %5066 = vmatmul.mubr.f32.gmra.mrb[0].mxu0 %v4985
    %v5067 = vpop.f32.mrb[0].mxu0
    %v5068 = vadd.f32 0.0, %v5067
    %v5069 = vpop.f32.mrb[0].mxu0
    %5070 = vmatprep.mubr.f32.mxu0 0.0
    %5071 = vmatmul.mubr.f32.gmra.mrb[0].mxu0 %v4988
    %v5072 = vpop.f32.mrb[0].mxu0
    %v5073 = vadd.f32 0.0, %v5072
    %v5074 = vpop.f32.mrb[0].mxu0
    %5075 = vmatprep.mubr.f32.mxu0 0.0
    %5076 = vmatmul.mubr.f32.gmra.mrb[0].mxu0 %v4991
    %v5077 = vpop.f32.mrb[0].mxu0
    %v5078 = vadd.f32 0.0, %v5077
    %v5079 = vpop.f32.mrb[0].mxu0
    %5080 = vmatprep.mubr.f32.mxu0 0.0
    %5081 = vmatmul.mubr.f32.gmra.mrb[0].mxu0 %v4994
    %v5082 = vpop.f32.mrb[0].mxu0
    %v5083 = vadd.f32 0.0, %v5082
    %v5084 = vpop.f32.mrb[0].mxu0
    %5085 = vdwg.mxu0
    %5086 = vst.msk [vmem:[#allocation10] sm:$0xff] %vm396, %v3488
    %5087 = vst.msk [vmem:[#allocation10 + $0x8] sm:$0xff] %vm396, %v3493
    %5088 = vst.msk [vmem:[#allocation10 + $0x10] sm:$0xff] %vm396, %v3498
    %5089 = vst.msk [vmem:[#allocation10 + $0x18] sm:$0xff] %vm396, %v3503
    %5090 = vst.msk [vmem:[#allocation10 + $0x20] sm:$0xff] %vm396, %v3508
    %5091 = vst.msk [vmem:[#allocation10 + $0x28] sm:$0xff] %vm396, %v3593
    %5092 = vst.msk [vmem:[#allocation10 + $0x30] sm:$0xff] %vm396, %v3598
    %5093 = vst.msk [vmem:[#allocation10 + $0x38] sm:$0xff] %vm396, %v3603
    %5094 = vst.msk [vmem:[#allocation10 + $0x40] sm:$0xff] %vm396, %v3608
    %5095 = vst.msk [vmem:[#allocation10 + $0x48] sm:$0xff] %vm396, %v3613
    %5096 = vst.msk [vmem:[#allocation10 + $0x50] sm:$0xff] %vm396, %v3698
    %5097 = vst.msk [vmem:[#allocation10 + $0x58] sm:$0xff] %vm396, %v3703
    %5098 = vst.msk [vmem:[#allocation10 + $0x60] sm:$0xff] %vm396, %v3708
    %5099 = vst.msk [vmem:[#allocation10 + $0x68] sm:$0xff] %vm396, %v3713
    %5100 = vst.msk [vmem:[#allocation10 + $0x70] sm:$0xff] %vm396, %v3718
    %5101 = vst.msk [vmem:[#allocation10 + $0x78] sm:$0xff] %vm396, %v3803
    %5102 = vst.msk [vmem:[#allocation10 + $0x80] sm:$0xff] %vm396, %v3808
    %5103 = vst.msk [vmem:[#allocation10 + $0x88] sm:$0xff] %vm396, %v3813
    %5104 = vst.msk [vmem:[#allocation10 + $0x90] sm:$0xff] %vm396, %v3818
    %5105 = vst.msk [vmem:[#allocation10 + $0x98] sm:$0xff] %vm396, %v3823
    %5106 = vst.msk [vmem:[#allocation10 + $0xa0] sm:$0xff] %vm396, %v3908
    %5107 = vst.msk [vmem:[#allocation10 + $0xa8] sm:$0xff] %vm396, %v3913
    %5108 = vst.msk [vmem:[#allocation10 + $0xb0] sm:$0xff] %vm396, %v3918
    %5109 = vst.msk [vmem:[#allocation10 + $0xb8] sm:$0xff] %vm396, %v3923
    %5110 = vst.msk [vmem:[#allocation10 + $0xc0] sm:$0xff] %vm396, %v3928
    %5111 = vst.msk [vmem:[#allocation10 + $0xc8] sm:$0xff] %vm396, %v4013
    %5112 = vst.msk [vmem:[#allocation10 + $0xd0] sm:$0xff] %vm396, %v4018
    %5113 = vst.msk [vmem:[#allocation10 + $0xd8] sm:$0xff] %vm396, %v4023
    %5114 = vst.msk [vmem:[#allocation10 + $0xe0] sm:$0xff] %vm396, %v4028
    %5115 = vst.msk [vmem:[#allocation10 + $0xe8] sm:$0xff] %vm396, %v4033
    %5116 = vst.msk [vmem:[#allocation10 + $0xf0] sm:$0xff] %vm396, %v4118
    %5117 = vst.msk [vmem:[#allocation10 + $0xf8] sm:$0xff] %vm396, %v4123
    %5118 = vst.msk [vmem:[#allocation10 + $0x100] sm:$0xff] %vm396, %v4128
    %5119 = vst.msk [vmem:[#allocation10 + $0x108] sm:$0xff] %vm396, %v4133
    %5120 = vst.msk [vmem:[#allocation10 + $0x110] sm:$0xff] %vm396, %v4138
    %5121 = vst.msk [vmem:[#allocation10 + $0x118] sm:$0xff] %vm396, %v4223
    %5122 = vst.msk [vmem:[#allocation10 + $0x120] sm:$0xff] %vm396, %v4228
    %5123 = vst.msk [vmem:[#allocation10 + $0x128] sm:$0xff] %vm396, %v4233
    %5124 = vst.msk [vmem:[#allocation10 + $0x130] sm:$0xff] %vm396, %v4238
    %5125 = vst.msk [vmem:[#allocation10 + $0x138] sm:$0xff] %vm396, %v4243
    %5126 = vst.msk [vmem:[#allocation10 + $0x140] sm:$0xff] %vm396, %v4328
    %5127 = vst.msk [vmem:[#allocation10 + $0x148] sm:$0xff] %vm396, %v4333
    %5128 = vst.msk [vmem:[#allocation10 + $0x150] sm:$0xff] %vm396, %v4338
    %5129 = vst.msk [vmem:[#allocation10 + $0x158] sm:$0xff] %vm396, %v4343
    %5130 = vst.msk [vmem:[#allocation10 + $0x160] sm:$0xff] %vm396, %v4348
    %5131 = vst.msk [vmem:[#allocation10 + $0x168] sm:$0xff] %vm396, %v4433
    %5132 = vst.msk [vmem:[#allocation10 + $0x170] sm:$0xff] %vm396, %v4438
    %5133 = vst.msk [vmem:[#allocation10 + $0x178] sm:$0xff] %vm396, %v4443
    %5134 = vst.msk [vmem:[#allocation10 + $0x180] sm:$0xff] %vm396, %v4448
    %5135 = vst.msk [vmem:[#allocation10 + $0x188] sm:$0xff] %vm396, %v4453
    %5136 = vst.msk [vmem:[#allocation10 + $0x190] sm:$0xff] %vm396, %v4538
    %5137 = vst.msk [vmem:[#allocation10 + $0x198] sm:$0xff] %vm396, %v4543
    %5138 = vst.msk [vmem:[#allocation10 + $0x1a0] sm:$0xff] %vm396, %v4548
    %5139 = vst.msk [vmem:[#allocation10 + $0x1a8] sm:$0xff] %vm396, %v4553
    %5140 = vst.msk [vmem:[#allocation10 + $0x1b0] sm:$0xff] %vm396, %v4558
    %5141 = vst.msk [vmem:[#allocation10 + $0x1b8] sm:$0xff] %vm396, %v4643
    %5142 = vst.msk [vmem:[#allocation10 + $0x1c0] sm:$0xff] %vm396, %v4648
    %5143 = vst.msk [vmem:[#allocation10 + $0x1c8] sm:$0xff] %vm396, %v4653
    %5144 = vst.msk [vmem:[#allocation10 + $0x1d0] sm:$0xff] %vm396, %v4658
    %5145 = vst.msk [vmem:[#allocation10 + $0x1d8] sm:$0xff] %vm396, %v4663
    %5146 = vst.msk [vmem:[#allocation10 + $0x1e0] sm:$0xff] %vm396, %v4748
    %5147 = vst.msk [vmem:[#allocation10 + $0x1e8] sm:$0xff] %vm396, %v4753
    %5148 = vst.msk [vmem:[#allocation10 + $0x1f0] sm:$0xff] %vm396, %v4758
    %5149 = vst.msk [vmem:[#allocation10 + $0x1f8] sm:$0xff] %vm396, %v4763
    %5150 = vst.msk [vmem:[#allocation10 + $0x200] sm:$0xff] %vm396, %v4768
    %5151 = vst.msk [vmem:[#allocation10 + $0x208] sm:$0xff] %vm396, %v4853
    %5152 = vst.msk [vmem:[#allocation10 + $0x210] sm:$0xff] %vm396, %v4858
    %5153 = vst.msk [vmem:[#allocation10 + $0x218] sm:$0xff] %vm396, %v4863
    %5154 = vst.msk [vmem:[#allocation10 + $0x220] sm:$0xff] %vm396, %v4868
    %5155 = vst.msk [vmem:[#allocation10 + $0x228] sm:$0xff] %vm396, %v4873
    %5156 = vst.msk [vmem:[#allocation10 + $0x230] sm:$0xff] %vm396, %v4958
    %5157 = vst.msk [vmem:[#allocation10 + $0x238] sm:$0xff] %vm396, %v4963
    %5158 = vst.msk [vmem:[#allocation10 + $0x240] sm:$0xff] %vm396, %v4968
    %5159 = vst.msk [vmem:[#allocation10 + $0x248] sm:$0xff] %vm396, %v4973
    %5160 = vst.msk [vmem:[#allocation10 + $0x250] sm:$0xff] %vm396, %v4978
    %5161 = vst.msk [vmem:[#allocation10 + $0x258] sm:$0xff] %vm396, %v5063
    %5162 = vst.msk [vmem:[#allocation10 + $0x260] sm:$0xff] %vm396, %v5068
    %5163 = vst.msk [vmem:[#allocation10 + $0x268] sm:$0xff] %vm396, %v5073
    %5164 = vst.msk [vmem:[#allocation10 + $0x270] sm:$0xff] %vm396, %v5078
    %5165 = vst.msk [vmem:[#allocation10 + $0x278] sm:$0xff] %vm396, %v5083
    %5166 = vst.msk [vmem:[#allocation11] sm:$0xff] %vm2525, %v3326
    %5167 = vst.msk [vmem:[#allocation11 + $0x8] sm:$0xff] %vm2525, %v3327
    %5168 = vst.msk [vmem:[#allocation11 + $0x10] sm:$0xff] %vm2525, %v3328
    %5169 = vst.msk [vmem:[#allocation11 + $0x18] sm:$0xff] %vm2525, %v3329
    %5170 = vst.msk [vmem:[#allocation11 + $0x20] sm:$0xff] %vm2525, %v3330
    %5171 = vst.msk [vmem:[#allocation11 + $0x28] sm:$0xff] %vm2525, %v3331
    %5172 = vst.msk [vmem:[#allocation11 + $0x30] sm:$0xff] %vm2525, %v3332
    %5173 = vst.msk [vmem:[#allocation11 + $0x38] sm:$0xff] %vm2525, %v3333
    %5174 = vst.msk [vmem:[#allocation11 + $0x40] sm:$0xff] %vm2525, %v3334
    %5175 = vst.msk [vmem:[#allocation11 + $0x48] sm:$0xff] %vm2525, %v3335
    %5176 = vst.msk [vmem:[#allocation11 + $0x50] sm:$0xff] %vm2525, %v3336
    %5177 = vst.msk [vmem:[#allocation11 + $0x58] sm:$0xff] %vm2525, %v3337
    %5178 = vst.msk [vmem:[#allocation11 + $0x60] sm:$0xff] %vm2525, %v3338
    %5179 = vst.msk [vmem:[#allocation11 + $0x68] sm:$0xff] %vm2525, %v3339
    %5180 = vst.msk [vmem:[#allocation11 + $0x70] sm:$0xff] %vm2525, %v3340
    %5181 = vst.msk [vmem:[#allocation11 + $0x78] sm:$0xff] %vm2525, %v3341
    %5182 = vst.msk [vmem:[#allocation11 + $0x80] sm:$0xff] %vm2525, %v3342
    %5183 = vst.msk [vmem:[#allocation11 + $0x88] sm:$0xff] %vm2525, %v3343
    %5184 = vst.msk [vmem:[#allocation11 + $0x90] sm:$0xff] %vm2525, %v3344
    %5185 = vst.msk [vmem:[#allocation11 + $0x98] sm:$0xff] %vm2525, %v3345
    %5186 = vst.msk [vmem:[#allocation11 + $0xa0] sm:$0xff] %vm2525, %v3346
    %5187 = vst.msk [vmem:[#allocation11 + $0xa8] sm:$0xff] %vm2525, %v3347
    %5188 = vst.msk [vmem:[#allocation11 + $0xb0] sm:$0xff] %vm2525, %v3348
    %5189 = vst.msk [vmem:[#allocation11 + $0xb8] sm:$0xff] %vm2525, %v3349
    %5190 = vst.msk [vmem:[#allocation11 + $0xc0] sm:$0xff] %vm2525, %v3350
    %5191 = vst.msk [vmem:[#allocation11 + $0xc8] sm:$0xff] %vm2525, %v3351
    %5192 = vst.msk [vmem:[#allocation11 + $0xd0] sm:$0xff] %vm2525, %v3352
    %5193 = vst.msk [vmem:[#allocation11 + $0xd8] sm:$0xff] %vm2525, %v3353
    %5194 = vst.msk [vmem:[#allocation11 + $0xe0] sm:$0xff] %vm2525, %v3354
    %5195 = vst.msk [vmem:[#allocation11 + $0xe8] sm:$0xff] %vm2525, %v3355
    %5196 = vst.msk [vmem:[#allocation11 + $0xf0] sm:$0xff] %vm2525, %v3356
    %5197 = vst.msk [vmem:[#allocation11 + $0xf8] sm:$0xff] %vm2525, %v3357
    %5198 = vst.msk [vmem:[#allocation11 + $0x100] sm:$0xff] %vm2525, %v3358
    %5199 = vst.msk [vmem:[#allocation11 + $0x108] sm:$0xff] %vm2525, %v3359
    %5200 = vst.msk [vmem:[#allocation11 + $0x110] sm:$0xff] %vm2525, %v3360
    %5201 = vst.msk [vmem:[#allocation11 + $0x118] sm:$0xff] %vm2525, %v3361
    %5202 = vst.msk [vmem:[#allocation11 + $0x120] sm:$0xff] %vm2525, %v3362
    %5203 = vst.msk [vmem:[#allocation11 + $0x128] sm:$0xff] %vm2525, %v3363
    %5204 = vst.msk [vmem:[#allocation11 + $0x130] sm:$0xff] %vm2525, %v3364
    %5205 = vst.msk [vmem:[#allocation11 + $0x138] sm:$0xff] %vm2525, %v3365
    %5206 = vst.msk [vmem:[#allocation11 + $0x140] sm:$0xff] %vm2525, %v3366
    %5207 = vst.msk [vmem:[#allocation11 + $0x148] sm:$0xff] %vm2525, %v3367
    %5208 = vst.msk [vmem:[#allocation11 + $0x150] sm:$0xff] %vm2525, %v3368
    %5209 = vst.msk [vmem:[#allocation11 + $0x158] sm:$0xff] %vm2525, %v3369
    %5210 = vst.msk [vmem:[#allocation11 + $0x160] sm:$0xff] %vm2525, %v3370
    %5211 = vst.msk [vmem:[#allocation11 + $0x168] sm:$0xff] %vm2525, %v3371
    %5212 = vst.msk [vmem:[#allocation11 + $0x170] sm:$0xff] %vm2525, %v3372
    %5213 = vst.msk [vmem:[#allocation11 + $0x178] sm:$0xff] %vm2525, %v3373
    %5214 = vst.msk [vmem:[#allocation11 + $0x180] sm:$0xff] %vm2525, %v3374
    %5215 = vst.msk [vmem:[#allocation11 + $0x188] sm:$0xff] %vm2525, %v3375
    %5216 = vst.msk [vmem:[#allocation11 + $0x190] sm:$0xff] %vm2525, %v3376
    %5217 = vst.msk [vmem:[#allocation11 + $0x198] sm:$0xff] %vm2525, %v3377
    %5218 = vst.msk [vmem:[#allocation11 + $0x1a0] sm:$0xff] %vm2525, %v3378
    %5219 = vst.msk [vmem:[#allocation11 + $0x1a8] sm:$0xff] %vm2525, %v3379
    %5220 = vst.msk [vmem:[#allocation11 + $0x1b0] sm:$0xff] %vm2525, %v3380
    %5221 = vst.msk [vmem:[#allocation11 + $0x1b8] sm:$0xff] %vm2525, %v3381
    %5222 = vst.msk [vmem:[#allocation11 + $0x1c0] sm:$0xff] %vm2525, %v3382
    %5223 = vst.msk [vmem:[#allocation11 + $0x1c8] sm:$0xff] %vm2525, %v3383
    %5224 = vst.msk [vmem:[#allocation11 + $0x1d0] sm:$0xff] %vm2525, %v3384
    %5225 = vst.msk [vmem:[#allocation11 + $0x1d8] sm:$0xff] %vm2525, %v3385
    %5226 = vst.msk [vmem:[#allocation11 + $0x1e0] sm:$0xff] %vm2525, %v3386
    %5227 = vst.msk [vmem:[#allocation11 + $0x1e8] sm:$0xff] %vm2525, %v3387
    %5228 = vst.msk [vmem:[#allocation11 + $0x1f0] sm:$0xff] %vm2525, %v3388
    %5229 = vst.msk [vmem:[#allocation11 + $0x1f8] sm:$0xff] %vm2525, %v3389
    %5230 = vst.msk [vmem:[#allocation11 + $0x200] sm:$0xff] %vm2525, %v3390
    %5231 = vst.msk [vmem:[#allocation11 + $0x208] sm:$0xff] %vm2525, %v3391
    %5232 = vst.msk [vmem:[#allocation11 + $0x210] sm:$0xff] %vm2525, %v3392
    %5233 = vst.msk [vmem:[#allocation11 + $0x218] sm:$0xff] %vm2525, %v3393
    %5234 = vst.msk [vmem:[#allocation11 + $0x220] sm:$0xff] %vm2525, %v3394
    %5235 = vst.msk [vmem:[#allocation11 + $0x228] sm:$0xff] %vm2525, %v3395
    %5236 = vst.msk [vmem:[#allocation11 + $0x230] sm:$0xff] %vm2525, %v3396
    %5237 = vst.msk [vmem:[#allocation11 + $0x238] sm:$0xff] %vm2525, %v3397
    %5238 = vst.msk [vmem:[#allocation11 + $0x240] sm:$0xff] %vm2525, %v3398
    %5239 = vst.msk [vmem:[#allocation11 + $0x248] sm:$0xff] %vm2525, %v3399
    %5240 = vst.msk [vmem:[#allocation11 + $0x250] sm:$0xff] %vm2525, %v3400
    %5241 = vst.msk [vmem:[#allocation11 + $0x258] sm:$0xff] %vm2525, %v3401
    %5242 = vst.msk [vmem:[#allocation11 + $0x260] sm:$0xff] %vm2525, %v3402
    %5243 = vst.msk [vmem:[#allocation11 + $0x268] sm:$0xff] %vm2525, %v3403
    %5244 = vst.msk [vmem:[#allocation11 + $0x270] sm:$0xff] %vm2525, %v3404
    %5245 = vst.msk [vmem:[#allocation11 + $0x278] sm:$0xff] %vm2525, %v3405
    // Predicated region
    $region34: #{tpu_custom_call.1} parent=1 // pred_check
      _
    $region35: #{tpu_custom_call.1} parent=1 // pred_check_branch
      %5247 = sbr.rel (0) target = $region37
    $region36: #{tpu_custom_call.1} parent=1 // pred_region
      %s5249 = ssub.s32 10240, 10240
      %5250 = vsyncadd [#allocation4], %s5249
      %s5251 = sshll.u32 [#allocation10], 4
      %s5252 = int_to_ptr.vmem [resolvable:$true] %s5251
      %5257 = dma.vmem_to_hbm [thread:$0]  %s5252, 10240, %s4, [#allocation4], 128, 128, 8
    $region37: #{tpu_custom_call.1} parent=1 // pred_fallthru
      _
    // Predicated region
    $region38: #{tpu_custom_call.1} parent=1 // pred_check
      _
    $region39: #{tpu_custom_call.1} parent=1 // pred_check_branch
      %5259 = sbr.rel (0) target = $region41
    $region40: #{tpu_custom_call.1} parent=1 // pred_region
      %s5261 = ssub.s32 10240, 10240
      %5262 = vsyncadd [#allocation12], %s5261
      %s5263 = sshll.u32 [#allocation11], 4
      %s5264 = int_to_ptr.vmem [resolvable:$true] %s5263
      %5269 = dma.vmem_to_hbm [thread:$0]  %s5264, 10240, %s5, [#allocation12], 128, 128, 8
    $region41: #{tpu_custom_call.1} parent=1 // pred_fallthru
      _
    // Predicated region
    $region42: #{tpu_custom_call.1} parent=1 // pred_check
      _
    $region43: #{tpu_custom_call.1} parent=1 // pred_check_branch
      %5271 = sbr.rel (0) target = $region45
    $region44: #{tpu_custom_call.1} parent=1 // pred_region
      %5272 = dma.done [#allocation4], 10240
    $region45: #{tpu_custom_call.1} parent=1 // pred_fallthru
      _
    // Predicated region
    $region46: #{tpu_custom_call.1} parent=1 // pred_check
      _
    $region47: #{tpu_custom_call.1} parent=1 // pred_check_branch
      %5274 = sbr.rel (0) target = $region49
    $region48: #{tpu_custom_call.1} parent=1 // pred_region
      %5275 = dma.done [#allocation12], 10240
    $region49: #{tpu_custom_call.1} parent=1 // pred_fallthru
      _
    %5276 = vsyncpa [#allocation3], 1
    %5277 = vsyncpa [#allocation6], 1
    %5278 = vsyncpa [#allocation9], 1
    %5279 = vsyncpa [#allocation4], 1
    %5280 = vsyncpa [#allocation12], 1

</llo_original>
